<compile_context>
chip_gen: v5e
topology: v5e:2x2
jax: 0.10.0
libtpu: 0.0.40
codegen_flags: <defaults>
</compile_context>

<pallas_src>
import functools

import jax
import jax.numpy as jnp
from jax import lax
from jax.experimental import pallas as pl
from jax.experimental.pallas import tpu as pltpu

MID = 256  # fixed intermediate channel count in the PyTorch module


# ---------------------------------------------------------------------------
# Fused GC kernel (one grid step per batch element)
# ---------------------------------------------------------------------------
def _gc_kernel(kh, kw, H, W, Cout, mid,
               al_ref, ar_ref, wl1_ref, wr1_ref, wl2_ref, wr2_ref,
               bl1_ref, br1_ref, bl2_ref, br2_ref, permT_ref,
               out_ref, l1_scr, r1_scr):
    HW = H * W
    padh, padw = kh // 2, kw // 2
    f32 = jnp.float32

    # ---------------- stage 1: one K-concat dot per branch --------------------
    # left : (kh,1) conv, result rows in W-major order (w*H + h)
    l1 = jnp.dot(al_ref[0], wl1_ref[...], preferred_element_type=f32)
    l1 = l1 + bl1_ref[...]
    # right: (1,kw) conv, result rows in H-major order (h*W + w)
    r1 = jnp.dot(ar_ref[0], wr1_ref[...], preferred_element_type=f32)
    r1 = r1 + br1_ref[...]

    # Store into padded VMEM scratch (bf16).  The zero halo implements the
    # 'same' padding of the SECOND conv: padding applies to the conv1 *output*
    # (which already includes its bias), so the halo must be exactly zero.
    hl = padw * H
    l1_scr[pl.ds(0, hl), :] = jnp.zeros((hl, mid), l1_scr.dtype)
    l1_scr[pl.ds(hl, HW), :] = l1.astype(l1_scr.dtype)
    l1_scr[pl.ds(hl + HW, hl), :] = jnp.zeros((hl, mid), l1_scr.dtype)

    hr = padh * W
    r1_scr[pl.ds(0, hr), :] = jnp.zeros((hr, mid), r1_scr.dtype)
    r1_scr[pl.ds(hr, HW), :] = r1.astype(r1_scr.dtype)
    r1_scr[pl.ds(hr + HW, hr), :] = jnp.zeros((hr, mid), r1_scr.dtype)

    # ---------------- stage 2: per-tap NT matmuls, (Cout, HW) accumulators ----
    nt_dims = (((1,), (1,)), ((), ()))   # contract over MID on both operands

    accl = jnp.zeros((Cout, HW), f32)    # columns in W-major order (w*H + h)
    for t in range(kw):                  # static unroll; tile-aligned slices
        accl = accl + lax.dot_general(
            wl2_ref[t], l1_scr[pl.ds(t * H, HW), :], nt_dims,
            preferred_element_type=f32)

    accr = jnp.zeros((Cout, HW), f32)    # columns in H-major order (h*W + w)
    for t in range(kh):
        accr = accr + lax.dot_general(
            wr2_ref[t], r1_scr[pl.ds(t * W, HW), :], nt_dims,
            preferred_element_type=f32)

    # Reorder left-branch columns (W-major -> H-major) with a one-hot
    # permutation matmul, then fuse the final add + both conv2 biases.
    accl_hw = jnp.dot(accl, permT_ref[...], preferred_element_type=f32)
    out = accl_hw + accr + bl2_ref[...] + br2_ref[...]
    out_ref[0] = out.astype(out_ref.dtype)          # (Cout, H*W) lane-dense


# ---------------------------------------------------------------------------
# Wrapper: layout prep (tiny, Cin is small) + pallas_call
# ---------------------------------------------------------------------------
@functools.partial(jax.jit, static_argnums=(2, 3))
def gc_forward(x_nchw, params, kh=7, kw=7):
    N, Cin, H, W = x_nchw.shape
    mid = params["wl1"].shape[0]
    Cout = params["wl2"].shape[0]
    assert kh % 2 == 1 and kw % 2 == 1, "GC kernel assumes odd kernel sizes"
    padh, padw = kh // 2, kw // 2
    HW = H * W
    f32 = jnp.float32

    # ---- im2col for the two first-stage convs (K = k*Cin, data is tiny) ------
    xph = jnp.pad(x_nchw, ((0, 0), (0, 0), (padh, padh), (0, 0)))
    al = jnp.stack([xph[:, :, t:t + H, :] for t in range(kh)], axis=-1)
    al = al.transpose(0, 3, 2, 4, 1).reshape(N, HW, kh * Cin)     # rows w*H + h
    xpw = jnp.pad(x_nchw, ((0, 0), (0, 0), (0, 0), (padw, padw)))
    ar = jnp.stack([xpw[:, :, :, t:t + W] for t in range(kw)], axis=-1)
    ar = ar.transpose(0, 2, 3, 4, 1).reshape(N, HW, kw * Cin)     # rows h*W + w

    # ---- weights in kernel-friendly layouts -----------------------------------
    wl1 = jnp.transpose(params["wl1"][:, :, :, 0], (2, 1, 0)).reshape(kh * Cin, mid)
    wr1 = jnp.transpose(params["wr1"][:, :, 0, :], (2, 1, 0)).reshape(kw * Cin, mid)
    # stage-2 weights pre-transposed to (k, Cout, MID) and cast to bf16 once
    wl2 = jnp.transpose(params["wl2"][:, :, 0, :], (2, 0, 1)).astype(jnp.bfloat16)
    wr2 = jnp.transpose(params["wr2"][:, :, :, 0], (2, 0, 1)).astype(jnp.bfloat16)
    bl1 = params["bl1"].reshape(1, mid).astype(f32)
    br1 = params["br1"].reshape(1, mid).astype(f32)
    bl2 = params["bl2"].reshape(Cout, 1).astype(f32)
    br2 = params["br2"].reshape(Cout, 1).astype(f32)

    # one-hot permutation: maps W-major columns (w*H+h) to H-major (h*W+w)
    j = jnp.arange(HW)
    src = (j % W) * H + (j // W)
    permT = jax.nn.one_hot(src, HW, dtype=f32).T                  # (HW, HW)

    flops = 2 * N * (HW * kh * Cin * mid + HW * kw * Cin * mid
                     + (kh + kw) * HW * mid * Cout + HW * HW * Cout)
    bytes_accessed = ((al.size + ar.size + wl1.size + wr1.size + permT.size
                       + N * Cout * HW) * 4 + (wl2.size + wr2.size) * 2)

    out = pl.pallas_call(
        functools.partial(_gc_kernel, kh, kw, H, W, Cout, mid),
        out_shape=jax.ShapeDtypeStruct((N, Cout, HW), x_nchw.dtype),
        grid=(N,),
        in_specs=[
            pl.BlockSpec((1, HW, kh * Cin), lambda n: (n, 0, 0)),   # im2col left
            pl.BlockSpec((1, HW, kw * Cin), lambda n: (n, 0, 0)),   # im2col right
            pl.BlockSpec((kh * Cin, mid), lambda n: (0, 0)),        # wl1
            pl.BlockSpec((kw * Cin, mid), lambda n: (0, 0)),        # wr1
            pl.BlockSpec((kw, Cout, mid), lambda n: (0, 0, 0)),     # wl2 (bf16)
            pl.BlockSpec((kh, Cout, mid), lambda n: (0, 0, 0)),     # wr2 (bf16)
            pl.BlockSpec((1, mid), lambda n: (0, 0)),               # bl1
            pl.BlockSpec((1, mid), lambda n: (0, 0)),               # br1
            pl.BlockSpec((Cout, 1), lambda n: (0, 0)),              # bl2
            pl.BlockSpec((Cout, 1), lambda n: (0, 0)),              # br2
            pl.BlockSpec((HW, HW), lambda n: (0, 0)),               # permutation
        ],
        out_specs=pl.BlockSpec((1, Cout, HW), lambda n: (n, 0, 0)),
        scratch_shapes=[
            pltpu.VMEM(((W + kw - 1) * H, mid), jnp.bfloat16),  # padded l1, W-major
            pltpu.VMEM(((H + kh - 1) * W, mid), jnp.bfloat16),  # padded r1, H-major
        ],
        compiler_params=pltpu.CompilerParams(dimension_semantics=("parallel",)),
        cost_estimate=pl.CostEstimate(flops=flops, transcendentals=0,
                                      bytes_accessed=bytes_accessed),
    )(al, ar, wl1, wr1, wl2, wr2, bl1, br1, bl2, br2, permT)

    return out.reshape(N, Cout, H, W)                    # NCHW, no transpose needed


# ---------------------------------------------------------------------------
# Params (PyTorch Conv2d layout) and plain-JAX reference
# ---------------------------------------------------------------------------
def init_gc_params(key, inplanes, planes, kh, kw, dtype=jnp.float32):
    ks = jax.random.split(key, 8)
    s = 0.05
    return {
        "wl1": (s * jax.random.normal(ks[0], (MID, inplanes, kh, 1))).astype(dtype),
        "bl1": (s * jax.random.normal(ks[1], (MID,))).astype(dtype),
        "wl2": (s * jax.random.normal(ks[2], (planes, MID, 1, kw))).astype(dtype),
        "bl2": (s * jax.random.normal(ks[3], (planes,))).astype(dtype),
        "wr1": (s * jax.random.normal(ks[4], (MID, inplanes, 1, kw))).astype(dtype),
        "br1": (s * jax.random.normal(ks[5], (MID,))).astype(dtype),
        "wr2": (s * jax.random.normal(ks[6], (planes, MID, kh, 1))).astype(dtype),
        "br2": (s * jax.random.normal(ks[7], (planes,))).astype(dtype),
    }


def _ref_conv(x_nchw, w, b, pad):
    out = lax.conv_general_dilated(
        x_nchw, w, window_strides=(1, 1),
        padding=((pad[0], pad[0]), (pad[1], pad[1])),
        dimension_numbers=("NCHW", "OIHW", "NCHW"),
        precision=lax.Precision.HIGHEST)
    return out + b[None, :, None, None]


def gc_reference(x_nchw, params, kh=7, kw=7):
    ph, pw = kh // 2, kw // 2
    xl = _ref_conv(_ref_conv(x_nchw, params["wl1"], params["bl1"], (ph, 0)),
                   params["wl2"], params["bl2"], (0, pw))
    xr = _ref_conv(_ref_conv(x_nchw, params["wr1"], params["br1"], (0, pw)),
                   params["wr2"], params["br2"], (ph, 0))
    return xl + xr


# ---------------------------------------------------------------------------
if __name__ == "__main__":
    N, INPLANES, PLANES, H, W = 2, 4, 4, 16, 16
    KH, KW = 7, 7

    key = jax.random.PRNGKey(0)
    kx, kp = jax.random.split(key)
    x = jax.random.normal(kx, (N, INPLANES, H, W), dtype=jnp.float32)  # NCHW
    params = init_gc_params(kp, INPLANES, PLANES, KH, KW)

    out = gc_forward(x, params, KH, KW)
    out = jax.block_until_ready(out)
    assert out.shape == (N, PLANES, H, W), out.shape

    ref = gc_reference(x, params, KH, KW)
    # tolerance sized for bf16 stage-2 operands (f32 accumulation); indexing or
    # layout bugs would produce O(1) errors, far beyond this.
    err = float(jnp.max(jnp.abs(out - ref)))
    assert jnp.allclose(out, ref, rtol=2e-2, atol=2e-2), err

    print("KERNEL_OK")
</pallas_src>

<mosaic_0001>
module attributes {stable_mosaic.version = 11 : i64} {
  func.func @_gc_kernel(%arg0: i32, %arg1: memref<1x256x28xf32, #tpu.memory_space<vmem>>, %arg2: memref<1x256x28xf32, #tpu.memory_space<vmem>>, %arg3: memref<28x256xf32, #tpu.memory_space<vmem>>, %arg4: memref<28x256xf32, #tpu.memory_space<vmem>>, %arg5: memref<7x4x256xbf16, #tpu.memory_space<vmem>>, %arg6: memref<7x4x256xbf16, #tpu.memory_space<vmem>>, %arg7: memref<1x256xf32, #tpu.memory_space<vmem>>, %arg8: memref<1x256xf32, #tpu.memory_space<vmem>>, %arg9: memref<4x1xf32, #tpu.memory_space<vmem>>, %arg10: memref<4x1xf32, #tpu.memory_space<vmem>>, %arg11: memref<256x256xf32, #tpu.memory_space<vmem>>, %arg12: memref<1x4x256xf32, #tpu.memory_space<vmem>>, %arg13: memref<352x256xbf16, #tpu.memory_space<vmem>>, %arg14: memref<352x256xbf16, #tpu.memory_space<vmem>>) attributes {dimension_semantics = [#tpu.dimension_semantics<parallel>], iteration_bounds = array<i64: 2>, scalar_prefetch = 0 : i64, scratch_operands = 2 : i64, tpu.core_type = #tpu.core_type<tc>, window_params = [{transform_indices = @transform_0, window_bounds = array<i64: 1, 256, 28>}, {transform_indices = @transform_1, window_bounds = array<i64: 1, 256, 28>}, {pipeline_mode = #tpu.pipeline_mode<synchronous>, transform_indices = @transform_2, window_bounds = array<i64: 28, 256>}, {pipeline_mode = #tpu.pipeline_mode<synchronous>, transform_indices = @transform_3, window_bounds = array<i64: 28, 256>}, {pipeline_mode = #tpu.pipeline_mode<synchronous>, transform_indices = @transform_4, window_bounds = array<i64: 7, 4, 256>}, {pipeline_mode = #tpu.pipeline_mode<synchronous>, transform_indices = @transform_5, window_bounds = array<i64: 7, 4, 256>}, {pipeline_mode = #tpu.pipeline_mode<synchronous>, transform_indices = @transform_6, window_bounds = array<i64: 1, 256>}, {pipeline_mode = #tpu.pipeline_mode<synchronous>, transform_indices = @transform_7, window_bounds = array<i64: 1, 256>}, {pipeline_mode = #tpu.pipeline_mode<synchronous>, transform_indices = @transform_8, window_bounds = array<i64: 4, 1>}, {pipeline_mode = #tpu.pipeline_mode<synchronous>, transform_indices = @transform_9, window_bounds = array<i64: 4, 1>}, {pipeline_mode = #tpu.pipeline_mode<synchronous>, transform_indices = @transform_10, window_bounds = array<i64: 256, 256>}, {transform_indices = @transform_11, window_bounds = array<i64: 1, 4, 256>}]} {
    %c0 = arith.constant 0 : index
    %c0_0 = arith.constant 0 : index
    %c0_1 = arith.constant 0 : index
    %0 = vector.load %arg1[%c0, %c0_0, %c0_1] : memref<1x256x28xf32, #tpu.memory_space<vmem>>, vector<1x256x28xf32>
    %1 = vector.shape_cast %0 : vector<1x256x28xf32> to vector<256x28xf32>
    %c0_2 = arith.constant 0 : index
    %c0_3 = arith.constant 0 : index
    %2 = vector.load %arg3[%c0_2, %c0_3] : memref<28x256xf32, #tpu.memory_space<vmem>>, vector<28x256xf32>
    %cst = arith.constant dense<0.000000e+00> : vector<256x256xf32>
    %3 = tpu.matmul %1, %2, %cst {dimension_numbers = #tpu.dot_dimension_numbers<[1], [0], [0], [1], [0, 0, 1, 1], [], []>} : vector<256x28xf32>, vector<28x256xf32>, vector<256x256xf32> -> vector<256x256xf32>
    %c0_4 = arith.constant 0 : index
    %c0_5 = arith.constant 0 : index
    %4 = vector.load %arg7[%c0_4, %c0_5] : memref<1x256xf32, #tpu.memory_space<vmem>>, vector<1x256xf32>
    %5 = vector.broadcast %4 : vector<1x256xf32> to vector<256x256xf32>
    %6 = arith.addf %3, %5 : vector<256x256xf32>
    %c0_6 = arith.constant 0 : index
    %c0_7 = arith.constant 0 : index
    %c0_8 = arith.constant 0 : index
    %7 = vector.load %arg2[%c0_6, %c0_7, %c0_8] : memref<1x256x28xf32, #tpu.memory_space<vmem>>, vector<1x256x28xf32>
    %8 = vector.shape_cast %7 : vector<1x256x28xf32> to vector<256x28xf32>
    %c0_9 = arith.constant 0 : index
    %c0_10 = arith.constant 0 : index
    %9 = vector.load %arg4[%c0_9, %c0_10] : memref<28x256xf32, #tpu.memory_space<vmem>>, vector<28x256xf32>
    %cst_11 = arith.constant dense<0.000000e+00> : vector<256x256xf32>
    %10 = tpu.matmul %8, %9, %cst_11 {dimension_numbers = #tpu.dot_dimension_numbers<[1], [0], [0], [1], [0, 0, 1, 1], [], []>} : vector<256x28xf32>, vector<28x256xf32>, vector<256x256xf32> -> vector<256x256xf32>
    %c0_12 = arith.constant 0 : index
    %c0_13 = arith.constant 0 : index
    %11 = vector.load %arg8[%c0_12, %c0_13] : memref<1x256xf32, #tpu.memory_space<vmem>>, vector<1x256xf32>
    %12 = vector.broadcast %11 : vector<1x256xf32> to vector<256x256xf32>
    %13 = arith.addf %10, %12 : vector<256x256xf32>
    %cst_14 = arith.constant 0.000000e+00 : bf16
    %14 = vector.broadcast %cst_14 : bf16 to vector<48x256xbf16>
    %c0_15 = arith.constant 0 : index
    %c0_16 = arith.constant 0 : index
    %15 = vector.load %arg13[%c0_15, %c0_16] : memref<352x256xbf16, #tpu.memory_space<vmem>>, vector<48x256xbf16>
    tpu.vector_store %arg13[%c0_15, %c0_16], %14 {strides = array<i32>} : memref<352x256xbf16, #tpu.memory_space<vmem>>, vector<48x256xbf16>,
    %16 = arith.truncf %6 : vector<256x256xf32> to vector<256x256xbf16>
    %c48 = arith.constant 48 : index
    %c0_17 = arith.constant 0 : index
    %17 = vector.load %arg13[%c48, %c0_17] : memref<352x256xbf16, #tpu.memory_space<vmem>>, vector<256x256xbf16>
    tpu.vector_store %arg13[%c48, %c0_17], %16 {strides = array<i32>} : memref<352x256xbf16, #tpu.memory_space<vmem>>, vector<256x256xbf16>,
    %cst_18 = arith.constant 0.000000e+00 : bf16
    %18 = vector.broadcast %cst_18 : bf16 to vector<48x256xbf16>
    %c304 = arith.constant 304 : index
    %c0_19 = arith.constant 0 : index
    %19 = vector.load %arg13[%c304, %c0_19] : memref<352x256xbf16, #tpu.memory_space<vmem>>, vector<48x256xbf16>
    tpu.vector_store %arg13[%c304, %c0_19], %18 {strides = array<i32>} : memref<352x256xbf16, #tpu.memory_space<vmem>>, vector<48x256xbf16>,
    %cst_20 = arith.constant 0.000000e+00 : bf16
    %20 = vector.broadcast %cst_20 : bf16 to vector<48x256xbf16>
    %c0_21 = arith.constant 0 : index
    %c0_22 = arith.constant 0 : index
    %21 = vector.load %arg14[%c0_21, %c0_22] : memref<352x256xbf16, #tpu.memory_space<vmem>>, vector<48x256xbf16>
    tpu.vector_store %arg14[%c0_21, %c0_22], %20 {strides = array<i32>} : memref<352x256xbf16, #tpu.memory_space<vmem>>, vector<48x256xbf16>,
    %22 = arith.truncf %13 : vector<256x256xf32> to vector<256x256xbf16>
    %c48_23 = arith.constant 48 : index
    %c0_24 = arith.constant 0 : index
    %23 = vector.load %arg14[%c48_23, %c0_24] : memref<352x256xbf16, #tpu.memory_space<vmem>>, vector<256x256xbf16>
    tpu.vector_store %arg14[%c48_23, %c0_24], %22 {strides = array<i32>} : memref<352x256xbf16, #tpu.memory_space<vmem>>, vector<256x256xbf16>,
    %cst_25 = arith.constant 0.000000e+00 : bf16
    %24 = vector.broadcast %cst_25 : bf16 to vector<48x256xbf16>
    %c304_26 = arith.constant 304 : index
    %c0_27 = arith.constant 0 : index
    %25 = vector.load %arg14[%c304_26, %c0_27] : memref<352x256xbf16, #tpu.memory_space<vmem>>, vector<48x256xbf16>
    tpu.vector_store %arg14[%c304_26, %c0_27], %24 {strides = array<i32>} : memref<352x256xbf16, #tpu.memory_space<vmem>>, vector<48x256xbf16>,
    %cst_28 = arith.constant 0.000000e+00 : f32
    %26 = vector.broadcast %cst_28 : f32 to vector<4x256xf32>
    %c0_29 = arith.constant 0 : index
    %c0_30 = arith.constant 0 : index
    %c0_31 = arith.constant 0 : index
    %27 = vector.load %arg5[%c0_29, %c0_30, %c0_31] : memref<7x4x256xbf16, #tpu.memory_space<vmem>>, vector<1x4x256xbf16>
    %28 = vector.shape_cast %27 : vector<1x4x256xbf16> to vector<4x256xbf16>
    %c0_32 = arith.constant 0 : index
    %c0_33 = arith.constant 0 : index
    %29 = vector.load %arg13[%c0_32, %c0_33] : memref<352x256xbf16, #tpu.memory_space<vmem>>, vector<256x256xbf16>
    %cst_34 = arith.constant dense<0.000000e+00> : vector<4x256xf32>
    %30 = tpu.matmul %28, %29, %cst_34 {dimension_numbers = #tpu.dot_dimension_numbers<[1], [1], [0], [0], [0, 0, 1, 0], [], []>} : vector<4x256xbf16>, vector<256x256xbf16>, vector<4x256xf32> -> vector<4x256xf32>
    %31 = arith.addf %26, %30 : vector<4x256xf32>
    %c1 = arith.constant 1 : index
    %c0_35 = arith.constant 0 : index
    %c0_36 = arith.constant 0 : index
    %32 = vector.load %arg5[%c1, %c0_35, %c0_36] : memref<7x4x256xbf16, #tpu.memory_space<vmem>>, vector<1x4x256xbf16>
    %33 = vector.shape_cast %32 : vector<1x4x256xbf16> to vector<4x256xbf16>
    %c16 = arith.constant 16 : index
    %c0_37 = arith.constant 0 : index
    %34 = vector.load %arg13[%c16, %c0_37] : memref<352x256xbf16, #tpu.memory_space<vmem>>, vector<256x256xbf16>
    %cst_38 = arith.constant dense<0.000000e+00> : vector<4x256xf32>
    %35 = tpu.matmul %33, %34, %cst_38 {dimension_numbers = #tpu.dot_dimension_numbers<[1], [1], [0], [0], [0, 0, 1, 0], [], []>} : vector<4x256xbf16>, vector<256x256xbf16>, vector<4x256xf32> -> vector<4x256xf32>
    %36 = arith.addf %31, %35 : vector<4x256xf32>
    %c2 = arith.constant 2 : index
    %c0_39 = arith.constant 0 : index
    %c0_40 = arith.constant 0 : index
    %37 = vector.load %arg5[%c2, %c0_39, %c0_40] : memref<7x4x256xbf16, #tpu.memory_space<vmem>>, vector<1x4x256xbf16>
    %38 = vector.shape_cast %37 : vector<1x4x256xbf16> to vector<4x256xbf16>
    %c32 = arith.constant 32 : index
    %c0_41 = arith.constant 0 : index
    %39 = vector.load %arg13[%c32, %c0_41] : memref<352x256xbf16, #tpu.memory_space<vmem>>, vector<256x256xbf16>
    %cst_42 = arith.constant dense<0.000000e+00> : vector<4x256xf32>
    %40 = tpu.matmul %38, %39, %cst_42 {dimension_numbers = #tpu.dot_dimension_numbers<[1], [1], [0], [0], [0, 0, 1, 0], [], []>} : vector<4x256xbf16>, vector<256x256xbf16>, vector<4x256xf32> -> vector<4x256xf32>
    %41 = arith.addf %36, %40 : vector<4x256xf32>
    %c3 = arith.constant 3 : index
    %c0_43 = arith.constant 0 : index
    %c0_44 = arith.constant 0 : index
    %42 = vector.load %arg5[%c3, %c0_43, %c0_44] : memref<7x4x256xbf16, #tpu.memory_space<vmem>>, vector<1x4x256xbf16>
    %43 = vector.shape_cast %42 : vector<1x4x256xbf16> to vector<4x256xbf16>
    %c48_45 = arith.constant 48 : index
    %c0_46 = arith.constant 0 : index
    %44 = vector.load %arg13[%c48_45, %c0_46] : memref<352x256xbf16, #tpu.memory_space<vmem>>, vector<256x256xbf16>
    %cst_47 = arith.constant dense<0.000000e+00> : vector<4x256xf32>
    %45 = tpu.matmul %43, %44, %cst_47 {dimension_numbers = #tpu.dot_dimension_numbers<[1], [1], [0], [0], [0, 0, 1, 0], [], []>} : vector<4x256xbf16>, vector<256x256xbf16>, vector<4x256xf32> -> vector<4x256xf32>
    %46 = arith.addf %41, %45 : vector<4x256xf32>
    %c4 = arith.constant 4 : index
    %c0_48 = arith.constant 0 : index
    %c0_49 = arith.constant 0 : index
    %47 = vector.load %arg5[%c4, %c0_48, %c0_49] : memref<7x4x256xbf16, #tpu.memory_space<vmem>>, vector<1x4x256xbf16>
    %48 = vector.shape_cast %47 : vector<1x4x256xbf16> to vector<4x256xbf16>
    %c64 = arith.constant 64 : index
    %c0_50 = arith.constant 0 : index
    %49 = vector.load %arg13[%c64, %c0_50] : memref<352x256xbf16, #tpu.memory_space<vmem>>, vector<256x256xbf16>
    %cst_51 = arith.constant dense<0.000000e+00> : vector<4x256xf32>
    %50 = tpu.matmul %48, %49, %cst_51 {dimension_numbers = #tpu.dot_dimension_numbers<[1], [1], [0], [0], [0, 0, 1, 0], [], []>} : vector<4x256xbf16>, vector<256x256xbf16>, vector<4x256xf32> -> vector<4x256xf32>
    %51 = arith.addf %46, %50 : vector<4x256xf32>
    %c5 = arith.constant 5 : index
    %c0_52 = arith.constant 0 : index
    %c0_53 = arith.constant 0 : index
    %52 = vector.load %arg5[%c5, %c0_52, %c0_53] : memref<7x4x256xbf16, #tpu.memory_space<vmem>>, vector<1x4x256xbf16>
    %53 = vector.shape_cast %52 : vector<1x4x256xbf16> to vector<4x256xbf16>
    %c80 = arith.constant 80 : index
    %c0_54 = arith.constant 0 : index
    %54 = vector.load %arg13[%c80, %c0_54] : memref<352x256xbf16, #tpu.memory_space<vmem>>, vector<256x256xbf16>
    %cst_55 = arith.constant dense<0.000000e+00> : vector<4x256xf32>
    %55 = tpu.matmul %53, %54, %cst_55 {dimension_numbers = #tpu.dot_dimension_numbers<[1], [1], [0], [0], [0, 0, 1, 0], [], []>} : vector<4x256xbf16>, vector<256x256xbf16>, vector<4x256xf32> -> vector<4x256xf32>
    %56 = arith.addf %51, %55 : vector<4x256xf32>
    %c6 = arith.constant 6 : index
    %c0_56 = arith.constant 0 : index
    %c0_57 = arith.constant 0 : index
    %57 = vector.load %arg5[%c6, %c0_56, %c0_57] : memref<7x4x256xbf16, #tpu.memory_space<vmem>>, vector<1x4x256xbf16>
    %58 = vector.shape_cast %57 : vector<1x4x256xbf16> to vector<4x256xbf16>
    %c96 = arith.constant 96 : index
    %c0_58 = arith.constant 0 : index
    %59 = vector.load %arg13[%c96, %c0_58] : memref<352x256xbf16, #tpu.memory_space<vmem>>, vector<256x256xbf16>
    %cst_59 = arith.constant dense<0.000000e+00> : vector<4x256xf32>
    %60 = tpu.matmul %58, %59, %cst_59 {dimension_numbers = #tpu.dot_dimension_numbers<[1], [1], [0], [0], [0, 0, 1, 0], [], []>} : vector<4x256xbf16>, vector<256x256xbf16>, vector<4x256xf32> -> vector<4x256xf32>
    %61 = arith.addf %56, %60 : vector<4x256xf32>
    %cst_60 = arith.constant 0.000000e+00 : f32
    %62 = vector.broadcast %cst_60 : f32 to vector<4x256xf32>
    %c0_61 = arith.constant 0 : index
    %c0_62 = arith.constant 0 : index
    %c0_63 = arith.constant 0 : index
    %63 = vector.load %arg6[%c0_61, %c0_62, %c0_63] : memref<7x4x256xbf16, #tpu.memory_space<vmem>>, vector<1x4x256xbf16>
    %64 = vector.shape_cast %63 : vector<1x4x256xbf16> to vector<4x256xbf16>
    %c0_64 = arith.constant 0 : index
    %c0_65 = arith.constant 0 : index
    %65 = vector.load %arg14[%c0_64, %c0_65] : memref<352x256xbf16, #tpu.memory_space<vmem>>, vector<256x256xbf16>
    %cst_66 = arith.constant dense<0.000000e+00> : vector<4x256xf32>
    %66 = tpu.matmul %64, %65, %cst_66 {dimension_numbers = #tpu.dot_dimension_numbers<[1], [1], [0], [0], [0, 0, 1, 0], [], []>} : vector<4x256xbf16>, vector<256x256xbf16>, vector<4x256xf32> -> vector<4x256xf32>
    %67 = arith.addf %62, %66 : vector<4x256xf32>
    %c1_67 = arith.constant 1 : index
    %c0_68 = arith.constant 0 : index
    %c0_69 = arith.constant 0 : index
    %68 = vector.load %arg6[%c1_67, %c0_68, %c0_69] : memref<7x4x256xbf16, #tpu.memory_space<vmem>>, vector<1x4x256xbf16>
    %69 = vector.shape_cast %68 : vector<1x4x256xbf16> to vector<4x256xbf16>
    %c16_70 = arith.constant 16 : index
    %c0_71 = arith.constant 0 : index
    %70 = vector.load %arg14[%c16_70, %c0_71] : memref<352x256xbf16, #tpu.memory_space<vmem>>, vector<256x256xbf16>
    %cst_72 = arith.constant dense<0.000000e+00> : vector<4x256xf32>
    %71 = tpu.matmul %69, %70, %cst_72 {dimension_numbers = #tpu.dot_dimension_numbers<[1], [1], [0], [0], [0, 0, 1, 0], [], []>} : vector<4x256xbf16>, vector<256x256xbf16>, vector<4x256xf32> -> vector<4x256xf32>
    %72 = arith.addf %67, %71 : vector<4x256xf32>
    %c2_73 = arith.constant 2 : index
    %c0_74 = arith.constant 0 : index
    %c0_75 = arith.constant 0 : index
    %73 = vector.load %arg6[%c2_73, %c0_74, %c0_75] : memref<7x4x256xbf16, #tpu.memory_space<vmem>>, vector<1x4x256xbf16>
    %74 = vector.shape_cast %73 : vector<1x4x256xbf16> to vector<4x256xbf16>
    %c32_76 = arith.constant 32 : index
    %c0_77 = arith.constant 0 : index
    %75 = vector.load %arg14[%c32_76, %c0_77] : memref<352x256xbf16, #tpu.memory_space<vmem>>, vector<256x256xbf16>
    %cst_78 = arith.constant dense<0.000000e+00> : vector<4x256xf32>
    %76 = tpu.matmul %74, %75, %cst_78 {dimension_numbers = #tpu.dot_dimension_numbers<[1], [1], [0], [0], [0, 0, 1, 0], [], []>} : vector<4x256xbf16>, vector<256x256xbf16>, vector<4x256xf32> -> vector<4x256xf32>
    %77 = arith.addf %72, %76 : vector<4x256xf32>
    %c3_79 = arith.constant 3 : index
    %c0_80 = arith.constant 0 : index
    %c0_81 = arith.constant 0 : index
    %78 = vector.load %arg6[%c3_79, %c0_80, %c0_81] : memref<7x4x256xbf16, #tpu.memory_space<vmem>>, vector<1x4x256xbf16>
    %79 = vector.shape_cast %78 : vector<1x4x256xbf16> to vector<4x256xbf16>
    %c48_82 = arith.constant 48 : index
    %c0_83 = arith.constant 0 : index
    %80 = vector.load %arg14[%c48_82, %c0_83] : memref<352x256xbf16, #tpu.memory_space<vmem>>, vector<256x256xbf16>
    %cst_84 = arith.constant dense<0.000000e+00> : vector<4x256xf32>
    %81 = tpu.matmul %79, %80, %cst_84 {dimension_numbers = #tpu.dot_dimension_numbers<[1], [1], [0], [0], [0, 0, 1, 0], [], []>} : vector<4x256xbf16>, vector<256x256xbf16>, vector<4x256xf32> -> vector<4x256xf32>
    %82 = arith.addf %77, %81 : vector<4x256xf32>
    %c4_85 = arith.constant 4 : index
    %c0_86 = arith.constant 0 : index
    %c0_87 = arith.constant 0 : index
    %83 = vector.load %arg6[%c4_85, %c0_86, %c0_87] : memref<7x4x256xbf16, #tpu.memory_space<vmem>>, vector<1x4x256xbf16>
    %84 = vector.shape_cast %83 : vector<1x4x256xbf16> to vector<4x256xbf16>
    %c64_88 = arith.constant 64 : index
    %c0_89 = arith.constant 0 : index
    %85 = vector.load %arg14[%c64_88, %c0_89] : memref<352x256xbf16, #tpu.memory_space<vmem>>, vector<256x256xbf16>
    %cst_90 = arith.constant dense<0.000000e+00> : vector<4x256xf32>
    %86 = tpu.matmul %84, %85, %cst_90 {dimension_numbers = #tpu.dot_dimension_numbers<[1], [1], [0], [0], [0, 0, 1, 0], [], []>} : vector<4x256xbf16>, vector<256x256xbf16>, vector<4x256xf32> -> vector<4x256xf32>
    %87 = arith.addf %82, %86 : vector<4x256xf32>
    %c5_91 = arith.constant 5 : index
    %c0_92 = arith.constant 0 : index
    %c0_93 = arith.constant 0 : index
    %88 = vector.load %arg6[%c5_91, %c0_92, %c0_93] : memref<7x4x256xbf16, #tpu.memory_space<vmem>>, vector<1x4x256xbf16>
    %89 = vector.shape_cast %88 : vector<1x4x256xbf16> to vector<4x256xbf16>
    %c80_94 = arith.constant 80 : index
    %c0_95 = arith.constant 0 : index
    %90 = vector.load %arg14[%c80_94, %c0_95] : memref<352x256xbf16, #tpu.memory_space<vmem>>, vector<256x256xbf16>
    %cst_96 = arith.constant dense<0.000000e+00> : vector<4x256xf32>
    %91 = tpu.matmul %89, %90, %cst_96 {dimension_numbers = #tpu.dot_dimension_numbers<[1], [1], [0], [0], [0, 0, 1, 0], [], []>} : vector<4x256xbf16>, vector<256x256xbf16>, vector<4x256xf32> -> vector<4x256xf32>
    %92 = arith.addf %87, %91 : vector<4x256xf32>
    %c6_97 = arith.constant 6 : index
    %c0_98 = arith.constant 0 : index
    %c0_99 = arith.constant 0 : index
    %93 = vector.load %arg6[%c6_97, %c0_98, %c0_99] : memref<7x4x256xbf16, #tpu.memory_space<vmem>>, vector<1x4x256xbf16>
    %94 = vector.shape_cast %93 : vector<1x4x256xbf16> to vector<4x256xbf16>
    %c96_100 = arith.constant 96 : index
    %c0_101 = arith.constant 0 : index
    %95 = vector.load %arg14[%c96_100, %c0_101] : memref<352x256xbf16, #tpu.memory_space<vmem>>, vector<256x256xbf16>
    %cst_102 = arith.constant dense<0.000000e+00> : vector<4x256xf32>
    %96 = tpu.matmul %94, %95, %cst_102 {dimension_numbers = #tpu.dot_dimension_numbers<[1], [1], [0], [0], [0, 0, 1, 0], [], []>} : vector<4x256xbf16>, vector<256x256xbf16>, vector<4x256xf32> -> vector<4x256xf32>
    %97 = arith.addf %92, %96 : vector<4x256xf32>
    %c0_103 = arith.constant 0 : index
    %c0_104 = arith.constant 0 : index
    %98 = vector.load %arg11[%c0_103, %c0_104] : memref<256x256xf32, #tpu.memory_space<vmem>>, vector<256x256xf32>
    %cst_105 = arith.constant dense<0.000000e+00> : vector<4x256xf32>
    %99 = tpu.matmul %61, %98, %cst_105 {dimension_numbers = #tpu.dot_dimension_numbers<[1], [0], [0], [1], [0, 0, 1, 1], [], []>} : vector<4x256xf32>, vector<256x256xf32>, vector<4x256xf32> -> vector<4x256xf32>
    %100 = arith.addf %99, %97 : vector<4x256xf32>
    %c0_106 = arith.constant 0 : index
    %c0_107 = arith.constant 0 : index
    %101 = vector.load %arg9[%c0_106, %c0_107] : memref<4x1xf32, #tpu.memory_space<vmem>>, vector<4x1xf32>
    %102 = vector.broadcast %101 : vector<4x1xf32> to vector<4x256xf32>
    %103 = arith.addf %100, %102 : vector<4x256xf32>
    %c0_108 = arith.constant 0 : index
    %c0_109 = arith.constant 0 : index
    %104 = vector.load %arg10[%c0_108, %c0_109] : memref<4x1xf32, #tpu.memory_space<vmem>>, vector<4x1xf32>
    %105 = vector.broadcast %104 : vector<4x1xf32> to vector<4x256xf32>
    %106 = arith.addf %103, %105 : vector<4x256xf32>
    %c0_110 = arith.constant 0 : index
    %c0_111 = arith.constant 0 : index
    %c0_112 = arith.constant 0 : index
    %107 = vector.load %arg12[%c0_110, %c0_111, %c0_112] : memref<1x4x256xf32, #tpu.memory_space<vmem>>, vector<1x4x256xf32>
    %108 = vector.shape_cast %107 : vector<1x4x256xf32> to vector<4x256xf32>
    %109 = vector.shape_cast %106 : vector<4x256xf32> to vector<1x4x256xf32>
    tpu.vector_store %arg12[%c0_110, %c0_111, %c0_112], %109 {strides = array<i32>} : memref<1x4x256xf32, #tpu.memory_space<vmem>>, vector<1x4x256xf32>,
    return
  }
  func.func @transform_0(%arg0: i32) -> (i32, i32, i32) {
    %c0_i32 = arith.constant 0 : i32
    %c0_i32_0 = arith.constant 0 : i32
    %c0_i32_1 = arith.constant 0 : i32
    return %arg0, %c0_i32, %c0_i32_0 : i32, i32, i32
  }
  func.func @transform_1(%arg0: i32) -> (i32, i32, i32) {
    %c0_i32 = arith.constant 0 : i32
    %c0_i32_0 = arith.constant 0 : i32
    %c0_i32_1 = arith.constant 0 : i32
    return %arg0, %c0_i32, %c0_i32_0 : i32, i32, i32
  }
  func.func @transform_2(%arg0: i32) -> (i32, i32) {
    %c0_i32 = arith.constant 0 : i32
    %c0_i32_0 = arith.constant 0 : i32
    %c0_i32_1 = arith.constant 0 : i32
    return %c0_i32, %c0_i32_0 : i32, i32
  }
  func.func @transform_3(%arg0: i32) -> (i32, i32) {
    %c0_i32 = arith.constant 0 : i32
    %c0_i32_0 = arith.constant 0 : i32
    %c0_i32_1 = arith.constant 0 : i32
    return %c0_i32, %c0_i32_0 : i32, i32
  }
  func.func @transform_4(%arg0: i32) -> (i32, i32, i32) {
    %c0_i32 = arith.constant 0 : i32
    %c0_i32_0 = arith.constant 0 : i32
    %c0_i32_1 = arith.constant 0 : i32
    %c0_i32_2 = arith.constant 0 : i32
    return %c0_i32, %c0_i32_0, %c0_i32_1 : i32, i32, i32
  }
  func.func @transform_5(%arg0: i32) -> (i32, i32, i32) {
    %c0_i32 = arith.constant 0 : i32
    %c0_i32_0 = arith.constant 0 : i32
    %c0_i32_1 = arith.constant 0 : i32
    %c0_i32_2 = arith.constant 0 : i32
    return %c0_i32, %c0_i32_0, %c0_i32_1 : i32, i32, i32
  }
  func.func @transform_6(%arg0: i32) -> (i32, i32) {
    %c0_i32 = arith.constant 0 : i32
    %c0_i32_0 = arith.constant 0 : i32
    %c0_i32_1 = arith.constant 0 : i32
    return %c0_i32, %c0_i32_0 : i32, i32
  }
  func.func @transform_7(%arg0: i32) -> (i32, i32) {
    %c0_i32 = arith.constant 0 : i32
    %c0_i32_0 = arith.constant 0 : i32
    %c0_i32_1 = arith.constant 0 : i32
    return %c0_i32, %c0_i32_0 : i32, i32
  }
  func.func @transform_8(%arg0: i32) -> (i32, i32) {
    %c0_i32 = arith.constant 0 : i32
    %c0_i32_0 = arith.constant 0 : i32
    %c0_i32_1 = arith.constant 0 : i32
    return %c0_i32, %c0_i32_0 : i32, i32
  }
  func.func @transform_9(%arg0: i32) -> (i32, i32) {
    %c0_i32 = arith.constant 0 : i32
    %c0_i32_0 = arith.constant 0 : i32
    %c0_i32_1 = arith.constant 0 : i32
    return %c0_i32, %c0_i32_0 : i32, i32
  }
  func.func @transform_10(%arg0: i32) -> (i32, i32) {
    %c0_i32 = arith.constant 0 : i32
    %c0_i32_0 = arith.constant 0 : i32
    %c0_i32_1 = arith.constant 0 : i32
    return %c0_i32, %c0_i32_0 : i32, i32
  }
  func.func @transform_11(%arg0: i32) -> (i32, i32, i32) {
    %c0_i32 = arith.constant 0 : i32
    %c0_i32_0 = arith.constant 0 : i32
    %c0_i32_1 = arith.constant 0 : i32
    return %arg0, %c0_i32, %c0_i32_0 : i32, i32, i32
  }
}

</mosaic_0001>

<llo_original>
// kernel: gc_forward.1
$region0: #{gc_forward.1}
  #allocation0 [shape = 'u32[]', space=smem, size = 0x4, offset = 0x4, fixed_abs, tag = 'smem constant byte address 0x4 - core index']
  #allocation1 [shape = 'u32[72,128]{1,0:T(1,128)}', space=vmem, size = 0x9000, scoped, tag = 'internal scratch']
  #allocation2 [shape = 'bf16[352,256]{1,0:T(8,128)(2,1)}', space=vmem, size = 0x2c000, scoped, tag = 'scratch operand']
  #allocation3 [shape = 'bf16[352,256]{1,0:T(8,128)(2,1)}', space=vmem, size = 0x2c000, scoped, tag = 'scratch operand']
  %s0 = inlined_call_operand.vmem [shape: f32[2,256,28], index: 0, kind: input, shape index: {}]
  %s1 = inlined_call_operand.vmem [shape: f32[2,256,28], index: 1, kind: input, shape index: {}]
  %s2 = inlined_call_operand.vmem [shape: f32[28,256], index: 2, kind: input, shape index: {}]
  %s3 = inlined_call_operand.vmem [shape: f32[28,256], index: 3, kind: input, shape index: {}]
  %s4 = inlined_call_operand.vmem [shape: bf16[7,4,256], index: 4, kind: input, shape index: {}]
  %s5 = inlined_call_operand.vmem [shape: bf16[7,4,256], index: 5, kind: input, shape index: {}]
  %s6 = inlined_call_operand.vmem [shape: f32[1,256], index: 6, kind: input, shape index: {}]
  %s7 = inlined_call_operand.vmem [shape: f32[1,256], index: 7, kind: input, shape index: {}]
  %s8 = inlined_call_operand.vmem [shape: f32[4,1], index: 8, kind: input, shape index: {}]
  %s9 = inlined_call_operand.vmem [shape: f32[4,1], index: 9, kind: input, shape index: {}]
  %s10 = inlined_call_operand.vmem [shape: f32[256,256], index: 10, kind: input, shape index: {}]
  %s11 = inlined_call_operand.vmem [shape: f32[2,4,256], index: 11, kind: output, shape index: {}]
  %s12 = sld [smem:[#allocation0]]
  $region77: #{gc_forward.1} parent=0
    _
  %s14 = ssub.s32 1, %s12
  %s15 = scalar_select 0, %s14, %s12
  loop: start=0, step=1, limit=4
  $region2: #{gc_forward.1} parent=0 // loop_pre_header
    _
  $region3: #{gc_forward.1} parent=0 // loop_header
    %s17 = sphi 0, %s21
    %p18 = scmp.ge.s32.totalorder %s17, 4
    %s27 = sphi 0, %s29
    %s30 = sphi 0, %s27
    %s31 = sphi 0, %s30
    %s47 = sphi 0, %s31
    %s53 = sphi 0, %s55
    %s56 = sphi 0, %s53
    %s57 = sphi 0, %s56
    %s73 = sphi 0, %s57
    %s77 = sphi 0, %s77
    %s79 = sphi 0, %s77
    %s80 = sphi 0, %s79
    %s94 = sphi 0, %s80
    %s98 = sphi 0, %s98
    %s100 = sphi 0, %s98
    %s101 = sphi 0, %s100
    %s115 = sphi 0, %s101
    %s119 = sphi 0, %s119
    %s121 = sphi 0, %s119
    %s122 = sphi 0, %s121
    %s136 = sphi 0, %s122
    %s140 = sphi 0, %s140
    %s142 = sphi 0, %s140
    %s143 = sphi 0, %s142
    %s157 = sphi 0, %s143
    %s161 = sphi 0, %s161
    %s163 = sphi 0, %s161
    %s164 = sphi 0, %s163
    %s178 = sphi 0, %s164
    %s182 = sphi 0, %s182
    %s184 = sphi 0, %s182
    %s185 = sphi 0, %s184
    %s199 = sphi 0, %s185
    %s203 = sphi 0, %s203
    %s205 = sphi 0, %s203
    %s206 = sphi 0, %s205
    %s220 = sphi 0, %s206
    %s224 = sphi 0, %s224
    %s226 = sphi 0, %s224
    %s227 = sphi 0, %s226
    %s241 = sphi 0, %s227
    %s245 = sphi 0, %s245
    %s247 = sphi 0, %s245
    %s248 = sphi 0, %s247
    %s262 = sphi 0, %s248
    %s268 = sphi 0, %s270
    %s271 = sphi 0, %s268
    %s272 = sphi 0, %s271
    %s288 = sphi 0, %s272
  $region4: #{gc_forward.1} parent=0 // loop_header_branch
    %20 = sbr.rel (%p18) target = $region8
  $region5: #{gc_forward.1} parent=0 // loop_body
    %s22 = ssub.s32 %s17, 1
    %s23 = ssub.s32 %s17, 2
    %s24 = sadd.s32 %s17, 1
    %s25 = ssub.s32 %s17, %s24
    %p26 = scmp.eq.s32.totalorder %s25, 0
    %s28 = sadd.s32 %s27, 1
    %s29 = scalar_select %p26, %s27, %s28
    %p32 = pneg %p26
    %p33 = scmp.eq.s32.totalorder %s17, 1
    %p34 = por %p32, %p33
    %p35 = scmp.ne.s32.totalorder %s27, %s30
    %p36 = scmp.eq.s32.totalorder %s17, 0
    %p37 = por %p35, %p36
    %p38 = scmp.ne.s32.totalorder %s27, %s30
    %p39 = scmp.eq.s32.totalorder %s22, 1
    %p40 = por %p38, %p39
    %p41 = scmp.ne.s32.totalorder %s30, %s31
    %p42 = scmp.eq.s32.totalorder %s22, 0
    %p43 = por %p41, %p42
    %p44 = scmp.ne.s32.totalorder %s30, %s31
    %p45 = scmp.eq.s32.totalorder %s23, 1
    %p46 = por %p44, %p45
    %p48 = scmp.ne.s32.totalorder %s31, %s47
    %p49 = scmp.eq.s32.totalorder %s23, 0
    %p50 = por %p48, %p49
    %s51 = ssub.s32 %s17, %s24
    %p52 = scmp.eq.s32.totalorder %s51, 0
    %s54 = sadd.s32 %s53, 1
    %s55 = scalar_select %p52, %s53, %s54
    %p58 = pneg %p52
    %p59 = scmp.eq.s32.totalorder %s17, 1
    %p60 = por %p58, %p59
    %p61 = scmp.ne.s32.totalorder %s53, %s56
    %p62 = scmp.eq.s32.totalorder %s17, 0
    %p63 = por %p61, %p62
    %p64 = scmp.ne.s32.totalorder %s53, %s56
    %p65 = scmp.eq.s32.totalorder %s22, 1
    %p66 = por %p64, %p65
    %p67 = scmp.ne.s32.totalorder %s56, %s57
    %p68 = scmp.eq.s32.totalorder %s22, 0
    %p69 = por %p67, %p68
    %p70 = scmp.ne.s32.totalorder %s56, %s57
    %p71 = scmp.eq.s32.totalorder %s23, 1
    %p72 = por %p70, %p71
    %p74 = scmp.ne.s32.totalorder %s57, %s73
    %p75 = scmp.eq.s32.totalorder %s23, 0
    %p76 = por %p74, %p75
    %s78 = sadd.s32 %s77, 1
    %p81 = scmp.eq.s32.totalorder %s17, 1
    %p82 = scmp.ne.s32.totalorder %s77, %s79
    %p83 = scmp.eq.s32.totalorder %s17, 0
    %p84 = por %p82, %p83
    %p85 = scmp.ne.s32.totalorder %s77, %s79
    %p86 = scmp.eq.s32.totalorder %s22, 1
    %p87 = por %p85, %p86
    %p88 = scmp.ne.s32.totalorder %s79, %s80
    %p89 = scmp.eq.s32.totalorder %s22, 0
    %p90 = por %p88, %p89
    %p91 = scmp.ne.s32.totalorder %s79, %s80
    %p92 = scmp.eq.s32.totalorder %s23, 1
    %p93 = por %p91, %p92
    %p95 = scmp.ne.s32.totalorder %s80, %s94
    %p96 = scmp.eq.s32.totalorder %s23, 0
    %p97 = por %p95, %p96
    %s99 = sadd.s32 %s98, 1
    %p102 = scmp.eq.s32.totalorder %s17, 1
    %p103 = scmp.ne.s32.totalorder %s98, %s100
    %p104 = scmp.eq.s32.totalorder %s17, 0
    %p105 = por %p103, %p104
    %p106 = scmp.ne.s32.totalorder %s98, %s100
    %p107 = scmp.eq.s32.totalorder %s22, 1
    %p108 = por %p106, %p107
    %p109 = scmp.ne.s32.totalorder %s100, %s101
    %p110 = scmp.eq.s32.totalorder %s22, 0
    %p111 = por %p109, %p110
    %p112 = scmp.ne.s32.totalorder %s100, %s101
    %p113 = scmp.eq.s32.totalorder %s23, 1
    %p114 = por %p112, %p113
    %p116 = scmp.ne.s32.totalorder %s101, %s115
    %p117 = scmp.eq.s32.totalorder %s23, 0
    %p118 = por %p116, %p117
    %s120 = sadd.s32 %s119, 1
    %p123 = scmp.eq.s32.totalorder %s17, 1
    %p124 = scmp.ne.s32.totalorder %s119, %s121
    %p125 = scmp.eq.s32.totalorder %s17, 0
    %p126 = por %p124, %p125
    %p127 = scmp.ne.s32.totalorder %s119, %s121
    %p128 = scmp.eq.s32.totalorder %s22, 1
    %p129 = por %p127, %p128
    %p130 = scmp.ne.s32.totalorder %s121, %s122
    %p131 = scmp.eq.s32.totalorder %s22, 0
    %p132 = por %p130, %p131
    %p133 = scmp.ne.s32.totalorder %s121, %s122
    %p134 = scmp.eq.s32.totalorder %s23, 1
    %p135 = por %p133, %p134
    %p137 = scmp.ne.s32.totalorder %s122, %s136
    %p138 = scmp.eq.s32.totalorder %s23, 0
    %p139 = por %p137, %p138
    %s141 = sadd.s32 %s140, 1
    %p144 = scmp.eq.s32.totalorder %s17, 1
    %p145 = scmp.ne.s32.totalorder %s140, %s142
    %p146 = scmp.eq.s32.totalorder %s17, 0
    %p147 = por %p145, %p146
    %p148 = scmp.ne.s32.totalorder %s140, %s142
    %p149 = scmp.eq.s32.totalorder %s22, 1
    %p150 = por %p148, %p149
    %p151 = scmp.ne.s32.totalorder %s142, %s143
    %p152 = scmp.eq.s32.totalorder %s22, 0
    %p153 = por %p151, %p152
    %p154 = scmp.ne.s32.totalorder %s142, %s143
    %p155 = scmp.eq.s32.totalorder %s23, 1
    %p156 = por %p154, %p155
    %p158 = scmp.ne.s32.totalorder %s143, %s157
    %p159 = scmp.eq.s32.totalorder %s23, 0
    %p160 = por %p158, %p159
    %s162 = sadd.s32 %s161, 1
    %p165 = scmp.eq.s32.totalorder %s17, 1
    %p166 = scmp.ne.s32.totalorder %s161, %s163
    %p167 = scmp.eq.s32.totalorder %s17, 0
    %p168 = por %p166, %p167
    %p169 = scmp.ne.s32.totalorder %s161, %s163
    %p170 = scmp.eq.s32.totalorder %s22, 1
    %p171 = por %p169, %p170
    %p172 = scmp.ne.s32.totalorder %s163, %s164
    %p173 = scmp.eq.s32.totalorder %s22, 0
    %p174 = por %p172, %p173
    %p175 = scmp.ne.s32.totalorder %s163, %s164
    %p176 = scmp.eq.s32.totalorder %s23, 1
    %p177 = por %p175, %p176
    %p179 = scmp.ne.s32.totalorder %s164, %s178
    %p180 = scmp.eq.s32.totalorder %s23, 0
    %p181 = por %p179, %p180
    %s183 = sadd.s32 %s182, 1
    %p186 = scmp.eq.s32.totalorder %s17, 1
    %p187 = scmp.ne.s32.totalorder %s182, %s184
    %p188 = scmp.eq.s32.totalorder %s17, 0
    %p189 = por %p187, %p188
    %p190 = scmp.ne.s32.totalorder %s182, %s184
    %p191 = scmp.eq.s32.totalorder %s22, 1
    %p192 = por %p190, %p191
    %p193 = scmp.ne.s32.totalorder %s184, %s185
    %p194 = scmp.eq.s32.totalorder %s22, 0
    %p195 = por %p193, %p194
    %p196 = scmp.ne.s32.totalorder %s184, %s185
    %p197 = scmp.eq.s32.totalorder %s23, 1
    %p198 = por %p196, %p197
    %p200 = scmp.ne.s32.totalorder %s185, %s199
    %p201 = scmp.eq.s32.totalorder %s23, 0
    %p202 = por %p200, %p201
    %s204 = sadd.s32 %s203, 1
    %p207 = scmp.eq.s32.totalorder %s17, 1
    %p208 = scmp.ne.s32.totalorder %s203, %s205
    %p209 = scmp.eq.s32.totalorder %s17, 0
    %p210 = por %p208, %p209
    %p211 = scmp.ne.s32.totalorder %s203, %s205
    %p212 = scmp.eq.s32.totalorder %s22, 1
    %p213 = por %p211, %p212
    %p214 = scmp.ne.s32.totalorder %s205, %s206
    %p215 = scmp.eq.s32.totalorder %s22, 0
    %p216 = por %p214, %p215
    %p217 = scmp.ne.s32.totalorder %s205, %s206
    %p218 = scmp.eq.s32.totalorder %s23, 1
    %p219 = por %p217, %p218
    %p221 = scmp.ne.s32.totalorder %s206, %s220
    %p222 = scmp.eq.s32.totalorder %s23, 0
    %p223 = por %p221, %p222
    %s225 = sadd.s32 %s224, 1
    %p228 = scmp.eq.s32.totalorder %s17, 1
    %p229 = scmp.ne.s32.totalorder %s224, %s226
    %p230 = scmp.eq.s32.totalorder %s17, 0
    %p231 = por %p229, %p230
    %p232 = scmp.ne.s32.totalorder %s224, %s226
    %p233 = scmp.eq.s32.totalorder %s22, 1
    %p234 = por %p232, %p233
    %p235 = scmp.ne.s32.totalorder %s226, %s227
    %p236 = scmp.eq.s32.totalorder %s22, 0
    %p237 = por %p235, %p236
    %p238 = scmp.ne.s32.totalorder %s226, %s227
    %p239 = scmp.eq.s32.totalorder %s23, 1
    %p240 = por %p238, %p239
    %p242 = scmp.ne.s32.totalorder %s227, %s241
    %p243 = scmp.eq.s32.totalorder %s23, 0
    %p244 = por %p242, %p243
    %s246 = sadd.s32 %s245, 1
    %p249 = scmp.eq.s32.totalorder %s17, 1
    %p250 = scmp.ne.s32.totalorder %s245, %s247
    %p251 = scmp.eq.s32.totalorder %s17, 0
    %p252 = por %p250, %p251
    %p253 = scmp.ne.s32.totalorder %s245, %s247
    %p254 = scmp.eq.s32.totalorder %s22, 1
    %p255 = por %p253, %p254
    %p256 = scmp.ne.s32.totalorder %s247, %s248
    %p257 = scmp.eq.s32.totalorder %s22, 0
    %p258 = por %p256, %p257
    %p259 = scmp.ne.s32.totalorder %s247, %s248
    %p260 = scmp.eq.s32.totalorder %s23, 1
    %p261 = por %p259, %p260
    %p263 = scmp.ne.s32.totalorder %s248, %s262
    %p264 = scmp.eq.s32.totalorder %s23, 0
    %p265 = por %p263, %p264
    %s266 = ssub.s32 %s17, %s24
    %p267 = scmp.eq.s32.totalorder %s266, 0
    %s269 = sadd.s32 %s268, 1
    %s270 = scalar_select %p267, %s268, %s269
    %p273 = pneg %p267
    %p274 = scmp.eq.s32.totalorder %s17, 1
    %p275 = por %p273, %p274
    %p276 = scmp.ne.s32.totalorder %s268, %s271
    %p277 = scmp.eq.s32.totalorder %s17, 0
    %p278 = por %p276, %p277
    %p279 = scmp.ne.s32.totalorder %s268, %s271
    %p280 = scmp.eq.s32.totalorder %s22, 1
    %p281 = por %p279, %p280
    %p282 = scmp.ne.s32.totalorder %s271, %s272
    %p283 = scmp.eq.s32.totalorder %s22, 0
    %p284 = por %p282, %p283
    %p285 = scmp.ne.s32.totalorder %s271, %s272
    %p286 = scmp.eq.s32.totalorder %s23, 1
    %p287 = por %p285, %p286
    %p289 = scmp.ne.s32.totalorder %s272, %s288
    %p290 = scmp.eq.s32.totalorder %s23, 0
    %p291 = por %p289, %p290
    %p292 = scmp.le.s32.totalorder 1, %s17
    %p293 = scmp.lt.s32.totalorder %s17, 3
    %p294 = pnand %p292, %p293
    %p295 = pneg %p294
    // Predicated region
    $region9: #{gc_forward.1} parent=5 // pred_check
      _
    $region10: #{gc_forward.1} parent=5 // pred_check_branch
      %297 = sbr.rel (%p294) target = $region12
    $region11: #{gc_forward.1} parent=5 // pred_region
      %s298 = ssub.s32 %s17, 1
      // Predicated region
      $region13: #{gc_forward.1} parent=11 // pred_check
        %p299 = pneg %p90
      $region14: #{gc_forward.1} parent=11 // pred_check_branch
        %301 = sbr.rel (%p299) target = $region16
      $region15: #{gc_forward.1} parent=11 // pred_region
        _
      $region16: #{gc_forward.1} parent=11 // pred_fallthru
        _
      // Predicated region
      $region17: #{gc_forward.1} parent=11 // pred_check
        %p302 = pneg %p111
      $region18: #{gc_forward.1} parent=11 // pred_check_branch
        %304 = sbr.rel (%p302) target = $region20
      $region19: #{gc_forward.1} parent=11 // pred_region
        _
      $region20: #{gc_forward.1} parent=11 // pred_fallthru
        _
      // Predicated region
      $region21: #{gc_forward.1} parent=11 // pred_check
        %p305 = pneg %p132
      $region22: #{gc_forward.1} parent=11 // pred_check_branch
        %307 = sbr.rel (%p305) target = $region24
      $region23: #{gc_forward.1} parent=11 // pred_region
        _
      $region24: #{gc_forward.1} parent=11 // pred_fallthru
        _
      // Predicated region
      $region25: #{gc_forward.1} parent=11 // pred_check
        %p308 = pneg %p153
      $region26: #{gc_forward.1} parent=11 // pred_check_branch
        %310 = sbr.rel (%p308) target = $region28
      $region27: #{gc_forward.1} parent=11 // pred_region
        _
      $region28: #{gc_forward.1} parent=11 // pred_fallthru
        _
      // Predicated region
      $region29: #{gc_forward.1} parent=11 // pred_check
        %p311 = pneg %p174
      $region30: #{gc_forward.1} parent=11 // pred_check_branch
        %313 = sbr.rel (%p311) target = $region32
      $region31: #{gc_forward.1} parent=11 // pred_region
        _
      $region32: #{gc_forward.1} parent=11 // pred_fallthru
        _
      // Predicated region
      $region33: #{gc_forward.1} parent=11 // pred_check
        %p314 = pneg %p195
      $region34: #{gc_forward.1} parent=11 // pred_check_branch
        %316 = sbr.rel (%p314) target = $region36
      $region35: #{gc_forward.1} parent=11 // pred_region
        _
      $region36: #{gc_forward.1} parent=11 // pred_fallthru
        _
      // Predicated region
      $region37: #{gc_forward.1} parent=11 // pred_check
        %p317 = pneg %p216
      $region38: #{gc_forward.1} parent=11 // pred_check_branch
        %319 = sbr.rel (%p317) target = $region40
      $region39: #{gc_forward.1} parent=11 // pred_region
        _
      $region40: #{gc_forward.1} parent=11 // pred_fallthru
        _
      // Predicated region
      $region41: #{gc_forward.1} parent=11 // pred_check
        %p320 = pneg %p237
      $region42: #{gc_forward.1} parent=11 // pred_check_branch
        %322 = sbr.rel (%p320) target = $region44
      $region43: #{gc_forward.1} parent=11 // pred_region
        _
      $region44: #{gc_forward.1} parent=11 // pred_fallthru
        _
      // Predicated region
      $region45: #{gc_forward.1} parent=11 // pred_check
        %p323 = pneg %p258
      $region46: #{gc_forward.1} parent=11 // pred_check_branch
        %325 = sbr.rel (%p323) target = $region48
      $region47: #{gc_forward.1} parent=11 // pred_region
        _
      $region48: #{gc_forward.1} parent=11 // pred_fallthru
        _
    $region12: #{gc_forward.1} parent=5 // pred_fallthru
      _
    %p326 = scmp.lt.s32.totalorder %s17, 2
    // Predicated region
    $region49: #{gc_forward.1} parent=5 // pred_check
      %p327 = pneg %p326
    $region50: #{gc_forward.1} parent=5 // pred_check_branch
      %329 = sbr.rel (%p327) target = $region52
    $region51: #{gc_forward.1} parent=5 // pred_region
      // Predicated region
      $region53: #{gc_forward.1} parent=51 // pred_check
        %p330 = pneg %p37
      $region54: #{gc_forward.1} parent=51 // pred_check_branch
        %332 = sbr.rel (%p330) target = $region56
      $region55: #{gc_forward.1} parent=51 // pred_region
        %p333 = scmp.lt.s32.totalorder %s17, 1
        %s334 = scalar_select %p333, %s17, 1
        %s335 = smul.addr %s334, 32
        %s336 = smul.addr %s335, 8
        %s337 = scalar_lea.vmem %s0, %s336
      $region56: #{gc_forward.1} parent=51 // pred_fallthru
        _
      // Predicated region
      $region57: #{gc_forward.1} parent=51 // pred_check
        %p338 = pneg %p63
      $region58: #{gc_forward.1} parent=51 // pred_check_branch
        %340 = sbr.rel (%p338) target = $region60
      $region59: #{gc_forward.1} parent=51 // pred_region
        %p341 = scmp.lt.s32.totalorder %s17, 1
        %s342 = scalar_select %p341, %s17, 1
        %s343 = smul.addr %s342, 32
        %s344 = smul.addr %s343, 8
        %s345 = scalar_lea.vmem %s1, %s344
      $region60: #{gc_forward.1} parent=51 // pred_fallthru
        _
    $region52: #{gc_forward.1} parent=5 // pred_fallthru
      _
    %p346 = scmp.le.s32.totalorder 1, %s17
    %p347 = scmp.lt.s32.totalorder %s17, 3
    %p348 = pnand %p346, %p347
    %p349 = pneg %p348
    // Predicated region
    $region61: #{gc_forward.1} parent=5 // pred_check
      _
    $region62: #{gc_forward.1} parent=5 // pred_check_branch
      %351 = sbr.rel (%p348) target = $region64
    $region63: #{gc_forward.1} parent=5 // pred_region
      %s352 = ssub.s32 %s17, 1
      %p353 = scmp.lt.s32.totalorder %s22, 1
      %s354 = scalar_select %p353, %s22, 1
      %s355 = smul.addr %s354, 32
      %s356 = smul.addr %s355, 8
      %s357 = scalar_lea.vmem %s0, %s356
      %p358 = pneg %p43
      %p359 = pneg %p40
      %p360 = scmp.lt.s32.totalorder %s22, 1
      %s361 = scalar_select %p360, %s22, 1
      %s362 = smul.addr %s361, 32
      %s363 = smul.addr %s362, 8
      %s364 = scalar_lea.vmem %s1, %s363
      %p365 = pneg %p69
      %p366 = pneg %p66
      %p367 = pneg %p90
      %p368 = pneg %p87
      %p369 = pneg %p111
      %p370 = pneg %p108
      %p371 = pneg %p132
      %p372 = pneg %p129
      %p373 = pneg %p153
      %p374 = pneg %p150
      %p375 = pneg %p174
      %p376 = pneg %p171
      %p377 = pneg %p195
      %p378 = pneg %p192
      %p379 = pneg %p216
      %p380 = pneg %p213
      %p381 = pneg %p237
      %p382 = pneg %p234
      %p383 = pneg %p258
      %p384 = pneg %p255
      %p385 = pneg %p284
      %p386 = pneg %p281
      %p387 = scmp.lt.s32.totalorder %s22, 1
      %s388 = scalar_select %p387, %s22, 1
      %s389 = smul.addr %s388, 2
      %s390 = smul.addr %s389, 4
      %s391 = scalar_lea.vmem %s11, %s390
      %p392 = scmp.lt.s32.totalorder %s22, 1
      %s393 = scalar_select %p392, %s22, 1
      %s394 = smul.addr %s393, 32
      %s395 = smul.addr %s394, 8
      %s396 = scalar_lea.vmem %s0, %s395
      %p397 = scmp.lt.s32.totalorder %s22, 1
      %s398 = scalar_select %p397, %s22, 1
      %s399 = smul.addr %s398, 32
      %s400 = smul.addr %s399, 8
      %s401 = scalar_lea.vmem %s1, %s400
      %p402 = scmp.lt.s32.totalorder %s22, 1
      %s403 = scalar_select %p402, %s22, 1
      %s404 = smul.addr %s403, 2
      %s405 = smul.addr %s404, 4
      %s406 = scalar_lea.vmem %s11, %s405
      %v408 = vld [vmem:[%s396] sm:$0xff]
      %v409 = vld [vmem:[%s396 + $0x8] sm:$0xff]
      %v410 = vld [vmem:[%s396 + $0x10] sm:$0xff]
      %v411 = vld [vmem:[%s396 + $0x18] sm:$0xff]
      %v412 = vld [vmem:[%s396 + $0x20] sm:$0xff]
      %v413 = vld [vmem:[%s396 + $0x28] sm:$0xff]
      %v414 = vld [vmem:[%s396 + $0x30] sm:$0xff]
      %v415 = vld [vmem:[%s396 + $0x38] sm:$0xff]
      %v416 = vld [vmem:[%s396 + $0x40] sm:$0xff]
      %v417 = vld [vmem:[%s396 + $0x48] sm:$0xff]
      %v418 = vld [vmem:[%s396 + $0x50] sm:$0xff]
      %v419 = vld [vmem:[%s396 + $0x58] sm:$0xff]
      %v420 = vld [vmem:[%s396 + $0x60] sm:$0xff]
      %v421 = vld [vmem:[%s396 + $0x68] sm:$0xff]
      %v422 = vld [vmem:[%s396 + $0x70] sm:$0xff]
      %v423 = vld [vmem:[%s396 + $0x78] sm:$0xff]
      %v424 = vld [vmem:[%s396 + $0x80] sm:$0xff]
      %v425 = vld [vmem:[%s396 + $0x88] sm:$0xff]
      %v426 = vld [vmem:[%s396 + $0x90] sm:$0xff]
      %v427 = vld [vmem:[%s396 + $0x98] sm:$0xff]
      %v428 = vld [vmem:[%s396 + $0xa0] sm:$0xff]
      %v429 = vld [vmem:[%s396 + $0xa8] sm:$0xff]
      %v430 = vld [vmem:[%s396 + $0xb0] sm:$0xff]
      %v431 = vld [vmem:[%s396 + $0xb8] sm:$0xff]
      %v432 = vld [vmem:[%s396 + $0xc0] sm:$0xff]
      %v433 = vld [vmem:[%s396 + $0xc8] sm:$0xff]
      %v434 = vld [vmem:[%s396 + $0xd0] sm:$0xff]
      %v435 = vld [vmem:[%s396 + $0xd8] sm:$0xff]
      %v436 = vld [vmem:[%s396 + $0xe0] sm:$0xff]
      %v437 = vld [vmem:[%s396 + $0xe8] sm:$0xff]
      %v438 = vld [vmem:[%s396 + $0xf0] sm:$0xff]
      %v439 = vld [vmem:[%s396 + $0xf8] sm:$0xff]
      %v440 = vld [vmem:[%s2] sm:$0xff]
      %v441 = vld [vmem:[%s2 + $0x8] sm:$0xff]
      %v442 = vld [vmem:[%s2 + $0x10] sm:$0xff]
      %v443 = vld [vmem:[%s2 + $0x18] sm:$0xff]
      %v444 = vld [vmem:[%s2 + $0x20] sm:$0xff]
      %v445 = vld [vmem:[%s2 + $0x28] sm:$0xff]
      %v446 = vld [vmem:[%s2 + $0x30] sm:$0xf]
      %v447 = vld [vmem:[%s2 + $0x38] sm:$0xf]
      %v448 = vld [vmem:[%s6] sm:$0x3]
      %v450 = vperm.slane %v448, 0
      %v451 = vperm.slane %v448, 1
      %vm454 = vcmask 228352
      %v456 = vsel %vm454, %v408, 0
      %v459 = vsel %vm454, %v409, 0
      %v462 = vsel %vm454, %v410, 0
      %v465 = vsel %vm454, %v411, 0
      %v468 = vsel %vm454, %v412, 0
      %v471 = vsel %vm454, %v413, 0
      %v474 = vsel %vm454, %v414, 0
      %v477 = vsel %vm454, %v415, 0
      %v480 = vsel %vm454, %v416, 0
      %v483 = vsel %vm454, %v417, 0
      %v486 = vsel %vm454, %v418, 0
      %v489 = vsel %vm454, %v419, 0
      %v492 = vsel %vm454, %v420, 0
      %v495 = vsel %vm454, %v421, 0
      %v498 = vsel %vm454, %v422, 0
      %v501 = vsel %vm454, %v423, 0
      %v504 = vsel %vm454, %v424, 0
      %v507 = vsel %vm454, %v425, 0
      %v510 = vsel %vm454, %v426, 0
      %v513 = vsel %vm454, %v427, 0
      %v516 = vsel %vm454, %v428, 0
      %v519 = vsel %vm454, %v429, 0
      %v522 = vsel %vm454, %v430, 0
      %v525 = vsel %vm454, %v431, 0
      %v528 = vsel %vm454, %v432, 0
      %v531 = vsel %vm454, %v433, 0
      %v534 = vsel %vm454, %v434, 0
      %v537 = vsel %vm454, %v435, 0
      %v540 = vsel %vm454, %v436, 0
      %v543 = vsel %vm454, %v437, 0
      %v546 = vsel %vm454, %v438, 0
      %v549 = vsel %vm454, %v439, 0
      %vm551 = vcmask 1043456
      %v553 = vsel %vm551, %v446, 0
      %v556 = vsel %vm551, %v447, 0
      %558 = vmatpush.msra.mxu0 0.0
      %559 = vmatpush.msra.mxu0 0.0
      %560 = vmatpush.msra.mxu0 0.0
      %561 = vmatpush.msra.mxu0 0.0
      %562 = vmatpush.msra.mxu0 0.0
      %563 = vmatpush.msra.mxu0 0.0
      %564 = vmatpush.msra.mxu0 0.0
      %565 = vmatpush.msra.mxu0 0.0
      %566 = vmatpush.msra.mxu0 0.0
      %567 = vmatpush.msra.mxu0 0.0
      %568 = vmatpush.msra.mxu0 0.0
      %569 = vmatpush.msra.mxu0 0.0
      %570 = vmatpush.msra.mxu0 %v553
      %571 = vmatpush.msra.mxu0 %v444
      %572 = vmatpush.msra.mxu0 %v442
      %573 = vmatpush.msra.mxu0 %v440
      %574 = vmatmul.f32.gmra.mxu0 %v456
      %v575 = vpop.f32.mrf.mxu0
      %v576 = vadd.f32 %v450, %v575
      %577 = vmatmul.f32.gmra.mxu0 %v459
      %v578 = vpop.f32.mrf.mxu0
      %v579 = vadd.f32 %v450, %v578
      %580 = vmatmul.f32.gmra.mxu0 %v462
      %v581 = vpop.f32.mrf.mxu0
      %v582 = vadd.f32 %v450, %v581
      %583 = vmatmul.f32.gmra.mxu0 %v465
      %v584 = vpop.f32.mrf.mxu0
      %v585 = vadd.f32 %v450, %v584
      %586 = vmatmul.f32.gmra.mxu0 %v468
      %v587 = vpop.f32.mrf.mxu0
      %v588 = vadd.f32 %v450, %v587
      %589 = vmatmul.f32.gmra.mxu0 %v471
      %v590 = vpop.f32.mrf.mxu0
      %v591 = vadd.f32 %v450, %v590
      %592 = vmatmul.f32.gmra.mxu0 %v474
      %v593 = vpop.f32.mrf.mxu0
      %v594 = vadd.f32 %v450, %v593
      %595 = vmatmul.f32.gmra.mxu0 %v477
      %v596 = vpop.f32.mrf.mxu0
      %v597 = vadd.f32 %v450, %v596
      %598 = vmatmul.f32.gmra.mxu0 %v480
      %v599 = vpop.f32.mrf.mxu0
      %v600 = vadd.f32 %v450, %v599
      %601 = vmatmul.f32.gmra.mxu0 %v483
      %v602 = vpop.f32.mrf.mxu0
      %v603 = vadd.f32 %v450, %v602
      %604 = vmatmul.f32.gmra.mxu0 %v486
      %v605 = vpop.f32.mrf.mxu0
      %v606 = vadd.f32 %v450, %v605
      %607 = vmatmul.f32.gmra.mxu0 %v489
      %v608 = vpop.f32.mrf.mxu0
      %v609 = vadd.f32 %v450, %v608
      %610 = vmatmul.f32.gmra.mxu0 %v492
      %v611 = vpop.f32.mrf.mxu0
      %v612 = vadd.f32 %v450, %v611
      %613 = vmatmul.f32.gmra.mxu0 %v495
      %v614 = vpop.f32.mrf.mxu0
      %v615 = vadd.f32 %v450, %v614
      %616 = vmatmul.f32.gmra.mxu0 %v498
      %v617 = vpop.f32.mrf.mxu0
      %v618 = vadd.f32 %v450, %v617
      %619 = vmatmul.f32.gmra.mxu0 %v501
      %v620 = vpop.f32.mrf.mxu0
      %v621 = vadd.f32 %v450, %v620
      %622 = vmatmul.f32.gmra.mxu0 %v504
      %v623 = vpop.f32.mrf.mxu0
      %v624 = vadd.f32 %v450, %v623
      %625 = vmatmul.f32.gmra.mxu0 %v507
      %v626 = vpop.f32.mrf.mxu0
      %v627 = vadd.f32 %v450, %v626
      %628 = vmatmul.f32.gmra.mxu0 %v510
      %v629 = vpop.f32.mrf.mxu0
      %v630 = vadd.f32 %v450, %v629
      %631 = vmatmul.f32.gmra.mxu0 %v513
      %v632 = vpop.f32.mrf.mxu0
      %v633 = vadd.f32 %v450, %v632
      %634 = vmatmul.f32.gmra.mxu0 %v516
      %v635 = vpop.f32.mrf.mxu0
      %v636 = vadd.f32 %v450, %v635
      %637 = vmatmul.f32.gmra.mxu0 %v519
      %v638 = vpop.f32.mrf.mxu0
      %v639 = vadd.f32 %v450, %v638
      %640 = vmatmul.f32.gmra.mxu0 %v522
      %v641 = vpop.f32.mrf.mxu0
      %v642 = vadd.f32 %v450, %v641
      %643 = vmatmul.f32.gmra.mxu0 %v525
      %v644 = vpop.f32.mrf.mxu0
      %v645 = vadd.f32 %v450, %v644
      %646 = vmatmul.f32.gmra.mxu0 %v528
      %v647 = vpop.f32.mrf.mxu0
      %v648 = vadd.f32 %v450, %v647
      %649 = vmatmul.f32.gmra.mxu0 %v531
      %v650 = vpop.f32.mrf.mxu0
      %v651 = vadd.f32 %v450, %v650
      %652 = vmatmul.f32.gmra.mxu0 %v534
      %v653 = vpop.f32.mrf.mxu0
      %v654 = vadd.f32 %v450, %v653
      %655 = vmatmul.f32.gmra.mxu0 %v537
      %v656 = vpop.f32.mrf.mxu0
      %v657 = vadd.f32 %v450, %v656
      %658 = vmatmul.f32.gmra.mxu0 %v540
      %v659 = vpop.f32.mrf.mxu0
      %v660 = vadd.f32 %v450, %v659
      %661 = vmatmul.f32.gmra.mxu0 %v543
      %v662 = vpop.f32.mrf.mxu0
      %v663 = vadd.f32 %v450, %v662
      %664 = vmatmul.f32.gmra.mxu0 %v546
      %v665 = vpop.f32.mrf.mxu0
      %v666 = vadd.f32 %v450, %v665
      %667 = vmatmul.f32.gmra.mxu0 %v549
      %v668 = vpop.f32.mrf.mxu0
      %v669 = vadd.f32 %v450, %v668
      %670 = vdwg.mxu0
      %671 = vmatpush.msra.mxu0 0.0
      %672 = vmatpush.msra.mxu0 0.0
      %673 = vmatpush.msra.mxu0 0.0
      %674 = vmatpush.msra.mxu0 0.0
      %675 = vmatpush.msra.mxu0 0.0
      %676 = vmatpush.msra.mxu0 0.0
      %677 = vmatpush.msra.mxu0 0.0
      %678 = vmatpush.msra.mxu0 0.0
      %679 = vmatpush.msra.mxu0 0.0
      %680 = vmatpush.msra.mxu0 0.0
      %681 = vmatpush.msra.mxu0 0.0
      %682 = vmatpush.msra.mxu0 0.0
      %683 = vmatpush.msra.mxu0 %v556
      %684 = vmatpush.msra.mxu0 %v445
      %685 = vmatpush.msra.mxu0 %v443
      %686 = vmatpush.msra.mxu0 %v441
      %687 = vmatmul.f32.gmra.mxu0 %v456
      %v688 = vpop.f32.mrf.mxu0
      %v689 = vadd.f32 %v451, %v688
      %690 = vmatmul.f32.gmra.mxu0 %v459
      %v691 = vpop.f32.mrf.mxu0
      %v692 = vadd.f32 %v451, %v691
      %693 = vmatmul.f32.gmra.mxu0 %v462
      %v694 = vpop.f32.mrf.mxu0
      %v695 = vadd.f32 %v451, %v694
      %696 = vmatmul.f32.gmra.mxu0 %v465
      %v697 = vpop.f32.mrf.mxu0
      %v698 = vadd.f32 %v451, %v697
      %699 = vmatmul.f32.gmra.mxu0 %v468
      %v700 = vpop.f32.mrf.mxu0
      %v701 = vadd.f32 %v451, %v700
      %702 = vmatmul.f32.gmra.mxu0 %v471
      %v703 = vpop.f32.mrf.mxu0
      %v704 = vadd.f32 %v451, %v703
      %705 = vmatmul.f32.gmra.mxu0 %v474
      %v706 = vpop.f32.mrf.mxu0
      %v707 = vadd.f32 %v451, %v706
      %708 = vmatmul.f32.gmra.mxu0 %v477
      %v709 = vpop.f32.mrf.mxu0
      %v710 = vadd.f32 %v451, %v709
      %711 = vmatmul.f32.gmra.mxu0 %v480
      %v712 = vpop.f32.mrf.mxu0
      %v713 = vadd.f32 %v451, %v712
      %714 = vmatmul.f32.gmra.mxu0 %v483
      %v715 = vpop.f32.mrf.mxu0
      %v716 = vadd.f32 %v451, %v715
      %717 = vmatmul.f32.gmra.mxu0 %v486
      %v718 = vpop.f32.mrf.mxu0
      %v719 = vadd.f32 %v451, %v718
      %720 = vmatmul.f32.gmra.mxu0 %v489
      %v721 = vpop.f32.mrf.mxu0
      %v722 = vadd.f32 %v451, %v721
      %723 = vmatmul.f32.gmra.mxu0 %v492
      %v724 = vpop.f32.mrf.mxu0
      %v725 = vadd.f32 %v451, %v724
      %726 = vmatmul.f32.gmra.mxu0 %v495
      %v727 = vpop.f32.mrf.mxu0
      %v728 = vadd.f32 %v451, %v727
      %729 = vmatmul.f32.gmra.mxu0 %v498
      %v730 = vpop.f32.mrf.mxu0
      %v731 = vadd.f32 %v451, %v730
      %732 = vmatmul.f32.gmra.mxu0 %v501
      %v733 = vpop.f32.mrf.mxu0
      %v734 = vadd.f32 %v451, %v733
      %735 = vmatmul.f32.gmra.mxu0 %v504
      %v736 = vpop.f32.mrf.mxu0
      %v737 = vadd.f32 %v451, %v736
      %738 = vmatmul.f32.gmra.mxu0 %v507
      %v739 = vpop.f32.mrf.mxu0
      %v740 = vadd.f32 %v451, %v739
      %741 = vmatmul.f32.gmra.mxu0 %v510
      %v742 = vpop.f32.mrf.mxu0
      %v743 = vadd.f32 %v451, %v742
      %744 = vmatmul.f32.gmra.mxu0 %v513
      %v745 = vpop.f32.mrf.mxu0
      %v746 = vadd.f32 %v451, %v745
      %747 = vmatmul.f32.gmra.mxu0 %v516
      %v748 = vpop.f32.mrf.mxu0
      %v749 = vadd.f32 %v451, %v748
      %750 = vmatmul.f32.gmra.mxu0 %v519
      %v751 = vpop.f32.mrf.mxu0
      %v752 = vadd.f32 %v451, %v751
      %753 = vmatmul.f32.gmra.mxu0 %v522
      %v754 = vpop.f32.mrf.mxu0
      %v755 = vadd.f32 %v451, %v754
      %756 = vmatmul.f32.gmra.mxu0 %v525
      %v757 = vpop.f32.mrf.mxu0
      %v758 = vadd.f32 %v451, %v757
      %759 = vmatmul.f32.gmra.mxu0 %v528
      %v760 = vpop.f32.mrf.mxu0
      %v761 = vadd.f32 %v451, %v760
      %762 = vmatmul.f32.gmra.mxu0 %v531
      %v763 = vpop.f32.mrf.mxu0
      %v764 = vadd.f32 %v451, %v763
      %765 = vmatmul.f32.gmra.mxu0 %v534
      %v766 = vpop.f32.mrf.mxu0
      %v767 = vadd.f32 %v451, %v766
      %768 = vmatmul.f32.gmra.mxu0 %v537
      %v769 = vpop.f32.mrf.mxu0
      %v770 = vadd.f32 %v451, %v769
      %771 = vmatmul.f32.gmra.mxu0 %v540
      %v772 = vpop.f32.mrf.mxu0
      %v773 = vadd.f32 %v451, %v772
      %774 = vmatmul.f32.gmra.mxu0 %v543
      %v775 = vpop.f32.mrf.mxu0
      %v776 = vadd.f32 %v451, %v775
      %777 = vmatmul.f32.gmra.mxu0 %v546
      %v778 = vpop.f32.mrf.mxu0
      %v779 = vadd.f32 %v451, %v778
      %780 = vmatmul.f32.gmra.mxu0 %v549
      %v781 = vpop.f32.mrf.mxu0
      %v782 = vadd.f32 %v451, %v781
      %783 = vdwg.mxu0
      %v784 = vld [vmem:[%s401] sm:$0xff]
      %v785 = vld [vmem:[%s401 + $0x8] sm:$0xff]
      %v786 = vld [vmem:[%s401 + $0x10] sm:$0xff]
      %v787 = vld [vmem:[%s401 + $0x18] sm:$0xff]
      %v788 = vld [vmem:[%s401 + $0x20] sm:$0xff]
      %v789 = vld [vmem:[%s401 + $0x28] sm:$0xff]
      %v790 = vld [vmem:[%s401 + $0x30] sm:$0xff]
      %v791 = vld [vmem:[%s401 + $0x38] sm:$0xff]
      %v792 = vld [vmem:[%s401 + $0x40] sm:$0xff]
      %v793 = vld [vmem:[%s401 + $0x48] sm:$0xff]
      %v794 = vld [vmem:[%s401 + $0x50] sm:$0xff]
      %v795 = vld [vmem:[%s401 + $0x58] sm:$0xff]
      %v796 = vld [vmem:[%s401 + $0x60] sm:$0xff]
      %v797 = vld [vmem:[%s401 + $0x68] sm:$0xff]
      %v798 = vld [vmem:[%s401 + $0x70] sm:$0xff]
      %v799 = vld [vmem:[%s401 + $0x78] sm:$0xff]
      %v800 = vld [vmem:[%s401 + $0x80] sm:$0xff]
      %v801 = vld [vmem:[%s401 + $0x88] sm:$0xff]
      %v802 = vld [vmem:[%s401 + $0x90] sm:$0xff]
      %v803 = vld [vmem:[%s401 + $0x98] sm:$0xff]
      %v804 = vld [vmem:[%s401 + $0xa0] sm:$0xff]
      %v805 = vld [vmem:[%s401 + $0xa8] sm:$0xff]
      %v806 = vld [vmem:[%s401 + $0xb0] sm:$0xff]
      %v807 = vld [vmem:[%s401 + $0xb8] sm:$0xff]
      %v808 = vld [vmem:[%s401 + $0xc0] sm:$0xff]
      %v809 = vld [vmem:[%s401 + $0xc8] sm:$0xff]
      %v810 = vld [vmem:[%s401 + $0xd0] sm:$0xff]
      %v811 = vld [vmem:[%s401 + $0xd8] sm:$0xff]
      %v812 = vld [vmem:[%s401 + $0xe0] sm:$0xff]
      %v813 = vld [vmem:[%s401 + $0xe8] sm:$0xff]
      %v814 = vld [vmem:[%s401 + $0xf0] sm:$0xff]
      %v815 = vld [vmem:[%s401 + $0xf8] sm:$0xff]
      %v816 = vld [vmem:[%s3] sm:$0xff]
      %v817 = vld [vmem:[%s3 + $0x8] sm:$0xff]
      %v818 = vld [vmem:[%s3 + $0x10] sm:$0xff]
      %v819 = vld [vmem:[%s3 + $0x18] sm:$0xff]
      %v820 = vld [vmem:[%s3 + $0x20] sm:$0xff]
      %v821 = vld [vmem:[%s3 + $0x28] sm:$0xff]
      %v822 = vld [vmem:[%s3 + $0x30] sm:$0xf]
      %v823 = vld [vmem:[%s3 + $0x38] sm:$0xf]
      %v824 = vld [vmem:[%s7] sm:$0x3]
      %v826 = vperm.slane %v824, 0
      %v827 = vperm.slane %v824, 1
      %v831 = vsel %vm454, %v784, 0
      %v834 = vsel %vm454, %v785, 0
      %v837 = vsel %vm454, %v786, 0
      %v840 = vsel %vm454, %v787, 0
      %v843 = vsel %vm454, %v788, 0
      %v846 = vsel %vm454, %v789, 0
      %v849 = vsel %vm454, %v790, 0
      %v852 = vsel %vm454, %v791, 0
      %v855 = vsel %vm454, %v792, 0
      %v858 = vsel %vm454, %v793, 0
      %v861 = vsel %vm454, %v794, 0
      %v864 = vsel %vm454, %v795, 0
      %v867 = vsel %vm454, %v796, 0
      %v870 = vsel %vm454, %v797, 0
      %v873 = vsel %vm454, %v798, 0
      %v876 = vsel %vm454, %v799, 0
      %v879 = vsel %vm454, %v800, 0
      %v882 = vsel %vm454, %v801, 0
      %v885 = vsel %vm454, %v802, 0
      %v888 = vsel %vm454, %v803, 0
      %v891 = vsel %vm454, %v804, 0
      %v894 = vsel %vm454, %v805, 0
      %v897 = vsel %vm454, %v806, 0
      %v900 = vsel %vm454, %v807, 0
      %v903 = vsel %vm454, %v808, 0
      %v906 = vsel %vm454, %v809, 0
      %v909 = vsel %vm454, %v810, 0
      %v912 = vsel %vm454, %v811, 0
      %v915 = vsel %vm454, %v812, 0
      %v918 = vsel %vm454, %v813, 0
      %v921 = vsel %vm454, %v814, 0
      %v924 = vsel %vm454, %v815, 0
      %v927 = vsel %vm551, %v822, 0
      %v930 = vsel %vm551, %v823, 0
      %932 = vmatpush.msra.mxu0 0.0
      %933 = vmatpush.msra.mxu0 0.0
      %934 = vmatpush.msra.mxu0 0.0
      %935 = vmatpush.msra.mxu0 0.0
      %936 = vmatpush.msra.mxu0 0.0
      %937 = vmatpush.msra.mxu0 0.0
      %938 = vmatpush.msra.mxu0 0.0
      %939 = vmatpush.msra.mxu0 0.0
      %940 = vmatpush.msra.mxu0 0.0
      %941 = vmatpush.msra.mxu0 0.0
      %942 = vmatpush.msra.mxu0 0.0
      %943 = vmatpush.msra.mxu0 0.0
      %944 = vmatpush.msra.mxu0 %v927
      %945 = vmatpush.msra.mxu0 %v820
      %946 = vmatpush.msra.mxu0 %v818
      %947 = vmatpush.msra.mxu0 %v816
      %948 = vmatmul.f32.gmra.mxu0 %v831
      %v949 = vpop.f32.mrf.mxu0
      %v950 = vadd.f32 %v826, %v949
      %951 = vmatmul.f32.gmra.mxu0 %v834
      %v952 = vpop.f32.mrf.mxu0
      %v953 = vadd.f32 %v826, %v952
      %954 = vmatmul.f32.gmra.mxu0 %v837
      %v955 = vpop.f32.mrf.mxu0
      %v956 = vadd.f32 %v826, %v955
      %957 = vmatmul.f32.gmra.mxu0 %v840
      %v958 = vpop.f32.mrf.mxu0
      %v959 = vadd.f32 %v826, %v958
      %960 = vmatmul.f32.gmra.mxu0 %v843
      %v961 = vpop.f32.mrf.mxu0
      %v962 = vadd.f32 %v826, %v961
      %963 = vmatmul.f32.gmra.mxu0 %v846
      %v964 = vpop.f32.mrf.mxu0
      %v965 = vadd.f32 %v826, %v964
      %966 = vmatmul.f32.gmra.mxu0 %v849
      %v967 = vpop.f32.mrf.mxu0
      %v968 = vadd.f32 %v826, %v967
      %969 = vmatmul.f32.gmra.mxu0 %v852
      %v970 = vpop.f32.mrf.mxu0
      %v971 = vadd.f32 %v826, %v970
      %972 = vmatmul.f32.gmra.mxu0 %v855
      %v973 = vpop.f32.mrf.mxu0
      %v974 = vadd.f32 %v826, %v973
      %975 = vmatmul.f32.gmra.mxu0 %v858
      %v976 = vpop.f32.mrf.mxu0
      %v977 = vadd.f32 %v826, %v976
      %978 = vmatmul.f32.gmra.mxu0 %v861
      %v979 = vpop.f32.mrf.mxu0
      %v980 = vadd.f32 %v826, %v979
      %981 = vmatmul.f32.gmra.mxu0 %v864
      %v982 = vpop.f32.mrf.mxu0
      %v983 = vadd.f32 %v826, %v982
      %984 = vmatmul.f32.gmra.mxu0 %v867
      %v985 = vpop.f32.mrf.mxu0
      %v986 = vadd.f32 %v826, %v985
      %987 = vmatmul.f32.gmra.mxu0 %v870
      %v988 = vpop.f32.mrf.mxu0
      %v989 = vadd.f32 %v826, %v988
      %990 = vmatmul.f32.gmra.mxu0 %v873
      %v991 = vpop.f32.mrf.mxu0
      %v992 = vadd.f32 %v826, %v991
      %993 = vmatmul.f32.gmra.mxu0 %v876
      %v994 = vpop.f32.mrf.mxu0
      %v995 = vadd.f32 %v826, %v994
      %996 = vmatmul.f32.gmra.mxu0 %v879
      %v997 = vpop.f32.mrf.mxu0
      %v998 = vadd.f32 %v826, %v997
      %999 = vmatmul.f32.gmra.mxu0 %v882
      %v1000 = vpop.f32.mrf.mxu0
      %v1001 = vadd.f32 %v826, %v1000
      %1002 = vmatmul.f32.gmra.mxu0 %v885
      %v1003 = vpop.f32.mrf.mxu0
      %v1004 = vadd.f32 %v826, %v1003
      %1005 = vmatmul.f32.gmra.mxu0 %v888
      %v1006 = vpop.f32.mrf.mxu0
      %v1007 = vadd.f32 %v826, %v1006
      %1008 = vmatmul.f32.gmra.mxu0 %v891
      %v1009 = vpop.f32.mrf.mxu0
      %v1010 = vadd.f32 %v826, %v1009
      %1011 = vmatmul.f32.gmra.mxu0 %v894
      %v1012 = vpop.f32.mrf.mxu0
      %v1013 = vadd.f32 %v826, %v1012
      %1014 = vmatmul.f32.gmra.mxu0 %v897
      %v1015 = vpop.f32.mrf.mxu0
      %v1016 = vadd.f32 %v826, %v1015
      %1017 = vmatmul.f32.gmra.mxu0 %v900
      %v1018 = vpop.f32.mrf.mxu0
      %v1019 = vadd.f32 %v826, %v1018
      %1020 = vmatmul.f32.gmra.mxu0 %v903
      %v1021 = vpop.f32.mrf.mxu0
      %v1022 = vadd.f32 %v826, %v1021
      %1023 = vmatmul.f32.gmra.mxu0 %v906
      %v1024 = vpop.f32.mrf.mxu0
      %v1025 = vadd.f32 %v826, %v1024
      %1026 = vmatmul.f32.gmra.mxu0 %v909
      %v1027 = vpop.f32.mrf.mxu0
      %v1028 = vadd.f32 %v826, %v1027
      %1029 = vmatmul.f32.gmra.mxu0 %v912
      %v1030 = vpop.f32.mrf.mxu0
      %v1031 = vadd.f32 %v826, %v1030
      %1032 = vmatmul.f32.gmra.mxu0 %v915
      %v1033 = vpop.f32.mrf.mxu0
      %v1034 = vadd.f32 %v826, %v1033
      %1035 = vmatmul.f32.gmra.mxu0 %v918
      %v1036 = vpop.f32.mrf.mxu0
      %v1037 = vadd.f32 %v826, %v1036
      %1038 = vmatmul.f32.gmra.mxu0 %v921
      %v1039 = vpop.f32.mrf.mxu0
      %v1040 = vadd.f32 %v826, %v1039
      %1041 = vmatmul.f32.gmra.mxu0 %v924
      %v1042 = vpop.f32.mrf.mxu0
      %v1043 = vadd.f32 %v826, %v1042
      %1044 = vdwg.mxu0
      %1045 = vmatpush.msra.mxu0 0.0
      %1046 = vmatpush.msra.mxu0 0.0
      %1047 = vmatpush.msra.mxu0 0.0
      %1048 = vmatpush.msra.mxu0 0.0
      %1049 = vmatpush.msra.mxu0 0.0
      %1050 = vmatpush.msra.mxu0 0.0
      %1051 = vmatpush.msra.mxu0 0.0
      %1052 = vmatpush.msra.mxu0 0.0
      %1053 = vmatpush.msra.mxu0 0.0
      %1054 = vmatpush.msra.mxu0 0.0
      %1055 = vmatpush.msra.mxu0 0.0
      %1056 = vmatpush.msra.mxu0 0.0
      %1057 = vmatpush.msra.mxu0 %v930
      %1058 = vmatpush.msra.mxu0 %v821
      %1059 = vmatpush.msra.mxu0 %v819
      %1060 = vmatpush.msra.mxu0 %v817
      %1061 = vmatmul.f32.gmra.mxu0 %v831
      %v1062 = vpop.f32.mrf.mxu0
      %v1063 = vadd.f32 %v827, %v1062
      %1064 = vmatmul.f32.gmra.mxu0 %v834
      %v1065 = vpop.f32.mrf.mxu0
      %v1066 = vadd.f32 %v827, %v1065
      %1067 = vmatmul.f32.gmra.mxu0 %v837
      %v1068 = vpop.f32.mrf.mxu0
      %v1069 = vadd.f32 %v827, %v1068
      %1070 = vmatmul.f32.gmra.mxu0 %v840
      %v1071 = vpop.f32.mrf.mxu0
      %v1072 = vadd.f32 %v827, %v1071
      %1073 = vmatmul.f32.gmra.mxu0 %v843
      %v1074 = vpop.f32.mrf.mxu0
      %v1075 = vadd.f32 %v827, %v1074
      %1076 = vmatmul.f32.gmra.mxu0 %v846
      %v1077 = vpop.f32.mrf.mxu0
      %v1078 = vadd.f32 %v827, %v1077
      %1079 = vmatmul.f32.gmra.mxu0 %v849
      %v1080 = vpop.f32.mrf.mxu0
      %v1081 = vadd.f32 %v827, %v1080
      %1082 = vmatmul.f32.gmra.mxu0 %v852
      %v1083 = vpop.f32.mrf.mxu0
      %v1084 = vadd.f32 %v827, %v1083
      %1085 = vmatmul.f32.gmra.mxu0 %v855
      %v1086 = vpop.f32.mrf.mxu0
      %v1087 = vadd.f32 %v827, %v1086
      %1088 = vmatmul.f32.gmra.mxu0 %v858
      %v1089 = vpop.f32.mrf.mxu0
      %v1090 = vadd.f32 %v827, %v1089
      %1091 = vmatmul.f32.gmra.mxu0 %v861
      %v1092 = vpop.f32.mrf.mxu0
      %v1093 = vadd.f32 %v827, %v1092
      %1094 = vmatmul.f32.gmra.mxu0 %v864
      %v1095 = vpop.f32.mrf.mxu0
      %v1096 = vadd.f32 %v827, %v1095
      %1097 = vmatmul.f32.gmra.mxu0 %v867
      %v1098 = vpop.f32.mrf.mxu0
      %v1099 = vadd.f32 %v827, %v1098
      %1100 = vmatmul.f32.gmra.mxu0 %v870
      %v1101 = vpop.f32.mrf.mxu0
      %v1102 = vadd.f32 %v827, %v1101
      %1103 = vmatmul.f32.gmra.mxu0 %v873
      %v1104 = vpop.f32.mrf.mxu0
      %v1105 = vadd.f32 %v827, %v1104
      %1106 = vmatmul.f32.gmra.mxu0 %v876
      %v1107 = vpop.f32.mrf.mxu0
      %v1108 = vadd.f32 %v827, %v1107
      %1109 = vmatmul.f32.gmra.mxu0 %v879
      %v1110 = vpop.f32.mrf.mxu0
      %v1111 = vadd.f32 %v827, %v1110
      %1112 = vmatmul.f32.gmra.mxu0 %v882
      %v1113 = vpop.f32.mrf.mxu0
      %v1114 = vadd.f32 %v827, %v1113
      %1115 = vmatmul.f32.gmra.mxu0 %v885
      %v1116 = vpop.f32.mrf.mxu0
      %v1117 = vadd.f32 %v827, %v1116
      %1118 = vmatmul.f32.gmra.mxu0 %v888
      %v1119 = vpop.f32.mrf.mxu0
      %v1120 = vadd.f32 %v827, %v1119
      %1121 = vmatmul.f32.gmra.mxu0 %v891
      %v1122 = vpop.f32.mrf.mxu0
      %v1123 = vadd.f32 %v827, %v1122
      %1124 = vmatmul.f32.gmra.mxu0 %v894
      %v1125 = vpop.f32.mrf.mxu0
      %v1126 = vadd.f32 %v827, %v1125
      %1127 = vmatmul.f32.gmra.mxu0 %v897
      %v1128 = vpop.f32.mrf.mxu0
      %v1129 = vadd.f32 %v827, %v1128
      %1130 = vmatmul.f32.gmra.mxu0 %v900
      %v1131 = vpop.f32.mrf.mxu0
      %v1132 = vadd.f32 %v827, %v1131
      %1133 = vmatmul.f32.gmra.mxu0 %v903
      %v1134 = vpop.f32.mrf.mxu0
      %v1135 = vadd.f32 %v827, %v1134
      %1136 = vmatmul.f32.gmra.mxu0 %v906
      %v1137 = vpop.f32.mrf.mxu0
      %v1138 = vadd.f32 %v827, %v1137
      %1139 = vmatmul.f32.gmra.mxu0 %v909
      %v1140 = vpop.f32.mrf.mxu0
      %v1141 = vadd.f32 %v827, %v1140
      %1142 = vmatmul.f32.gmra.mxu0 %v912
      %v1143 = vpop.f32.mrf.mxu0
      %v1144 = vadd.f32 %v827, %v1143
      %1145 = vmatmul.f32.gmra.mxu0 %v915
      %v1146 = vpop.f32.mrf.mxu0
      %v1147 = vadd.f32 %v827, %v1146
      %1148 = vmatmul.f32.gmra.mxu0 %v918
      %v1149 = vpop.f32.mrf.mxu0
      %v1150 = vadd.f32 %v827, %v1149
      %1151 = vmatmul.f32.gmra.mxu0 %v921
      %v1152 = vpop.f32.mrf.mxu0
      %v1153 = vadd.f32 %v827, %v1152
      %1154 = vmatmul.f32.gmra.mxu0 %v924
      %v1155 = vpop.f32.mrf.mxu0
      %v1156 = vadd.f32 %v827, %v1155
      %1157 = vdwg.mxu0
      %1158 = vst [vmem:[#allocation2] sm:$0xff] 0
      %1159 = vst [vmem:[#allocation2 + $0x8] sm:$0xff] 0
      %1160 = vst [vmem:[#allocation2 + $0x10] sm:$0xff] 0
      %1161 = vst [vmem:[#allocation2 + $0x18] sm:$0xff] 0
      %1162 = vst [vmem:[#allocation2 + $0x20] sm:$0xff] 0
      %1163 = vst [vmem:[#allocation2 + $0x28] sm:$0xff] 0
      %v1164 = vpack.c.bf16 %v689, %v576
      %v1165 = vpack.c.bf16 %v692, %v579
      %v1166 = vpack.c.bf16 %v695, %v582
      %v1167 = vpack.c.bf16 %v698, %v585
      %v1168 = vpack.c.bf16 %v701, %v588
      %v1169 = vpack.c.bf16 %v704, %v591
      %v1170 = vpack.c.bf16 %v707, %v594
      %v1171 = vpack.c.bf16 %v710, %v597
      %v1172 = vpack.c.bf16 %v713, %v600
      %v1173 = vpack.c.bf16 %v716, %v603
      %v1174 = vpack.c.bf16 %v719, %v606
      %v1175 = vpack.c.bf16 %v722, %v609
      %v1176 = vpack.c.bf16 %v725, %v612
      %v1177 = vpack.c.bf16 %v728, %v615
      %v1178 = vpack.c.bf16 %v731, %v618
      %v1179 = vpack.c.bf16 %v734, %v621
      %v1180 = vpack.c.bf16 %v737, %v624
      %v1181 = vpack.c.bf16 %v740, %v627
      %v1182 = vpack.c.bf16 %v743, %v630
      %v1183 = vpack.c.bf16 %v746, %v633
      %v1184 = vpack.c.bf16 %v749, %v636
      %v1185 = vpack.c.bf16 %v752, %v639
      %v1186 = vpack.c.bf16 %v755, %v642
      %v1187 = vpack.c.bf16 %v758, %v645
      %v1188 = vpack.c.bf16 %v761, %v648
      %v1189 = vpack.c.bf16 %v764, %v651
      %v1190 = vpack.c.bf16 %v767, %v654
      %v1191 = vpack.c.bf16 %v770, %v657
      %v1192 = vpack.c.bf16 %v773, %v660
      %v1193 = vpack.c.bf16 %v776, %v663
      %v1194 = vpack.c.bf16 %v779, %v666
      %v1195 = vpack.c.bf16 %v782, %v669
      %1196 = vst [vmem:[#allocation2 + $0x30] sm:$0xff] %v1164
      %1197 = vst [vmem:[#allocation2 + $0x38] sm:$0xff] %v1165
      %1198 = vst [vmem:[#allocation2 + $0x40] sm:$0xff] %v1166
      %1199 = vst [vmem:[#allocation2 + $0x48] sm:$0xff] %v1167
      %1200 = vst [vmem:[#allocation2 + $0x50] sm:$0xff] %v1168
      %1201 = vst [vmem:[#allocation2 + $0x58] sm:$0xff] %v1169
      %1202 = vst [vmem:[#allocation2 + $0x60] sm:$0xff] %v1170
      %1203 = vst [vmem:[#allocation2 + $0x68] sm:$0xff] %v1171
      %1204 = vst [vmem:[#allocation2 + $0x70] sm:$0xff] %v1172
      %1205 = vst [vmem:[#allocation2 + $0x78] sm:$0xff] %v1173
      %1206 = vst [vmem:[#allocation2 + $0x80] sm:$0xff] %v1174
      %1207 = vst [vmem:[#allocation2 + $0x88] sm:$0xff] %v1175
      %1208 = vst [vmem:[#allocation2 + $0x90] sm:$0xff] %v1176
      %1209 = vst [vmem:[#allocation2 + $0x98] sm:$0xff] %v1177
      %1210 = vst [vmem:[#allocation2 + $0xa0] sm:$0xff] %v1178
      %1211 = vst [vmem:[#allocation2 + $0xa8] sm:$0xff] %v1179
      %1212 = vst [vmem:[#allocation2 + $0xb0] sm:$0xff] %v1180
      %1213 = vst [vmem:[#allocation2 + $0xb8] sm:$0xff] %v1181
      %1214 = vst [vmem:[#allocation2 + $0xc0] sm:$0xff] %v1182
      %1215 = vst [vmem:[#allocation2 + $0xc8] sm:$0xff] %v1183
      %1216 = vst [vmem:[#allocation2 + $0xd0] sm:$0xff] %v1184
      %1217 = vst [vmem:[#allocation2 + $0xd8] sm:$0xff] %v1185
      %1218 = vst [vmem:[#allocation2 + $0xe0] sm:$0xff] %v1186
      %1219 = vst [vmem:[#allocation2 + $0xe8] sm:$0xff] %v1187
      %1220 = vst [vmem:[#allocation2 + $0xf0] sm:$0xff] %v1188
      %1221 = vst [vmem:[#allocation2 + $0xf8] sm:$0xff] %v1189
      %1222 = vst [vmem:[#allocation2 + $0x100] sm:$0xff] %v1190
      %1223 = vst [vmem:[#allocation2 + $0x108] sm:$0xff] %v1191
      %1224 = vst [vmem:[#allocation2 + $0x110] sm:$0xff] %v1192
      %1225 = vst [vmem:[#allocation2 + $0x118] sm:$0xff] %v1193
      %1226 = vst [vmem:[#allocation2 + $0x120] sm:$0xff] %v1194
      %1227 = vst [vmem:[#allocation2 + $0x128] sm:$0xff] %v1195
      %1228 = vst [vmem:[#allocation2 + $0x130] sm:$0xff] 0
      %1229 = vst [vmem:[#allocation2 + $0x138] sm:$0xff] 0
      %1230 = vst [vmem:[#allocation2 + $0x140] sm:$0xff] 0
      %1231 = vst [vmem:[#allocation2 + $0x148] sm:$0xff] 0
      %1232 = vst [vmem:[#allocation2 + $0x150] sm:$0xff] 0
      %1233 = vst [vmem:[#allocation2 + $0x158] sm:$0xff] 0
      %1234 = vst [vmem:[#allocation3] sm:$0xff] 0
      %1235 = vst [vmem:[#allocation3 + $0x8] sm:$0xff] 0
      %1236 = vst [vmem:[#allocation3 + $0x10] sm:$0xff] 0
      %1237 = vst [vmem:[#allocation3 + $0x18] sm:$0xff] 0
      %1238 = vst [vmem:[#allocation3 + $0x20] sm:$0xff] 0
      %1239 = vst [vmem:[#allocation3 + $0x28] sm:$0xff] 0
      %v1240 = vpack.c.bf16 %v1063, %v950
      %v1241 = vpack.c.bf16 %v1066, %v953
      %v1242 = vpack.c.bf16 %v1069, %v956
      %v1243 = vpack.c.bf16 %v1072, %v959
      %v1244 = vpack.c.bf16 %v1075, %v962
      %v1245 = vpack.c.bf16 %v1078, %v965
      %v1246 = vpack.c.bf16 %v1081, %v968
      %v1247 = vpack.c.bf16 %v1084, %v971
      %v1248 = vpack.c.bf16 %v1087, %v974
      %v1249 = vpack.c.bf16 %v1090, %v977
      %v1250 = vpack.c.bf16 %v1093, %v980
      %v1251 = vpack.c.bf16 %v1096, %v983
      %v1252 = vpack.c.bf16 %v1099, %v986
      %v1253 = vpack.c.bf16 %v1102, %v989
      %v1254 = vpack.c.bf16 %v1105, %v992
      %v1255 = vpack.c.bf16 %v1108, %v995
      %v1256 = vpack.c.bf16 %v1111, %v998
      %v1257 = vpack.c.bf16 %v1114, %v1001
      %v1258 = vpack.c.bf16 %v1117, %v1004
      %v1259 = vpack.c.bf16 %v1120, %v1007
      %v1260 = vpack.c.bf16 %v1123, %v1010
      %v1261 = vpack.c.bf16 %v1126, %v1013
      %v1262 = vpack.c.bf16 %v1129, %v1016
      %v1263 = vpack.c.bf16 %v1132, %v1019
      %v1264 = vpack.c.bf16 %v1135, %v1022
      %v1265 = vpack.c.bf16 %v1138, %v1025
      %v1266 = vpack.c.bf16 %v1141, %v1028
      %v1267 = vpack.c.bf16 %v1144, %v1031
      %v1268 = vpack.c.bf16 %v1147, %v1034
      %v1269 = vpack.c.bf16 %v1150, %v1037
      %v1270 = vpack.c.bf16 %v1153, %v1040
      %v1271 = vpack.c.bf16 %v1156, %v1043
      %1272 = vst [vmem:[#allocation3 + $0x30] sm:$0xff] %v1240
      %1273 = vst [vmem:[#allocation3 + $0x38] sm:$0xff] %v1241
      %1274 = vst [vmem:[#allocation3 + $0x40] sm:$0xff] %v1242
      %1275 = vst [vmem:[#allocation3 + $0x48] sm:$0xff] %v1243
      %1276 = vst [vmem:[#allocation3 + $0x50] sm:$0xff] %v1244
      %1277 = vst [vmem:[#allocation3 + $0x58] sm:$0xff] %v1245
      %1278 = vst [vmem:[#allocation3 + $0x60] sm:$0xff] %v1246
      %1279 = vst [vmem:[#allocation3 + $0x68] sm:$0xff] %v1247
      %1280 = vst [vmem:[#allocation3 + $0x70] sm:$0xff] %v1248
      %1281 = vst [vmem:[#allocation3 + $0x78] sm:$0xff] %v1249
      %1282 = vst [vmem:[#allocation3 + $0x80] sm:$0xff] %v1250
      %1283 = vst [vmem:[#allocation3 + $0x88] sm:$0xff] %v1251
      %1284 = vst [vmem:[#allocation3 + $0x90] sm:$0xff] %v1252
      %1285 = vst [vmem:[#allocation3 + $0x98] sm:$0xff] %v1253
      %1286 = vst [vmem:[#allocation3 + $0xa0] sm:$0xff] %v1254
      %1287 = vst [vmem:[#allocation3 + $0xa8] sm:$0xff] %v1255
      %1288 = vst [vmem:[#allocation3 + $0xb0] sm:$0xff] %v1256
      %1289 = vst [vmem:[#allocation3 + $0xb8] sm:$0xff] %v1257
      %1290 = vst [vmem:[#allocation3 + $0xc0] sm:$0xff] %v1258
      %1291 = vst [vmem:[#allocation3 + $0xc8] sm:$0xff] %v1259
      %1292 = vst [vmem:[#allocation3 + $0xd0] sm:$0xff] %v1260
      %1293 = vst [vmem:[#allocation3 + $0xd8] sm:$0xff] %v1261
      %1294 = vst [vmem:[#allocation3 + $0xe0] sm:$0xff] %v1262
      %1295 = vst [vmem:[#allocation3 + $0xe8] sm:$0xff] %v1263
      %1296 = vst [vmem:[#allocation3 + $0xf0] sm:$0xff] %v1264
      %1297 = vst [vmem:[#allocation3 + $0xf8] sm:$0xff] %v1265
      %1298 = vst [vmem:[#allocation3 + $0x100] sm:$0xff] %v1266
      %1299 = vst [vmem:[#allocation3 + $0x108] sm:$0xff] %v1267
      %1300 = vst [vmem:[#allocation3 + $0x110] sm:$0xff] %v1268
      %1301 = vst [vmem:[#allocation3 + $0x118] sm:$0xff] %v1269
      %1302 = vst [vmem:[#allocation3 + $0x120] sm:$0xff] %v1270
      %1303 = vst [vmem:[#allocation3 + $0x128] sm:$0xff] %v1271
      %1304 = vst [vmem:[#allocation3 + $0x130] sm:$0xff] 0
      %1305 = vst [vmem:[#allocation3 + $0x138] sm:$0xff] 0
      %1306 = vst [vmem:[#allocation3 + $0x140] sm:$0xff] 0
      %1307 = vst [vmem:[#allocation3 + $0x148] sm:$0xff] 0
      %1308 = vst [vmem:[#allocation3 + $0x150] sm:$0xff] 0
      %1309 = vst [vmem:[#allocation3 + $0x158] sm:$0xff] 0
      %v1310 = vld [vmem:[%s4] sm:$0xf]
      %v1311 = vld [vmem:[#allocation2] sm:$0xff]
      %v1312 = vld [vmem:[#allocation2 + $0x8] sm:$0xff]
      %v1313 = vld [vmem:[#allocation2 + $0x10] sm:$0xff]
      %v1314 = vld [vmem:[#allocation2 + $0x18] sm:$0xff]
      %v1315 = vld [vmem:[#allocation2 + $0x20] sm:$0xff]
      %v1316 = vld [vmem:[#allocation2 + $0x28] sm:$0xff]
      %v1317 = vld [vmem:[#allocation2 + $0x30] sm:$0xff]
      %v1318 = vld [vmem:[#allocation2 + $0x38] sm:$0xff]
      %v1319 = vld [vmem:[#allocation2 + $0x40] sm:$0xff]
      %v1320 = vld [vmem:[#allocation2 + $0x48] sm:$0xff]
      %v1321 = vld [vmem:[#allocation2 + $0x50] sm:$0xff]
      %v1322 = vld [vmem:[#allocation2 + $0x58] sm:$0xff]
      %v1323 = vld [vmem:[#allocation2 + $0x60] sm:$0xff]
      %v1324 = vld [vmem:[#allocation2 + $0x68] sm:$0xff]
      %v1325 = vld [vmem:[#allocation2 + $0x70] sm:$0xff]
      %v1326 = vld [vmem:[#allocation2 + $0x78] sm:$0xff]
      %v1327 = vld [vmem:[#allocation2 + $0x80] sm:$0xff]
      %v1328 = vld [vmem:[#allocation2 + $0x88] sm:$0xff]
      %v1329 = vld [vmem:[#allocation2 + $0x90] sm:$0xff]
      %v1330 = vld [vmem:[#allocation2 + $0x98] sm:$0xff]
      %v1331 = vld [vmem:[#allocation2 + $0xa0] sm:$0xff]
      %v1332 = vld [vmem:[#allocation2 + $0xa8] sm:$0xff]
      %v1333 = vld [vmem:[#allocation2 + $0xb0] sm:$0xff]
      %v1334 = vld [vmem:[#allocation2 + $0xb8] sm:$0xff]
      %v1335 = vld [vmem:[#allocation2 + $0xc0] sm:$0xff]
      %v1336 = vld [vmem:[#allocation2 + $0xc8] sm:$0xff]
      %v1337 = vld [vmem:[#allocation2 + $0xd0] sm:$0xff]
      %v1338 = vld [vmem:[#allocation2 + $0xd8] sm:$0xff]
      %v1339 = vld [vmem:[#allocation2 + $0xe0] sm:$0xff]
      %v1340 = vld [vmem:[#allocation2 + $0xe8] sm:$0xff]
      %v1341 = vld [vmem:[#allocation2 + $0xf0] sm:$0xff]
      %v1342 = vld [vmem:[#allocation2 + $0xf8] sm:$0xff]
      %s1343 = scalar_lea.vmem %s4, 4
      %v1344 = vld [vmem:[%s1343] sm:$0xf]
      %v1345 = vld [vmem:[#allocation2 + $0x100] sm:$0xff]
      %v1346 = vld [vmem:[#allocation2 + $0x108] sm:$0xff]
      %1348 = vst [vmem:[#allocation1] ss:$4 sm:$0xff] %v1344
      %v1349 = vld.sshfl [vmem:[#allocation1] sm:$0xff pattern:$0x73625140]
      %v1350 = vld.sshfl [vmem:[#allocation1 + $0x8] sm:$0xff pattern:$0x73625140]
      %v1385 = vunpack.c.l.b16 %v1313
      %v1386 = vunpack.c.h.b16 %v1313
      %v1387 = vunpack.c.l.b16 %v1314
      %v1388 = vunpack.c.h.b16 %v1314
      %v1389 = vunpack.c.l.b16 %v1315
      %v1390 = vunpack.c.h.b16 %v1315
      %v1391 = vunpack.c.l.b16 %v1316
      %v1392 = vunpack.c.h.b16 %v1316
      %v1393 = vunpack.c.l.b16 %v1317
      %v1394 = vunpack.c.h.b16 %v1317
      %v1395 = vunpack.c.l.b16 %v1318
      %v1396 = vunpack.c.h.b16 %v1318
      %v1397 = vunpack.c.l.b16 %v1319
      %v1398 = vunpack.c.h.b16 %v1319
      %v1399 = vunpack.c.l.b16 %v1320
      %v1400 = vunpack.c.h.b16 %v1320
      %v1401 = vunpack.c.l.b16 %v1321
      %v1402 = vunpack.c.h.b16 %v1321
      %v1403 = vunpack.c.l.b16 %v1322
      %v1404 = vunpack.c.h.b16 %v1322
      %v1405 = vunpack.c.l.b16 %v1323
      %v1406 = vunpack.c.h.b16 %v1323
      %v1407 = vunpack.c.l.b16 %v1324
      %v1408 = vunpack.c.h.b16 %v1324
      %v1409 = vunpack.c.l.b16 %v1325
      %v1410 = vunpack.c.h.b16 %v1325
      %v1411 = vunpack.c.l.b16 %v1326
      %v1412 = vunpack.c.h.b16 %v1326
      %v1413 = vunpack.c.l.b16 %v1327
      %v1414 = vunpack.c.h.b16 %v1327
      %v1415 = vunpack.c.l.b16 %v1328
      %v1416 = vunpack.c.h.b16 %v1328
      %v1417 = vunpack.c.l.b16 %v1329
      %v1418 = vunpack.c.h.b16 %v1329
      %v1419 = vunpack.c.l.b16 %v1330
      %v1420 = vunpack.c.h.b16 %v1330
      %v1421 = vunpack.c.l.b16 %v1331
      %v1422 = vunpack.c.h.b16 %v1331
      %v1423 = vunpack.c.l.b16 %v1332
      %v1424 = vunpack.c.h.b16 %v1332
      %v1425 = vunpack.c.l.b16 %v1333
      %v1426 = vunpack.c.h.b16 %v1333
      %v1427 = vunpack.c.l.b16 %v1334
      %v1428 = vunpack.c.h.b16 %v1334
      %v1429 = vunpack.c.l.b16 %v1335
      %v1430 = vunpack.c.h.b16 %v1335
      %v1431 = vunpack.c.l.b16 %v1336
      %v1432 = vunpack.c.h.b16 %v1336
      %v1433 = vunpack.c.l.b16 %v1337
      %v1434 = vunpack.c.h.b16 %v1337
      %v1435 = vunpack.c.l.b16 %v1338
      %v1436 = vunpack.c.h.b16 %v1338
      %v1437 = vunpack.c.l.b16 %v1339
      %v1438 = vunpack.c.h.b16 %v1339
      %v1439 = vunpack.c.l.b16 %v1340
      %v1440 = vunpack.c.h.b16 %v1340
      %v1441 = vunpack.c.l.b16 %v1341
      %v1442 = vunpack.c.h.b16 %v1341
      %v1443 = vunpack.c.l.b16 %v1342
      %v1444 = vunpack.c.h.b16 %v1342
      %v1445 = vunpack.c.l.b16 %v1345
      %v1446 = vunpack.c.h.b16 %v1345
      %v1447 = vunpack.c.l.b16 %v1346
      %v1448 = vunpack.c.h.b16 %v1346
      %v1449 = vpack.c.b16 %v1387, %v1385
      %v1450 = vpack.c.b16 %v1388, %v1386
      %v1451 = vpack.c.b16 %v1391, %v1389
      %v1452 = vpack.c.b16 %v1392, %v1390
      %v1453 = vpack.c.b16 %v1395, %v1393
      %v1454 = vpack.c.b16 %v1396, %v1394
      %v1455 = vpack.c.b16 %v1399, %v1397
      %v1456 = vpack.c.b16 %v1400, %v1398
      %v1457 = vpack.c.b16 %v1403, %v1401
      %v1458 = vpack.c.b16 %v1404, %v1402
      %v1459 = vpack.c.b16 %v1407, %v1405
      %v1460 = vpack.c.b16 %v1408, %v1406
      %v1461 = vpack.c.b16 %v1411, %v1409
      %v1462 = vpack.c.b16 %v1412, %v1410
      %v1463 = vpack.c.b16 %v1415, %v1413
      %v1464 = vpack.c.b16 %v1416, %v1414
      %v1465 = vpack.c.b16 %v1419, %v1417
      %v1466 = vpack.c.b16 %v1420, %v1418
      %v1467 = vpack.c.b16 %v1423, %v1421
      %v1468 = vpack.c.b16 %v1424, %v1422
      %v1469 = vpack.c.b16 %v1427, %v1425
      %v1470 = vpack.c.b16 %v1428, %v1426
      %v1471 = vpack.c.b16 %v1431, %v1429
      %v1472 = vpack.c.b16 %v1432, %v1430
      %v1473 = vpack.c.b16 %v1435, %v1433
      %v1474 = vpack.c.b16 %v1436, %v1434
      %v1475 = vpack.c.b16 %v1439, %v1437
      %v1476 = vpack.c.b16 %v1440, %v1438
      %v1477 = vpack.c.b16 %v1443, %v1441
      %v1478 = vpack.c.b16 %v1444, %v1442
      %v1479 = vpack.c.b16 %v1447, %v1445
      %v1480 = vpack.c.b16 %v1448, %v1446
      %1513 = vmatpush.bf16.xpose.msra.mxu0 %v1463
      %1514 = vmatpush.bf16.xpose.msra.mxu0 %v1461
      %1515 = vmatpush.bf16.xpose.msra.mxu0 %v1459
      %1516 = vmatpush.bf16.xpose.msra.mxu0 %v1457
      %1517 = vmatpush.bf16.xpose.msra.mxu0 %v1455
      %1518 = vmatpush.bf16.xpose.msra.mxu0 %v1453
      %1519 = vmatpush.bf16.xpose.msra.mxu0 %v1451
      %1520 = vmatpush.bf16.xpose.msra.mxu0 %v1449
      %1521 = vmatmul.bf16.gmra.mxu0 %v1349
      %v1522 = vpop.f32.mrf.mxu0
      %v1523 = vadd.f32 0.0, %v1522
      %v1524 = vpop.f32.mrf.mxu0
      %1525 = vdwg.mxu0
      %1526 = vmatpush.bf16.xpose.msra.mxu0 %v1464
      %1527 = vmatpush.bf16.xpose.msra.mxu0 %v1462
      %1528 = vmatpush.bf16.xpose.msra.mxu0 %v1460
      %1529 = vmatpush.bf16.xpose.msra.mxu0 %v1458
      %1530 = vmatpush.bf16.xpose.msra.mxu0 %v1456
      %1531 = vmatpush.bf16.xpose.msra.mxu0 %v1454
      %1532 = vmatpush.bf16.xpose.msra.mxu0 %v1452
      %1533 = vmatpush.bf16.xpose.msra.mxu0 %v1450
      %1534 = vmatmul.bf16.gmra.mxu0 %v1350
      %v1535 = vpop.f32.mrf.mxu0
      %v1536 = vadd.f32 %v1523, %v1535
      %v1537 = vpop.f32.mrf.mxu0
      %1538 = vdwg.mxu0
      %1539 = vmatpush.bf16.xpose.msra.mxu0 %v1479
      %1540 = vmatpush.bf16.xpose.msra.mxu0 %v1477
      %1541 = vmatpush.bf16.xpose.msra.mxu0 %v1475
      %1542 = vmatpush.bf16.xpose.msra.mxu0 %v1473
      %1543 = vmatpush.bf16.xpose.msra.mxu0 %v1471
      %1544 = vmatpush.bf16.xpose.msra.mxu0 %v1469
      %1545 = vmatpush.bf16.xpose.msra.mxu0 %v1467
      %1546 = vmatpush.bf16.xpose.msra.mxu0 %v1465
      %1547 = vmatmul.bf16.gmra.mxu0 %v1349
      %v1548 = vpop.f32.mrf.mxu0
      %v1549 = vadd.f32 0.0, %v1548
      %v1550 = vpop.f32.mrf.mxu0
      %1551 = vdwg.mxu0
      %1552 = vmatpush.bf16.xpose.msra.mxu0 %v1480
      %1553 = vmatpush.bf16.xpose.msra.mxu0 %v1478
      %1554 = vmatpush.bf16.xpose.msra.mxu0 %v1476
      %1555 = vmatpush.bf16.xpose.msra.mxu0 %v1474
      %1556 = vmatpush.bf16.xpose.msra.mxu0 %v1472
      %1557 = vmatpush.bf16.xpose.msra.mxu0 %v1470
      %1558 = vmatpush.bf16.xpose.msra.mxu0 %v1468
      %1559 = vmatpush.bf16.xpose.msra.mxu0 %v1466
      %1560 = vmatmul.bf16.gmra.mxu0 %v1350
      %v1561 = vpop.f32.mrf.mxu0
      %v1562 = vadd.f32 %v1549, %v1561
      %v1563 = vpop.f32.mrf.mxu0
      %1564 = vdwg.mxu0
      %1566 = vst [vmem:[#allocation1] ss:$4 sm:$0xff] %v1310
      %v1567 = vld.sshfl [vmem:[#allocation1] sm:$0xff pattern:$0x73625140]
      %v1568 = vld.sshfl [vmem:[#allocation1 + $0x8] sm:$0xff pattern:$0x73625140]
      %v1573 = vunpack.c.l.b16 %v1311
      %v1574 = vunpack.c.h.b16 %v1311
      %v1575 = vunpack.c.l.b16 %v1312
      %v1576 = vunpack.c.h.b16 %v1312
      %v1577 = vpack.c.b16 %v1575, %v1573
      %v1578 = vpack.c.b16 %v1576, %v1574
      %1581 = vmatpush.bf16.xpose.msra.mxu0 %v1461
      %1582 = vmatpush.bf16.xpose.msra.mxu0 %v1459
      %1583 = vmatpush.bf16.xpose.msra.mxu0 %v1457
      %1584 = vmatpush.bf16.xpose.msra.mxu0 %v1455
      %1585 = vmatpush.bf16.xpose.msra.mxu0 %v1453
      %1586 = vmatpush.bf16.xpose.msra.mxu0 %v1451
      %1587 = vmatpush.bf16.xpose.msra.mxu0 %v1449
      %1588 = vmatpush.bf16.xpose.msra.mxu0 %v1577
      %1589 = vmatmul.bf16.gmra.mxu0 %v1567
      %v1590 = vpop.f32.mrf.mxu0
      %v1591 = vadd.f32 %v1536, %v1590
      %v1592 = vpop.f32.mrf.mxu0
      %1593 = vdwg.mxu0
      %1594 = vmatpush.bf16.xpose.msra.mxu0 %v1462
      %1595 = vmatpush.bf16.xpose.msra.mxu0 %v1460
      %1596 = vmatpush.bf16.xpose.msra.mxu0 %v1458
      %1597 = vmatpush.bf16.xpose.msra.mxu0 %v1456
      %1598 = vmatpush.bf16.xpose.msra.mxu0 %v1454
      %1599 = vmatpush.bf16.xpose.msra.mxu0 %v1452
      %1600 = vmatpush.bf16.xpose.msra.mxu0 %v1450
      %1601 = vmatpush.bf16.xpose.msra.mxu0 %v1578
      %1602 = vmatmul.bf16.gmra.mxu0 %v1568
      %v1603 = vpop.f32.mrf.mxu0
      %v1604 = vadd.f32 %v1591, %v1603
      %v1605 = vpop.f32.mrf.mxu0
      %1606 = vdwg.mxu0
      %1607 = vmatpush.bf16.xpose.msra.mxu0 %v1477
      %1608 = vmatpush.bf16.xpose.msra.mxu0 %v1475
      %1609 = vmatpush.bf16.xpose.msra.mxu0 %v1473
      %1610 = vmatpush.bf16.xpose.msra.mxu0 %v1471
      %1611 = vmatpush.bf16.xpose.msra.mxu0 %v1469
      %1612 = vmatpush.bf16.xpose.msra.mxu0 %v1467
      %1613 = vmatpush.bf16.xpose.msra.mxu0 %v1465
      %1614 = vmatpush.bf16.xpose.msra.mxu0 %v1463
      %1615 = vmatmul.bf16.gmra.mxu0 %v1567
      %v1616 = vpop.f32.mrf.mxu0
      %v1617 = vadd.f32 %v1562, %v1616
      %v1618 = vpop.f32.mrf.mxu0
      %1619 = vdwg.mxu0
      %1620 = vmatpush.bf16.xpose.msra.mxu0 %v1478
      %1621 = vmatpush.bf16.xpose.msra.mxu0 %v1476
      %1622 = vmatpush.bf16.xpose.msra.mxu0 %v1474
      %1623 = vmatpush.bf16.xpose.msra.mxu0 %v1472
      %1624 = vmatpush.bf16.xpose.msra.mxu0 %v1470
      %1625 = vmatpush.bf16.xpose.msra.mxu0 %v1468
      %1626 = vmatpush.bf16.xpose.msra.mxu0 %v1466
      %1627 = vmatpush.bf16.xpose.msra.mxu0 %v1464
      %1628 = vmatmul.bf16.gmra.mxu0 %v1568
      %v1629 = vpop.f32.mrf.mxu0
      %v1630 = vadd.f32 %v1617, %v1629
      %v1631 = vpop.f32.mrf.mxu0
      %1632 = vdwg.mxu0
      %s1633 = scalar_lea.vmem %s4, 8
      %v1634 = vld [vmem:[%s1633] sm:$0xf]
      %v1635 = vld [vmem:[#allocation2 + $0x20] sm:$0xff]
      %v1636 = vld [vmem:[#allocation2 + $0x28] sm:$0xff]
      %v1637 = vld [vmem:[#allocation2 + $0x30] sm:$0xff]
      %v1638 = vld [vmem:[#allocation2 + $0x38] sm:$0xff]
      %v1639 = vld [vmem:[#allocation2 + $0x40] sm:$0xff]
      %v1640 = vld [vmem:[#allocation2 + $0x48] sm:$0xff]
      %v1641 = vld [vmem:[#allocation2 + $0x50] sm:$0xff]
      %v1642 = vld [vmem:[#allocation2 + $0x58] sm:$0xff]
      %v1643 = vld [vmem:[#allocation2 + $0x60] sm:$0xff]
      %v1644 = vld [vmem:[#allocation2 + $0x68] sm:$0xff]
      %v1645 = vld [vmem:[#allocation2 + $0x70] sm:$0xff]
      %v1646 = vld [vmem:[#allocation2 + $0x78] sm:$0xff]
      %v1647 = vld [vmem:[#allocation2 + $0x80] sm:$0xff]
      %v1648 = vld [vmem:[#allocation2 + $0x88] sm:$0xff]
      %v1649 = vld [vmem:[#allocation2 + $0x90] sm:$0xff]
      %v1650 = vld [vmem:[#allocation2 + $0x98] sm:$0xff]
      %v1651 = vld [vmem:[#allocation2 + $0xa0] sm:$0xff]
      %v1652 = vld [vmem:[#allocation2 + $0xa8] sm:$0xff]
      %v1653 = vld [vmem:[#allocation2 + $0xb0] sm:$0xff]
      %v1654 = vld [vmem:[#allocation2 + $0xb8] sm:$0xff]
      %v1655 = vld [vmem:[#allocation2 + $0xc0] sm:$0xff]
      %v1656 = vld [vmem:[#allocation2 + $0xc8] sm:$0xff]
      %v1657 = vld [vmem:[#allocation2 + $0xd0] sm:$0xff]
      %v1658 = vld [vmem:[#allocation2 + $0xd8] sm:$0xff]
      %v1659 = vld [vmem:[#allocation2 + $0xe0] sm:$0xff]
      %v1660 = vld [vmem:[#allocation2 + $0xe8] sm:$0xff]
      %v1661 = vld [vmem:[#allocation2 + $0xf0] sm:$0xff]
      %v1662 = vld [vmem:[#allocation2 + $0xf8] sm:$0xff]
      %v1663 = vld [vmem:[#allocation2 + $0x100] sm:$0xff]
      %v1664 = vld [vmem:[#allocation2 + $0x108] sm:$0xff]
      %v1665 = vld [vmem:[#allocation2 + $0x110] sm:$0xff]
      %v1666 = vld [vmem:[#allocation2 + $0x118] sm:$0xff]
      %1668 = vst [vmem:[#allocation1] ss:$4 sm:$0xff] %v1634
      %v1669 = vld.sshfl [vmem:[#allocation1] sm:$0xff pattern:$0x73625140]
      %v1670 = vld.sshfl [vmem:[#allocation1 + $0x8] sm:$0xff pattern:$0x73625140]
      %v1705 = vunpack.c.l.b16 %v1635
      %v1706 = vunpack.c.h.b16 %v1635
      %v1707 = vunpack.c.l.b16 %v1636
      %v1708 = vunpack.c.h.b16 %v1636
      %v1709 = vunpack.c.l.b16 %v1637
      %v1710 = vunpack.c.h.b16 %v1637
      %v1711 = vunpack.c.l.b16 %v1638
      %v1712 = vunpack.c.h.b16 %v1638
      %v1713 = vunpack.c.l.b16 %v1639
      %v1714 = vunpack.c.h.b16 %v1639
      %v1715 = vunpack.c.l.b16 %v1640
      %v1716 = vunpack.c.h.b16 %v1640
      %v1717 = vunpack.c.l.b16 %v1641
      %v1718 = vunpack.c.h.b16 %v1641
      %v1719 = vunpack.c.l.b16 %v1642
      %v1720 = vunpack.c.h.b16 %v1642
      %v1721 = vunpack.c.l.b16 %v1643
      %v1722 = vunpack.c.h.b16 %v1643
      %v1723 = vunpack.c.l.b16 %v1644
      %v1724 = vunpack.c.h.b16 %v1644
      %v1725 = vunpack.c.l.b16 %v1645
      %v1726 = vunpack.c.h.b16 %v1645
      %v1727 = vunpack.c.l.b16 %v1646
      %v1728 = vunpack.c.h.b16 %v1646
      %v1729 = vunpack.c.l.b16 %v1647
      %v1730 = vunpack.c.h.b16 %v1647
      %v1731 = vunpack.c.l.b16 %v1648
      %v1732 = vunpack.c.h.b16 %v1648
      %v1733 = vunpack.c.l.b16 %v1649
      %v1734 = vunpack.c.h.b16 %v1649
      %v1735 = vunpack.c.l.b16 %v1650
      %v1736 = vunpack.c.h.b16 %v1650
      %v1737 = vunpack.c.l.b16 %v1651
      %v1738 = vunpack.c.h.b16 %v1651
      %v1739 = vunpack.c.l.b16 %v1652
      %v1740 = vunpack.c.h.b16 %v1652
      %v1741 = vunpack.c.l.b16 %v1653
      %v1742 = vunpack.c.h.b16 %v1653
      %v1743 = vunpack.c.l.b16 %v1654
      %v1744 = vunpack.c.h.b16 %v1654
      %v1745 = vunpack.c.l.b16 %v1655
      %v1746 = vunpack.c.h.b16 %v1655
      %v1747 = vunpack.c.l.b16 %v1656
      %v1748 = vunpack.c.h.b16 %v1656
      %v1749 = vunpack.c.l.b16 %v1657
      %v1750 = vunpack.c.h.b16 %v1657
      %v1751 = vunpack.c.l.b16 %v1658
      %v1752 = vunpack.c.h.b16 %v1658
      %v1753 = vunpack.c.l.b16 %v1659
      %v1754 = vunpack.c.h.b16 %v1659
      %v1755 = vunpack.c.l.b16 %v1660
      %v1756 = vunpack.c.h.b16 %v1660
      %v1757 = vunpack.c.l.b16 %v1661
      %v1758 = vunpack.c.h.b16 %v1661
      %v1759 = vunpack.c.l.b16 %v1662
      %v1760 = vunpack.c.h.b16 %v1662
      %v1761 = vunpack.c.l.b16 %v1663
      %v1762 = vunpack.c.h.b16 %v1663
      %v1763 = vunpack.c.l.b16 %v1664
      %v1764 = vunpack.c.h.b16 %v1664
      %v1765 = vunpack.c.l.b16 %v1665
      %v1766 = vunpack.c.h.b16 %v1665
      %v1767 = vunpack.c.l.b16 %v1666
      %v1768 = vunpack.c.h.b16 %v1666
      %v1769 = vpack.c.b16 %v1707, %v1705
      %v1770 = vpack.c.b16 %v1708, %v1706
      %v1771 = vpack.c.b16 %v1711, %v1709
      %v1772 = vpack.c.b16 %v1712, %v1710
      %v1773 = vpack.c.b16 %v1715, %v1713
      %v1774 = vpack.c.b16 %v1716, %v1714
      %v1775 = vpack.c.b16 %v1719, %v1717
      %v1776 = vpack.c.b16 %v1720, %v1718
      %v1777 = vpack.c.b16 %v1723, %v1721
      %v1778 = vpack.c.b16 %v1724, %v1722
      %v1779 = vpack.c.b16 %v1727, %v1725
      %v1780 = vpack.c.b16 %v1728, %v1726
      %v1781 = vpack.c.b16 %v1731, %v1729
      %v1782 = vpack.c.b16 %v1732, %v1730
      %v1783 = vpack.c.b16 %v1735, %v1733
      %v1784 = vpack.c.b16 %v1736, %v1734
      %v1785 = vpack.c.b16 %v1739, %v1737
      %v1786 = vpack.c.b16 %v1740, %v1738
      %v1787 = vpack.c.b16 %v1743, %v1741
      %v1788 = vpack.c.b16 %v1744, %v1742
      %v1789 = vpack.c.b16 %v1747, %v1745
      %v1790 = vpack.c.b16 %v1748, %v1746
      %v1791 = vpack.c.b16 %v1751, %v1749
      %v1792 = vpack.c.b16 %v1752, %v1750
      %v1793 = vpack.c.b16 %v1755, %v1753
      %v1794 = vpack.c.b16 %v1756, %v1754
      %v1795 = vpack.c.b16 %v1759, %v1757
      %v1796 = vpack.c.b16 %v1760, %v1758
      %v1797 = vpack.c.b16 %v1763, %v1761
      %v1798 = vpack.c.b16 %v1764, %v1762
      %v1799 = vpack.c.b16 %v1767, %v1765
      %v1800 = vpack.c.b16 %v1768, %v1766
      %1833 = vmatpush.bf16.xpose.msra.mxu0 %v1783
      %1834 = vmatpush.bf16.xpose.msra.mxu0 %v1781
      %1835 = vmatpush.bf16.xpose.msra.mxu0 %v1779
      %1836 = vmatpush.bf16.xpose.msra.mxu0 %v1777
      %1837 = vmatpush.bf16.xpose.msra.mxu0 %v1775
      %1838 = vmatpush.bf16.xpose.msra.mxu0 %v1773
      %1839 = vmatpush.bf16.xpose.msra.mxu0 %v1771
      %1840 = vmatpush.bf16.xpose.msra.mxu0 %v1769
      %1841 = vmatmul.bf16.gmra.mxu0 %v1669
      %v1842 = vpop.f32.mrf.mxu0
      %v1843 = vadd.f32 0.0, %v1842
      %v1844 = vpop.f32.mrf.mxu0
      %1845 = vdwg.mxu0
      %1846 = vmatpush.bf16.xpose.msra.mxu0 %v1784
      %1847 = vmatpush.bf16.xpose.msra.mxu0 %v1782
      %1848 = vmatpush.bf16.xpose.msra.mxu0 %v1780
      %1849 = vmatpush.bf16.xpose.msra.mxu0 %v1778
      %1850 = vmatpush.bf16.xpose.msra.mxu0 %v1776
      %1851 = vmatpush.bf16.xpose.msra.mxu0 %v1774
      %1852 = vmatpush.bf16.xpose.msra.mxu0 %v1772
      %1853 = vmatpush.bf16.xpose.msra.mxu0 %v1770
      %1854 = vmatmul.bf16.gmra.mxu0 %v1670
      %v1855 = vpop.f32.mrf.mxu0
      %v1856 = vadd.f32 %v1843, %v1855
      %v1857 = vpop.f32.mrf.mxu0
      %1858 = vdwg.mxu0
      %1859 = vmatpush.bf16.xpose.msra.mxu0 %v1799
      %1860 = vmatpush.bf16.xpose.msra.mxu0 %v1797
      %1861 = vmatpush.bf16.xpose.msra.mxu0 %v1795
      %1862 = vmatpush.bf16.xpose.msra.mxu0 %v1793
      %1863 = vmatpush.bf16.xpose.msra.mxu0 %v1791
      %1864 = vmatpush.bf16.xpose.msra.mxu0 %v1789
      %1865 = vmatpush.bf16.xpose.msra.mxu0 %v1787
      %1866 = vmatpush.bf16.xpose.msra.mxu0 %v1785
      %1867 = vmatmul.bf16.gmra.mxu0 %v1669
      %v1868 = vpop.f32.mrf.mxu0
      %v1869 = vadd.f32 0.0, %v1868
      %v1870 = vpop.f32.mrf.mxu0
      %1871 = vdwg.mxu0
      %1872 = vmatpush.bf16.xpose.msra.mxu0 %v1800
      %1873 = vmatpush.bf16.xpose.msra.mxu0 %v1798
      %1874 = vmatpush.bf16.xpose.msra.mxu0 %v1796
      %1875 = vmatpush.bf16.xpose.msra.mxu0 %v1794
      %1876 = vmatpush.bf16.xpose.msra.mxu0 %v1792
      %1877 = vmatpush.bf16.xpose.msra.mxu0 %v1790
      %1878 = vmatpush.bf16.xpose.msra.mxu0 %v1788
      %1879 = vmatpush.bf16.xpose.msra.mxu0 %v1786
      %1880 = vmatmul.bf16.gmra.mxu0 %v1670
      %v1881 = vpop.f32.mrf.mxu0
      %v1882 = vadd.f32 %v1869, %v1881
      %v1883 = vpop.f32.mrf.mxu0
      %1884 = vdwg.mxu0
      %v1885 = vadd.f32 %v1604, %v1856
      %v1886 = vadd.f32 %v1630, %v1882
      %s1887 = scalar_lea.vmem %s4, 12
      %v1888 = vld [vmem:[%s1887] sm:$0xf]
      %v1889 = vld [vmem:[#allocation2 + $0x30] sm:$0xff]
      %v1890 = vld [vmem:[#allocation2 + $0x38] sm:$0xff]
      %v1891 = vld [vmem:[#allocation2 + $0x40] sm:$0xff]
      %v1892 = vld [vmem:[#allocation2 + $0x48] sm:$0xff]
      %v1893 = vld [vmem:[#allocation2 + $0x50] sm:$0xff]
      %v1894 = vld [vmem:[#allocation2 + $0x58] sm:$0xff]
      %v1895 = vld [vmem:[#allocation2 + $0x60] sm:$0xff]
      %v1896 = vld [vmem:[#allocation2 + $0x68] sm:$0xff]
      %v1897 = vld [vmem:[#allocation2 + $0x70] sm:$0xff]
      %v1898 = vld [vmem:[#allocation2 + $0x78] sm:$0xff]
      %v1899 = vld [vmem:[#allocation2 + $0x80] sm:$0xff]
      %v1900 = vld [vmem:[#allocation2 + $0x88] sm:$0xff]
      %v1901 = vld [vmem:[#allocation2 + $0x90] sm:$0xff]
      %v1902 = vld [vmem:[#allocation2 + $0x98] sm:$0xff]
      %v1903 = vld [vmem:[#allocation2 + $0xa0] sm:$0xff]
      %v1904 = vld [vmem:[#allocation2 + $0xa8] sm:$0xff]
      %v1905 = vld [vmem:[#allocation2 + $0xb0] sm:$0xff]
      %v1906 = vld [vmem:[#allocation2 + $0xb8] sm:$0xff]
      %v1907 = vld [vmem:[#allocation2 + $0xc0] sm:$0xff]
      %v1908 = vld [vmem:[#allocation2 + $0xc8] sm:$0xff]
      %v1909 = vld [vmem:[#allocation2 + $0xd0] sm:$0xff]
      %v1910 = vld [vmem:[#allocation2 + $0xd8] sm:$0xff]
      %v1911 = vld [vmem:[#allocation2 + $0xe0] sm:$0xff]
      %v1912 = vld [vmem:[#allocation2 + $0xe8] sm:$0xff]
      %v1913 = vld [vmem:[#allocation2 + $0xf0] sm:$0xff]
      %v1914 = vld [vmem:[#allocation2 + $0xf8] sm:$0xff]
      %v1915 = vld [vmem:[#allocation2 + $0x100] sm:$0xff]
      %v1916 = vld [vmem:[#allocation2 + $0x108] sm:$0xff]
      %v1917 = vld [vmem:[#allocation2 + $0x110] sm:$0xff]
      %v1918 = vld [vmem:[#allocation2 + $0x118] sm:$0xff]
      %v1919 = vld [vmem:[#allocation2 + $0x120] sm:$0xff]
      %v1920 = vld [vmem:[#allocation2 + $0x128] sm:$0xff]
      %1922 = vst [vmem:[#allocation1] ss:$4 sm:$0xff] %v1888
      %v1923 = vld.sshfl [vmem:[#allocation1] sm:$0xff pattern:$0x73625140]
      %v1924 = vld.sshfl [vmem:[#allocation1 + $0x8] sm:$0xff pattern:$0x73625140]
      %v1959 = vunpack.c.l.b16 %v1889
      %v1960 = vunpack.c.h.b16 %v1889
      %v1961 = vunpack.c.l.b16 %v1890
      %v1962 = vunpack.c.h.b16 %v1890
      %v1963 = vunpack.c.l.b16 %v1891
      %v1964 = vunpack.c.h.b16 %v1891
      %v1965 = vunpack.c.l.b16 %v1892
      %v1966 = vunpack.c.h.b16 %v1892
      %v1967 = vunpack.c.l.b16 %v1893
      %v1968 = vunpack.c.h.b16 %v1893
      %v1969 = vunpack.c.l.b16 %v1894
      %v1970 = vunpack.c.h.b16 %v1894
      %v1971 = vunpack.c.l.b16 %v1895
      %v1972 = vunpack.c.h.b16 %v1895
      %v1973 = vunpack.c.l.b16 %v1896
      %v1974 = vunpack.c.h.b16 %v1896
      %v1975 = vunpack.c.l.b16 %v1897
      %v1976 = vunpack.c.h.b16 %v1897
      %v1977 = vunpack.c.l.b16 %v1898
      %v1978 = vunpack.c.h.b16 %v1898
      %v1979 = vunpack.c.l.b16 %v1899
      %v1980 = vunpack.c.h.b16 %v1899
      %v1981 = vunpack.c.l.b16 %v1900
      %v1982 = vunpack.c.h.b16 %v1900
      %v1983 = vunpack.c.l.b16 %v1901
      %v1984 = vunpack.c.h.b16 %v1901
      %v1985 = vunpack.c.l.b16 %v1902
      %v1986 = vunpack.c.h.b16 %v1902
      %v1987 = vunpack.c.l.b16 %v1903
      %v1988 = vunpack.c.h.b16 %v1903
      %v1989 = vunpack.c.l.b16 %v1904
      %v1990 = vunpack.c.h.b16 %v1904
      %v1991 = vunpack.c.l.b16 %v1905
      %v1992 = vunpack.c.h.b16 %v1905
      %v1993 = vunpack.c.l.b16 %v1906
      %v1994 = vunpack.c.h.b16 %v1906
      %v1995 = vunpack.c.l.b16 %v1907
      %v1996 = vunpack.c.h.b16 %v1907
      %v1997 = vunpack.c.l.b16 %v1908
      %v1998 = vunpack.c.h.b16 %v1908
      %v1999 = vunpack.c.l.b16 %v1909
      %v2000 = vunpack.c.h.b16 %v1909
      %v2001 = vunpack.c.l.b16 %v1910
      %v2002 = vunpack.c.h.b16 %v1910
      %v2003 = vunpack.c.l.b16 %v1911
      %v2004 = vunpack.c.h.b16 %v1911
      %v2005 = vunpack.c.l.b16 %v1912
      %v2006 = vunpack.c.h.b16 %v1912
      %v2007 = vunpack.c.l.b16 %v1913
      %v2008 = vunpack.c.h.b16 %v1913
      %v2009 = vunpack.c.l.b16 %v1914
      %v2010 = vunpack.c.h.b16 %v1914
      %v2011 = vunpack.c.l.b16 %v1915
      %v2012 = vunpack.c.h.b16 %v1915
      %v2013 = vunpack.c.l.b16 %v1916
      %v2014 = vunpack.c.h.b16 %v1916
      %v2015 = vunpack.c.l.b16 %v1917
      %v2016 = vunpack.c.h.b16 %v1917
      %v2017 = vunpack.c.l.b16 %v1918
      %v2018 = vunpack.c.h.b16 %v1918
      %v2019 = vunpack.c.l.b16 %v1919
      %v2020 = vunpack.c.h.b16 %v1919
      %v2021 = vunpack.c.l.b16 %v1920
      %v2022 = vunpack.c.h.b16 %v1920
      %v2023 = vpack.c.b16 %v1961, %v1959
      %v2024 = vpack.c.b16 %v1962, %v1960
      %v2025 = vpack.c.b16 %v1965, %v1963
      %v2026 = vpack.c.b16 %v1966, %v1964
      %v2027 = vpack.c.b16 %v1969, %v1967
      %v2028 = vpack.c.b16 %v1970, %v1968
      %v2029 = vpack.c.b16 %v1973, %v1971
      %v2030 = vpack.c.b16 %v1974, %v1972
      %v2031 = vpack.c.b16 %v1977, %v1975
      %v2032 = vpack.c.b16 %v1978, %v1976
      %v2033 = vpack.c.b16 %v1981, %v1979
      %v2034 = vpack.c.b16 %v1982, %v1980
      %v2035 = vpack.c.b16 %v1985, %v1983
      %v2036 = vpack.c.b16 %v1986, %v1984
      %v2037 = vpack.c.b16 %v1989, %v1987
      %v2038 = vpack.c.b16 %v1990, %v1988
      %v2039 = vpack.c.b16 %v1993, %v1991
      %v2040 = vpack.c.b16 %v1994, %v1992
      %v2041 = vpack.c.b16 %v1997, %v1995
      %v2042 = vpack.c.b16 %v1998, %v1996
      %v2043 = vpack.c.b16 %v2001, %v1999
      %v2044 = vpack.c.b16 %v2002, %v2000
      %v2045 = vpack.c.b16 %v2005, %v2003
      %v2046 = vpack.c.b16 %v2006, %v2004
      %v2047 = vpack.c.b16 %v2009, %v2007
      %v2048 = vpack.c.b16 %v2010, %v2008
      %v2049 = vpack.c.b16 %v2013, %v2011
      %v2050 = vpack.c.b16 %v2014, %v2012
      %v2051 = vpack.c.b16 %v2017, %v2015
      %v2052 = vpack.c.b16 %v2018, %v2016
      %v2053 = vpack.c.b16 %v2021, %v2019
      %v2054 = vpack.c.b16 %v2022, %v2020
      %2087 = vmatpush.bf16.xpose.msra.mxu0 %v2037
      %2088 = vmatpush.bf16.xpose.msra.mxu0 %v2035
      %2089 = vmatpush.bf16.xpose.msra.mxu0 %v2033
      %2090 = vmatpush.bf16.xpose.msra.mxu0 %v2031
      %2091 = vmatpush.bf16.xpose.msra.mxu0 %v2029
      %2092 = vmatpush.bf16.xpose.msra.mxu0 %v2027
      %2093 = vmatpush.bf16.xpose.msra.mxu0 %v2025
      %2094 = vmatpush.bf16.xpose.msra.mxu0 %v2023
      %2095 = vmatmul.bf16.gmra.mxu0 %v1923
      %v2096 = vpop.f32.mrf.mxu0
      %v2097 = vadd.f32 0.0, %v2096
      %v2098 = vpop.f32.mrf.mxu0
      %2099 = vdwg.mxu0
      %2100 = vmatpush.bf16.xpose.msra.mxu0 %v2038
      %2101 = vmatpush.bf16.xpose.msra.mxu0 %v2036
      %2102 = vmatpush.bf16.xpose.msra.mxu0 %v2034
      %2103 = vmatpush.bf16.xpose.msra.mxu0 %v2032
      %2104 = vmatpush.bf16.xpose.msra.mxu0 %v2030
      %2105 = vmatpush.bf16.xpose.msra.mxu0 %v2028
      %2106 = vmatpush.bf16.xpose.msra.mxu0 %v2026
      %2107 = vmatpush.bf16.xpose.msra.mxu0 %v2024
      %2108 = vmatmul.bf16.gmra.mxu0 %v1924
      %v2109 = vpop.f32.mrf.mxu0
      %v2110 = vadd.f32 %v2097, %v2109
      %v2111 = vpop.f32.mrf.mxu0
      %2112 = vdwg.mxu0
      %2113 = vmatpush.bf16.xpose.msra.mxu0 %v2053
      %2114 = vmatpush.bf16.xpose.msra.mxu0 %v2051
      %2115 = vmatpush.bf16.xpose.msra.mxu0 %v2049
      %2116 = vmatpush.bf16.xpose.msra.mxu0 %v2047
      %2117 = vmatpush.bf16.xpose.msra.mxu0 %v2045
      %2118 = vmatpush.bf16.xpose.msra.mxu0 %v2043
      %2119 = vmatpush.bf16.xpose.msra.mxu0 %v2041
      %2120 = vmatpush.bf16.xpose.msra.mxu0 %v2039
      %2121 = vmatmul.bf16.gmra.mxu0 %v1923
      %v2122 = vpop.f32.mrf.mxu0
      %v2123 = vadd.f32 0.0, %v2122
      %v2124 = vpop.f32.mrf.mxu0
      %2125 = vdwg.mxu0
      %2126 = vmatpush.bf16.xpose.msra.mxu0 %v2054
      %2127 = vmatpush.bf16.xpose.msra.mxu0 %v2052
      %2128 = vmatpush.bf16.xpose.msra.mxu0 %v2050
      %2129 = vmatpush.bf16.xpose.msra.mxu0 %v2048
      %2130 = vmatpush.bf16.xpose.msra.mxu0 %v2046
      %2131 = vmatpush.bf16.xpose.msra.mxu0 %v2044
      %2132 = vmatpush.bf16.xpose.msra.mxu0 %v2042
      %2133 = vmatpush.bf16.xpose.msra.mxu0 %v2040
      %2134 = vmatmul.bf16.gmra.mxu0 %v1924
      %v2135 = vpop.f32.mrf.mxu0
      %v2136 = vadd.f32 %v2123, %v2135
      %v2137 = vpop.f32.mrf.mxu0
      %2138 = vdwg.mxu0
      %v2139 = vadd.f32 %v1885, %v2110
      %v2140 = vadd.f32 %v1886, %v2136
      %s2141 = scalar_lea.vmem %s4, 16
      %v2142 = vld [vmem:[%s2141] sm:$0xf]
      %v2143 = vld [vmem:[#allocation2 + $0x40] sm:$0xff]
      %v2144 = vld [vmem:[#allocation2 + $0x48] sm:$0xff]
      %v2145 = vld [vmem:[#allocation2 + $0x50] sm:$0xff]
      %v2146 = vld [vmem:[#allocation2 + $0x58] sm:$0xff]
      %v2147 = vld [vmem:[#allocation2 + $0x60] sm:$0xff]
      %v2148 = vld [vmem:[#allocation2 + $0x68] sm:$0xff]
      %v2149 = vld [vmem:[#allocation2 + $0x70] sm:$0xff]
      %v2150 = vld [vmem:[#allocation2 + $0x78] sm:$0xff]
      %v2151 = vld [vmem:[#allocation2 + $0x80] sm:$0xff]
      %v2152 = vld [vmem:[#allocation2 + $0x88] sm:$0xff]
      %v2153 = vld [vmem:[#allocation2 + $0x90] sm:$0xff]
      %v2154 = vld [vmem:[#allocation2 + $0x98] sm:$0xff]
      %v2155 = vld [vmem:[#allocation2 + $0xa0] sm:$0xff]
      %v2156 = vld [vmem:[#allocation2 + $0xa8] sm:$0xff]
      %v2157 = vld [vmem:[#allocation2 + $0xb0] sm:$0xff]
      %v2158 = vld [vmem:[#allocation2 + $0xb8] sm:$0xff]
      %v2159 = vld [vmem:[#allocation2 + $0xc0] sm:$0xff]
      %v2160 = vld [vmem:[#allocation2 + $0xc8] sm:$0xff]
      %v2161 = vld [vmem:[#allocation2 + $0xd0] sm:$0xff]
      %v2162 = vld [vmem:[#allocation2 + $0xd8] sm:$0xff]
      %v2163 = vld [vmem:[#allocation2 + $0xe0] sm:$0xff]
      %v2164 = vld [vmem:[#allocation2 + $0xe8] sm:$0xff]
      %v2165 = vld [vmem:[#allocation2 + $0xf0] sm:$0xff]
      %v2166 = vld [vmem:[#allocation2 + $0xf8] sm:$0xff]
      %v2167 = vld [vmem:[#allocation2 + $0x100] sm:$0xff]
      %v2168 = vld [vmem:[#allocation2 + $0x108] sm:$0xff]
      %v2169 = vld [vmem:[#allocation2 + $0x110] sm:$0xff]
      %v2170 = vld [vmem:[#allocation2 + $0x118] sm:$0xff]
      %v2171 = vld [vmem:[#allocation2 + $0x120] sm:$0xff]
      %v2172 = vld [vmem:[#allocation2 + $0x128] sm:$0xff]
      %v2173 = vld [vmem:[#allocation2 + $0x130] sm:$0xff]
      %v2174 = vld [vmem:[#allocation2 + $0x138] sm:$0xff]
      %2176 = vst [vmem:[#allocation1] ss:$4 sm:$0xff] %v2142
      %v2177 = vld.sshfl [vmem:[#allocation1] sm:$0xff pattern:$0x73625140]
      %v2178 = vld.sshfl [vmem:[#allocation1 + $0x8] sm:$0xff pattern:$0x73625140]
      %v2213 = vunpack.c.l.b16 %v2143
      %v2214 = vunpack.c.h.b16 %v2143
      %v2215 = vunpack.c.l.b16 %v2144
      %v2216 = vunpack.c.h.b16 %v2144
      %v2217 = vunpack.c.l.b16 %v2145
      %v2218 = vunpack.c.h.b16 %v2145
      %v2219 = vunpack.c.l.b16 %v2146
      %v2220 = vunpack.c.h.b16 %v2146
      %v2221 = vunpack.c.l.b16 %v2147
      %v2222 = vunpack.c.h.b16 %v2147
      %v2223 = vunpack.c.l.b16 %v2148
      %v2224 = vunpack.c.h.b16 %v2148
      %v2225 = vunpack.c.l.b16 %v2149
      %v2226 = vunpack.c.h.b16 %v2149
      %v2227 = vunpack.c.l.b16 %v2150
      %v2228 = vunpack.c.h.b16 %v2150
      %v2229 = vunpack.c.l.b16 %v2151
      %v2230 = vunpack.c.h.b16 %v2151
      %v2231 = vunpack.c.l.b16 %v2152
      %v2232 = vunpack.c.h.b16 %v2152
      %v2233 = vunpack.c.l.b16 %v2153
      %v2234 = vunpack.c.h.b16 %v2153
      %v2235 = vunpack.c.l.b16 %v2154
      %v2236 = vunpack.c.h.b16 %v2154
      %v2237 = vunpack.c.l.b16 %v2155
      %v2238 = vunpack.c.h.b16 %v2155
      %v2239 = vunpack.c.l.b16 %v2156
      %v2240 = vunpack.c.h.b16 %v2156
      %v2241 = vunpack.c.l.b16 %v2157
      %v2242 = vunpack.c.h.b16 %v2157
      %v2243 = vunpack.c.l.b16 %v2158
      %v2244 = vunpack.c.h.b16 %v2158
      %v2245 = vunpack.c.l.b16 %v2159
      %v2246 = vunpack.c.h.b16 %v2159
      %v2247 = vunpack.c.l.b16 %v2160
      %v2248 = vunpack.c.h.b16 %v2160
      %v2249 = vunpack.c.l.b16 %v2161
      %v2250 = vunpack.c.h.b16 %v2161
      %v2251 = vunpack.c.l.b16 %v2162
      %v2252 = vunpack.c.h.b16 %v2162
      %v2253 = vunpack.c.l.b16 %v2163
      %v2254 = vunpack.c.h.b16 %v2163
      %v2255 = vunpack.c.l.b16 %v2164
      %v2256 = vunpack.c.h.b16 %v2164
      %v2257 = vunpack.c.l.b16 %v2165
      %v2258 = vunpack.c.h.b16 %v2165
      %v2259 = vunpack.c.l.b16 %v2166
      %v2260 = vunpack.c.h.b16 %v2166
      %v2261 = vunpack.c.l.b16 %v2167
      %v2262 = vunpack.c.h.b16 %v2167
      %v2263 = vunpack.c.l.b16 %v2168
      %v2264 = vunpack.c.h.b16 %v2168
      %v2265 = vunpack.c.l.b16 %v2169
      %v2266 = vunpack.c.h.b16 %v2169
      %v2267 = vunpack.c.l.b16 %v2170
      %v2268 = vunpack.c.h.b16 %v2170
      %v2269 = vunpack.c.l.b16 %v2171
      %v2270 = vunpack.c.h.b16 %v2171
      %v2271 = vunpack.c.l.b16 %v2172
      %v2272 = vunpack.c.h.b16 %v2172
      %v2273 = vunpack.c.l.b16 %v2173
      %v2274 = vunpack.c.h.b16 %v2173
      %v2275 = vunpack.c.l.b16 %v2174
      %v2276 = vunpack.c.h.b16 %v2174
      %v2277 = vpack.c.b16 %v2215, %v2213
      %v2278 = vpack.c.b16 %v2216, %v2214
      %v2279 = vpack.c.b16 %v2219, %v2217
      %v2280 = vpack.c.b16 %v2220, %v2218
      %v2281 = vpack.c.b16 %v2223, %v2221
      %v2282 = vpack.c.b16 %v2224, %v2222
      %v2283 = vpack.c.b16 %v2227, %v2225
      %v2284 = vpack.c.b16 %v2228, %v2226
      %v2285 = vpack.c.b16 %v2231, %v2229
      %v2286 = vpack.c.b16 %v2232, %v2230
      %v2287 = vpack.c.b16 %v2235, %v2233
      %v2288 = vpack.c.b16 %v2236, %v2234
      %v2289 = vpack.c.b16 %v2239, %v2237
      %v2290 = vpack.c.b16 %v2240, %v2238
      %v2291 = vpack.c.b16 %v2243, %v2241
      %v2292 = vpack.c.b16 %v2244, %v2242
      %v2293 = vpack.c.b16 %v2247, %v2245
      %v2294 = vpack.c.b16 %v2248, %v2246
      %v2295 = vpack.c.b16 %v2251, %v2249
      %v2296 = vpack.c.b16 %v2252, %v2250
      %v2297 = vpack.c.b16 %v2255, %v2253
      %v2298 = vpack.c.b16 %v2256, %v2254
      %v2299 = vpack.c.b16 %v2259, %v2257
      %v2300 = vpack.c.b16 %v2260, %v2258
      %v2301 = vpack.c.b16 %v2263, %v2261
      %v2302 = vpack.c.b16 %v2264, %v2262
      %v2303 = vpack.c.b16 %v2267, %v2265
      %v2304 = vpack.c.b16 %v2268, %v2266
      %v2305 = vpack.c.b16 %v2271, %v2269
      %v2306 = vpack.c.b16 %v2272, %v2270
      %v2307 = vpack.c.b16 %v2275, %v2273
      %v2308 = vpack.c.b16 %v2276, %v2274
      %2341 = vmatpush.bf16.xpose.msra.mxu0 %v2291
      %2342 = vmatpush.bf16.xpose.msra.mxu0 %v2289
      %2343 = vmatpush.bf16.xpose.msra.mxu0 %v2287
      %2344 = vmatpush.bf16.xpose.msra.mxu0 %v2285
      %2345 = vmatpush.bf16.xpose.msra.mxu0 %v2283
      %2346 = vmatpush.bf16.xpose.msra.mxu0 %v2281
      %2347 = vmatpush.bf16.xpose.msra.mxu0 %v2279
      %2348 = vmatpush.bf16.xpose.msra.mxu0 %v2277
      %2349 = vmatmul.bf16.gmra.mxu0 %v2177
      %v2350 = vpop.f32.mrf.mxu0
      %v2351 = vadd.f32 0.0, %v2350
      %v2352 = vpop.f32.mrf.mxu0
      %2353 = vdwg.mxu0
      %2354 = vmatpush.bf16.xpose.msra.mxu0 %v2292
      %2355 = vmatpush.bf16.xpose.msra.mxu0 %v2290
      %2356 = vmatpush.bf16.xpose.msra.mxu0 %v2288
      %2357 = vmatpush.bf16.xpose.msra.mxu0 %v2286
      %2358 = vmatpush.bf16.xpose.msra.mxu0 %v2284
      %2359 = vmatpush.bf16.xpose.msra.mxu0 %v2282
      %2360 = vmatpush.bf16.xpose.msra.mxu0 %v2280
      %2361 = vmatpush.bf16.xpose.msra.mxu0 %v2278
      %2362 = vmatmul.bf16.gmra.mxu0 %v2178
      %v2363 = vpop.f32.mrf.mxu0
      %v2364 = vadd.f32 %v2351, %v2363
      %v2365 = vpop.f32.mrf.mxu0
      %2366 = vdwg.mxu0
      %2367 = vmatpush.bf16.xpose.msra.mxu0 %v2307
      %2368 = vmatpush.bf16.xpose.msra.mxu0 %v2305
      %2369 = vmatpush.bf16.xpose.msra.mxu0 %v2303
      %2370 = vmatpush.bf16.xpose.msra.mxu0 %v2301
      %2371 = vmatpush.bf16.xpose.msra.mxu0 %v2299
      %2372 = vmatpush.bf16.xpose.msra.mxu0 %v2297
      %2373 = vmatpush.bf16.xpose.msra.mxu0 %v2295
      %2374 = vmatpush.bf16.xpose.msra.mxu0 %v2293
      %2375 = vmatmul.bf16.gmra.mxu0 %v2177
      %v2376 = vpop.f32.mrf.mxu0
      %v2377 = vadd.f32 0.0, %v2376
      %v2378 = vpop.f32.mrf.mxu0
      %2379 = vdwg.mxu0
      %2380 = vmatpush.bf16.xpose.msra.mxu0 %v2308
      %2381 = vmatpush.bf16.xpose.msra.mxu0 %v2306
      %2382 = vmatpush.bf16.xpose.msra.mxu0 %v2304
      %2383 = vmatpush.bf16.xpose.msra.mxu0 %v2302
      %2384 = vmatpush.bf16.xpose.msra.mxu0 %v2300
      %2385 = vmatpush.bf16.xpose.msra.mxu0 %v2298
      %2386 = vmatpush.bf16.xpose.msra.mxu0 %v2296
      %2387 = vmatpush.bf16.xpose.msra.mxu0 %v2294
      %2388 = vmatmul.bf16.gmra.mxu0 %v2178
      %v2389 = vpop.f32.mrf.mxu0
      %v2390 = vadd.f32 %v2377, %v2389
      %v2391 = vpop.f32.mrf.mxu0
      %2392 = vdwg.mxu0
      %v2393 = vadd.f32 %v2139, %v2364
      %v2394 = vadd.f32 %v2140, %v2390
      %s2395 = scalar_lea.vmem %s4, 20
      %v2396 = vld [vmem:[%s2395] sm:$0xf]
      %v2397 = vld [vmem:[#allocation2 + $0x50] sm:$0xff]
      %v2398 = vld [vmem:[#allocation2 + $0x58] sm:$0xff]
      %v2399 = vld [vmem:[#allocation2 + $0x60] sm:$0xff]
      %v2400 = vld [vmem:[#allocation2 + $0x68] sm:$0xff]
      %v2401 = vld [vmem:[#allocation2 + $0x70] sm:$0xff]
      %v2402 = vld [vmem:[#allocation2 + $0x78] sm:$0xff]
      %v2403 = vld [vmem:[#allocation2 + $0x80] sm:$0xff]
      %v2404 = vld [vmem:[#allocation2 + $0x88] sm:$0xff]
      %v2405 = vld [vmem:[#allocation2 + $0x90] sm:$0xff]
      %v2406 = vld [vmem:[#allocation2 + $0x98] sm:$0xff]
      %v2407 = vld [vmem:[#allocation2 + $0xa0] sm:$0xff]
      %v2408 = vld [vmem:[#allocation2 + $0xa8] sm:$0xff]
      %v2409 = vld [vmem:[#allocation2 + $0xb0] sm:$0xff]
      %v2410 = vld [vmem:[#allocation2 + $0xb8] sm:$0xff]
      %v2411 = vld [vmem:[#allocation2 + $0xc0] sm:$0xff]
      %v2412 = vld [vmem:[#allocation2 + $0xc8] sm:$0xff]
      %v2413 = vld [vmem:[#allocation2 + $0xd0] sm:$0xff]
      %v2414 = vld [vmem:[#allocation2 + $0xd8] sm:$0xff]
      %v2415 = vld [vmem:[#allocation2 + $0xe0] sm:$0xff]
      %v2416 = vld [vmem:[#allocation2 + $0xe8] sm:$0xff]
      %v2417 = vld [vmem:[#allocation2 + $0xf0] sm:$0xff]
      %v2418 = vld [vmem:[#allocation2 + $0xf8] sm:$0xff]
      %v2419 = vld [vmem:[#allocation2 + $0x100] sm:$0xff]
      %v2420 = vld [vmem:[#allocation2 + $0x108] sm:$0xff]
      %v2421 = vld [vmem:[#allocation2 + $0x110] sm:$0xff]
      %v2422 = vld [vmem:[#allocation2 + $0x118] sm:$0xff]
      %v2423 = vld [vmem:[#allocation2 + $0x120] sm:$0xff]
      %v2424 = vld [vmem:[#allocation2 + $0x128] sm:$0xff]
      %v2425 = vld [vmem:[#allocation2 + $0x130] sm:$0xff]
      %v2426 = vld [vmem:[#allocation2 + $0x138] sm:$0xff]
      %v2427 = vld [vmem:[#allocation2 + $0x140] sm:$0xff]
      %v2428 = vld [vmem:[#allocation2 + $0x148] sm:$0xff]
      %2430 = vst [vmem:[#allocation1] ss:$4 sm:$0xff] %v2396
      %v2431 = vld.sshfl [vmem:[#allocation1] sm:$0xff pattern:$0x73625140]
      %v2432 = vld.sshfl [vmem:[#allocation1 + $0x8] sm:$0xff pattern:$0x73625140]
      %v2467 = vunpack.c.l.b16 %v2397
      %v2468 = vunpack.c.h.b16 %v2397
      %v2469 = vunpack.c.l.b16 %v2398
      %v2470 = vunpack.c.h.b16 %v2398
      %v2471 = vunpack.c.l.b16 %v2399
      %v2472 = vunpack.c.h.b16 %v2399
      %v2473 = vunpack.c.l.b16 %v2400
      %v2474 = vunpack.c.h.b16 %v2400
      %v2475 = vunpack.c.l.b16 %v2401
      %v2476 = vunpack.c.h.b16 %v2401
      %v2477 = vunpack.c.l.b16 %v2402
      %v2478 = vunpack.c.h.b16 %v2402
      %v2479 = vunpack.c.l.b16 %v2403
      %v2480 = vunpack.c.h.b16 %v2403
      %v2481 = vunpack.c.l.b16 %v2404
      %v2482 = vunpack.c.h.b16 %v2404
      %v2483 = vunpack.c.l.b16 %v2405
      %v2484 = vunpack.c.h.b16 %v2405
      %v2485 = vunpack.c.l.b16 %v2406
      %v2486 = vunpack.c.h.b16 %v2406
      %v2487 = vunpack.c.l.b16 %v2407
      %v2488 = vunpack.c.h.b16 %v2407
      %v2489 = vunpack.c.l.b16 %v2408
      %v2490 = vunpack.c.h.b16 %v2408
      %v2491 = vunpack.c.l.b16 %v2409
      %v2492 = vunpack.c.h.b16 %v2409
      %v2493 = vunpack.c.l.b16 %v2410
      %v2494 = vunpack.c.h.b16 %v2410
      %v2495 = vunpack.c.l.b16 %v2411
      %v2496 = vunpack.c.h.b16 %v2411
      %v2497 = vunpack.c.l.b16 %v2412
      %v2498 = vunpack.c.h.b16 %v2412
      %v2499 = vunpack.c.l.b16 %v2413
      %v2500 = vunpack.c.h.b16 %v2413
      %v2501 = vunpack.c.l.b16 %v2414
      %v2502 = vunpack.c.h.b16 %v2414
      %v2503 = vunpack.c.l.b16 %v2415
      %v2504 = vunpack.c.h.b16 %v2415
      %v2505 = vunpack.c.l.b16 %v2416
      %v2506 = vunpack.c.h.b16 %v2416
      %v2507 = vunpack.c.l.b16 %v2417
      %v2508 = vunpack.c.h.b16 %v2417
      %v2509 = vunpack.c.l.b16 %v2418
      %v2510 = vunpack.c.h.b16 %v2418
      %v2511 = vunpack.c.l.b16 %v2419
      %v2512 = vunpack.c.h.b16 %v2419
      %v2513 = vunpack.c.l.b16 %v2420
      %v2514 = vunpack.c.h.b16 %v2420
      %v2515 = vunpack.c.l.b16 %v2421
      %v2516 = vunpack.c.h.b16 %v2421
      %v2517 = vunpack.c.l.b16 %v2422
      %v2518 = vunpack.c.h.b16 %v2422
      %v2519 = vunpack.c.l.b16 %v2423
      %v2520 = vunpack.c.h.b16 %v2423
      %v2521 = vunpack.c.l.b16 %v2424
      %v2522 = vunpack.c.h.b16 %v2424
      %v2523 = vunpack.c.l.b16 %v2425
      %v2524 = vunpack.c.h.b16 %v2425
      %v2525 = vunpack.c.l.b16 %v2426
      %v2526 = vunpack.c.h.b16 %v2426
      %v2527 = vunpack.c.l.b16 %v2427
      %v2528 = vunpack.c.h.b16 %v2427
      %v2529 = vunpack.c.l.b16 %v2428
      %v2530 = vunpack.c.h.b16 %v2428
      %v2531 = vpack.c.b16 %v2469, %v2467
      %v2532 = vpack.c.b16 %v2470, %v2468
      %v2533 = vpack.c.b16 %v2473, %v2471
      %v2534 = vpack.c.b16 %v2474, %v2472
      %v2535 = vpack.c.b16 %v2477, %v2475
      %v2536 = vpack.c.b16 %v2478, %v2476
      %v2537 = vpack.c.b16 %v2481, %v2479
      %v2538 = vpack.c.b16 %v2482, %v2480
      %v2539 = vpack.c.b16 %v2485, %v2483
      %v2540 = vpack.c.b16 %v2486, %v2484
      %v2541 = vpack.c.b16 %v2489, %v2487
      %v2542 = vpack.c.b16 %v2490, %v2488
      %v2543 = vpack.c.b16 %v2493, %v2491
      %v2544 = vpack.c.b16 %v2494, %v2492
      %v2545 = vpack.c.b16 %v2497, %v2495
      %v2546 = vpack.c.b16 %v2498, %v2496
      %v2547 = vpack.c.b16 %v2501, %v2499
      %v2548 = vpack.c.b16 %v2502, %v2500
      %v2549 = vpack.c.b16 %v2505, %v2503
      %v2550 = vpack.c.b16 %v2506, %v2504
      %v2551 = vpack.c.b16 %v2509, %v2507
      %v2552 = vpack.c.b16 %v2510, %v2508
      %v2553 = vpack.c.b16 %v2513, %v2511
      %v2554 = vpack.c.b16 %v2514, %v2512
      %v2555 = vpack.c.b16 %v2517, %v2515
      %v2556 = vpack.c.b16 %v2518, %v2516
      %v2557 = vpack.c.b16 %v2521, %v2519
      %v2558 = vpack.c.b16 %v2522, %v2520
      %v2559 = vpack.c.b16 %v2525, %v2523
      %v2560 = vpack.c.b16 %v2526, %v2524
      %v2561 = vpack.c.b16 %v2529, %v2527
      %v2562 = vpack.c.b16 %v2530, %v2528
      %2595 = vmatpush.bf16.xpose.msra.mxu0 %v2545
      %2596 = vmatpush.bf16.xpose.msra.mxu0 %v2543
      %2597 = vmatpush.bf16.xpose.msra.mxu0 %v2541
      %2598 = vmatpush.bf16.xpose.msra.mxu0 %v2539
      %2599 = vmatpush.bf16.xpose.msra.mxu0 %v2537
      %2600 = vmatpush.bf16.xpose.msra.mxu0 %v2535
      %2601 = vmatpush.bf16.xpose.msra.mxu0 %v2533
      %2602 = vmatpush.bf16.xpose.msra.mxu0 %v2531
      %2603 = vmatmul.bf16.gmra.mxu0 %v2431
      %v2604 = vpop.f32.mrf.mxu0
      %v2605 = vadd.f32 0.0, %v2604
      %v2606 = vpop.f32.mrf.mxu0
      %2607 = vdwg.mxu0
      %2608 = vmatpush.bf16.xpose.msra.mxu0 %v2546
      %2609 = vmatpush.bf16.xpose.msra.mxu0 %v2544
      %2610 = vmatpush.bf16.xpose.msra.mxu0 %v2542
      %2611 = vmatpush.bf16.xpose.msra.mxu0 %v2540
      %2612 = vmatpush.bf16.xpose.msra.mxu0 %v2538
      %2613 = vmatpush.bf16.xpose.msra.mxu0 %v2536
      %2614 = vmatpush.bf16.xpose.msra.mxu0 %v2534
      %2615 = vmatpush.bf16.xpose.msra.mxu0 %v2532
      %2616 = vmatmul.bf16.gmra.mxu0 %v2432
      %v2617 = vpop.f32.mrf.mxu0
      %v2618 = vadd.f32 %v2605, %v2617
      %v2619 = vpop.f32.mrf.mxu0
      %2620 = vdwg.mxu0
      %2621 = vmatpush.bf16.xpose.msra.mxu0 %v2561
      %2622 = vmatpush.bf16.xpose.msra.mxu0 %v2559
      %2623 = vmatpush.bf16.xpose.msra.mxu0 %v2557
      %2624 = vmatpush.bf16.xpose.msra.mxu0 %v2555
      %2625 = vmatpush.bf16.xpose.msra.mxu0 %v2553
      %2626 = vmatpush.bf16.xpose.msra.mxu0 %v2551
      %2627 = vmatpush.bf16.xpose.msra.mxu0 %v2549
      %2628 = vmatpush.bf16.xpose.msra.mxu0 %v2547
      %2629 = vmatmul.bf16.gmra.mxu0 %v2431
      %v2630 = vpop.f32.mrf.mxu0
      %v2631 = vadd.f32 0.0, %v2630
      %v2632 = vpop.f32.mrf.mxu0
      %2633 = vdwg.mxu0
      %2634 = vmatpush.bf16.xpose.msra.mxu0 %v2562
      %2635 = vmatpush.bf16.xpose.msra.mxu0 %v2560
      %2636 = vmatpush.bf16.xpose.msra.mxu0 %v2558
      %2637 = vmatpush.bf16.xpose.msra.mxu0 %v2556
      %2638 = vmatpush.bf16.xpose.msra.mxu0 %v2554
      %2639 = vmatpush.bf16.xpose.msra.mxu0 %v2552
      %2640 = vmatpush.bf16.xpose.msra.mxu0 %v2550
      %2641 = vmatpush.bf16.xpose.msra.mxu0 %v2548
      %2642 = vmatmul.bf16.gmra.mxu0 %v2432
      %v2643 = vpop.f32.mrf.mxu0
      %v2644 = vadd.f32 %v2631, %v2643
      %v2645 = vpop.f32.mrf.mxu0
      %2646 = vdwg.mxu0
      %v2647 = vadd.f32 %v2393, %v2618
      %v2648 = vadd.f32 %v2394, %v2644
      %s2649 = scalar_lea.vmem %s4, 24
      %v2650 = vld [vmem:[%s2649] sm:$0xf]
      %v2651 = vld [vmem:[#allocation2 + $0x60] sm:$0xff]
      %v2652 = vld [vmem:[#allocation2 + $0x68] sm:$0xff]
      %v2653 = vld [vmem:[#allocation2 + $0x70] sm:$0xff]
      %v2654 = vld [vmem:[#allocation2 + $0x78] sm:$0xff]
      %v2655 = vld [vmem:[#allocation2 + $0x80] sm:$0xff]
      %v2656 = vld [vmem:[#allocation2 + $0x88] sm:$0xff]
      %v2657 = vld [vmem:[#allocation2 + $0x90] sm:$0xff]
      %v2658 = vld [vmem:[#allocation2 + $0x98] sm:$0xff]
      %v2659 = vld [vmem:[#allocation2 + $0xa0] sm:$0xff]
      %v2660 = vld [vmem:[#allocation2 + $0xa8] sm:$0xff]
      %v2661 = vld [vmem:[#allocation2 + $0xb0] sm:$0xff]
      %v2662 = vld [vmem:[#allocation2 + $0xb8] sm:$0xff]
      %v2663 = vld [vmem:[#allocation2 + $0xc0] sm:$0xff]
      %v2664 = vld [vmem:[#allocation2 + $0xc8] sm:$0xff]
      %v2665 = vld [vmem:[#allocation2 + $0xd0] sm:$0xff]
      %v2666 = vld [vmem:[#allocation2 + $0xd8] sm:$0xff]
      %v2667 = vld [vmem:[#allocation2 + $0xe0] sm:$0xff]
      %v2668 = vld [vmem:[#allocation2 + $0xe8] sm:$0xff]
      %v2669 = vld [vmem:[#allocation2 + $0xf0] sm:$0xff]
      %v2670 = vld [vmem:[#allocation2 + $0xf8] sm:$0xff]
      %v2671 = vld [vmem:[#allocation2 + $0x100] sm:$0xff]
      %v2672 = vld [vmem:[#allocation2 + $0x108] sm:$0xff]
      %v2673 = vld [vmem:[#allocation2 + $0x110] sm:$0xff]
      %v2674 = vld [vmem:[#allocation2 + $0x118] sm:$0xff]
      %v2675 = vld [vmem:[#allocation2 + $0x120] sm:$0xff]
      %v2676 = vld [vmem:[#allocation2 + $0x128] sm:$0xff]
      %v2677 = vld [vmem:[#allocation2 + $0x130] sm:$0xff]
      %v2678 = vld [vmem:[#allocation2 + $0x138] sm:$0xff]
      %v2679 = vld [vmem:[#allocation2 + $0x140] sm:$0xff]
      %v2680 = vld [vmem:[#allocation2 + $0x148] sm:$0xff]
      %v2681 = vld [vmem:[#allocation2 + $0x150] sm:$0xff]
      %v2682 = vld [vmem:[#allocation2 + $0x158] sm:$0xff]
      %2684 = vst [vmem:[#allocation1] ss:$4 sm:$0xff] %v2650
      %v2685 = vld.sshfl [vmem:[#allocation1] sm:$0xff pattern:$0x73625140]
      %v2686 = vld.sshfl [vmem:[#allocation1 + $0x8] sm:$0xff pattern:$0x73625140]
      %v2721 = vunpack.c.l.b16 %v2651
      %v2722 = vunpack.c.h.b16 %v2651
      %v2723 = vunpack.c.l.b16 %v2652
      %v2724 = vunpack.c.h.b16 %v2652
      %v2725 = vunpack.c.l.b16 %v2653
      %v2726 = vunpack.c.h.b16 %v2653
      %v2727 = vunpack.c.l.b16 %v2654
      %v2728 = vunpack.c.h.b16 %v2654
      %v2729 = vunpack.c.l.b16 %v2655
      %v2730 = vunpack.c.h.b16 %v2655
      %v2731 = vunpack.c.l.b16 %v2656
      %v2732 = vunpack.c.h.b16 %v2656
      %v2733 = vunpack.c.l.b16 %v2657
      %v2734 = vunpack.c.h.b16 %v2657
      %v2735 = vunpack.c.l.b16 %v2658
      %v2736 = vunpack.c.h.b16 %v2658
      %v2737 = vunpack.c.l.b16 %v2659
      %v2738 = vunpack.c.h.b16 %v2659
      %v2739 = vunpack.c.l.b16 %v2660
      %v2740 = vunpack.c.h.b16 %v2660
      %v2741 = vunpack.c.l.b16 %v2661
      %v2742 = vunpack.c.h.b16 %v2661
      %v2743 = vunpack.c.l.b16 %v2662
      %v2744 = vunpack.c.h.b16 %v2662
      %v2745 = vunpack.c.l.b16 %v2663
      %v2746 = vunpack.c.h.b16 %v2663
      %v2747 = vunpack.c.l.b16 %v2664
      %v2748 = vunpack.c.h.b16 %v2664
      %v2749 = vunpack.c.l.b16 %v2665
      %v2750 = vunpack.c.h.b16 %v2665
      %v2751 = vunpack.c.l.b16 %v2666
      %v2752 = vunpack.c.h.b16 %v2666
      %v2753 = vunpack.c.l.b16 %v2667
      %v2754 = vunpack.c.h.b16 %v2667
      %v2755 = vunpack.c.l.b16 %v2668
      %v2756 = vunpack.c.h.b16 %v2668
      %v2757 = vunpack.c.l.b16 %v2669
      %v2758 = vunpack.c.h.b16 %v2669
      %v2759 = vunpack.c.l.b16 %v2670
      %v2760 = vunpack.c.h.b16 %v2670
      %v2761 = vunpack.c.l.b16 %v2671
      %v2762 = vunpack.c.h.b16 %v2671
      %v2763 = vunpack.c.l.b16 %v2672
      %v2764 = vunpack.c.h.b16 %v2672
      %v2765 = vunpack.c.l.b16 %v2673
      %v2766 = vunpack.c.h.b16 %v2673
      %v2767 = vunpack.c.l.b16 %v2674
      %v2768 = vunpack.c.h.b16 %v2674
      %v2769 = vunpack.c.l.b16 %v2675
      %v2770 = vunpack.c.h.b16 %v2675
      %v2771 = vunpack.c.l.b16 %v2676
      %v2772 = vunpack.c.h.b16 %v2676
      %v2773 = vunpack.c.l.b16 %v2677
      %v2774 = vunpack.c.h.b16 %v2677
      %v2775 = vunpack.c.l.b16 %v2678
      %v2776 = vunpack.c.h.b16 %v2678
      %v2777 = vunpack.c.l.b16 %v2679
      %v2778 = vunpack.c.h.b16 %v2679
      %v2779 = vunpack.c.l.b16 %v2680
      %v2780 = vunpack.c.h.b16 %v2680
      %v2781 = vunpack.c.l.b16 %v2681
      %v2782 = vunpack.c.h.b16 %v2681
      %v2783 = vunpack.c.l.b16 %v2682
      %v2784 = vunpack.c.h.b16 %v2682
      %v2785 = vpack.c.b16 %v2723, %v2721
      %v2786 = vpack.c.b16 %v2724, %v2722
      %v2787 = vpack.c.b16 %v2727, %v2725
      %v2788 = vpack.c.b16 %v2728, %v2726
      %v2789 = vpack.c.b16 %v2731, %v2729
      %v2790 = vpack.c.b16 %v2732, %v2730
      %v2791 = vpack.c.b16 %v2735, %v2733
      %v2792 = vpack.c.b16 %v2736, %v2734
      %v2793 = vpack.c.b16 %v2739, %v2737
      %v2794 = vpack.c.b16 %v2740, %v2738
      %v2795 = vpack.c.b16 %v2743, %v2741
      %v2796 = vpack.c.b16 %v2744, %v2742
      %v2797 = vpack.c.b16 %v2747, %v2745
      %v2798 = vpack.c.b16 %v2748, %v2746
      %v2799 = vpack.c.b16 %v2751, %v2749
      %v2800 = vpack.c.b16 %v2752, %v2750
      %v2801 = vpack.c.b16 %v2755, %v2753
      %v2802 = vpack.c.b16 %v2756, %v2754
      %v2803 = vpack.c.b16 %v2759, %v2757
      %v2804 = vpack.c.b16 %v2760, %v2758
      %v2805 = vpack.c.b16 %v2763, %v2761
      %v2806 = vpack.c.b16 %v2764, %v2762
      %v2807 = vpack.c.b16 %v2767, %v2765
      %v2808 = vpack.c.b16 %v2768, %v2766
      %v2809 = vpack.c.b16 %v2771, %v2769
      %v2810 = vpack.c.b16 %v2772, %v2770
      %v2811 = vpack.c.b16 %v2775, %v2773
      %v2812 = vpack.c.b16 %v2776, %v2774
      %v2813 = vpack.c.b16 %v2779, %v2777
      %v2814 = vpack.c.b16 %v2780, %v2778
      %v2815 = vpack.c.b16 %v2783, %v2781
      %v2816 = vpack.c.b16 %v2784, %v2782
      %2849 = vmatpush.bf16.xpose.msra.mxu0 %v2799
      %2850 = vmatpush.bf16.xpose.msra.mxu0 %v2797
      %2851 = vmatpush.bf16.xpose.msra.mxu0 %v2795
      %2852 = vmatpush.bf16.xpose.msra.mxu0 %v2793
      %2853 = vmatpush.bf16.xpose.msra.mxu0 %v2791
      %2854 = vmatpush.bf16.xpose.msra.mxu0 %v2789
      %2855 = vmatpush.bf16.xpose.msra.mxu0 %v2787
      %2856 = vmatpush.bf16.xpose.msra.mxu0 %v2785
      %2857 = vmatmul.bf16.gmra.mxu0 %v2685
      %v2858 = vpop.f32.mrf.mxu0
      %v2859 = vadd.f32 0.0, %v2858
      %v2860 = vpop.f32.mrf.mxu0
      %2861 = vdwg.mxu0
      %2862 = vmatpush.bf16.xpose.msra.mxu0 %v2800
      %2863 = vmatpush.bf16.xpose.msra.mxu0 %v2798
      %2864 = vmatpush.bf16.xpose.msra.mxu0 %v2796
      %2865 = vmatpush.bf16.xpose.msra.mxu0 %v2794
      %2866 = vmatpush.bf16.xpose.msra.mxu0 %v2792
      %2867 = vmatpush.bf16.xpose.msra.mxu0 %v2790
      %2868 = vmatpush.bf16.xpose.msra.mxu0 %v2788
      %2869 = vmatpush.bf16.xpose.msra.mxu0 %v2786
      %2870 = vmatmul.bf16.gmra.mxu0 %v2686
      %v2871 = vpop.f32.mrf.mxu0
      %v2872 = vadd.f32 %v2859, %v2871
      %v2873 = vpop.f32.mrf.mxu0
      %2874 = vdwg.mxu0
      %2875 = vmatpush.bf16.xpose.msra.mxu0 %v2815
      %2876 = vmatpush.bf16.xpose.msra.mxu0 %v2813
      %2877 = vmatpush.bf16.xpose.msra.mxu0 %v2811
      %2878 = vmatpush.bf16.xpose.msra.mxu0 %v2809
      %2879 = vmatpush.bf16.xpose.msra.mxu0 %v2807
      %2880 = vmatpush.bf16.xpose.msra.mxu0 %v2805
      %2881 = vmatpush.bf16.xpose.msra.mxu0 %v2803
      %2882 = vmatpush.bf16.xpose.msra.mxu0 %v2801
      %2883 = vmatmul.bf16.gmra.mxu0 %v2685
      %v2884 = vpop.f32.mrf.mxu0
      %v2885 = vadd.f32 0.0, %v2884
      %v2886 = vpop.f32.mrf.mxu0
      %2887 = vdwg.mxu0
      %2888 = vmatpush.bf16.xpose.msra.mxu0 %v2816
      %2889 = vmatpush.bf16.xpose.msra.mxu0 %v2814
      %2890 = vmatpush.bf16.xpose.msra.mxu0 %v2812
      %2891 = vmatpush.bf16.xpose.msra.mxu0 %v2810
      %2892 = vmatpush.bf16.xpose.msra.mxu0 %v2808
      %2893 = vmatpush.bf16.xpose.msra.mxu0 %v2806
      %2894 = vmatpush.bf16.xpose.msra.mxu0 %v2804
      %2895 = vmatpush.bf16.xpose.msra.mxu0 %v2802
      %2896 = vmatmul.bf16.gmra.mxu0 %v2686
      %v2897 = vpop.f32.mrf.mxu0
      %v2898 = vadd.f32 %v2885, %v2897
      %v2899 = vpop.f32.mrf.mxu0
      %2900 = vdwg.mxu0
      %v2901 = vadd.f32 %v2647, %v2872
      %v2902 = vadd.f32 %v2648, %v2898
      %v2903 = vld [vmem:[%s5] sm:$0xf]
      %v2904 = vld [vmem:[#allocation3] sm:$0xff]
      %v2905 = vld [vmem:[#allocation3 + $0x8] sm:$0xff]
      %v2906 = vld [vmem:[#allocation3 + $0x10] sm:$0xff]
      %v2907 = vld [vmem:[#allocation3 + $0x18] sm:$0xff]
      %v2908 = vld [vmem:[#allocation3 + $0x20] sm:$0xff]
      %v2909 = vld [vmem:[#allocation3 + $0x28] sm:$0xff]
      %v2910 = vld [vmem:[#allocation3 + $0x30] sm:$0xff]
      %v2911 = vld [vmem:[#allocation3 + $0x38] sm:$0xff]
      %v2912 = vld [vmem:[#allocation3 + $0x40] sm:$0xff]
      %v2913 = vld [vmem:[#allocation3 + $0x48] sm:$0xff]
      %v2914 = vld [vmem:[#allocation3 + $0x50] sm:$0xff]
      %v2915 = vld [vmem:[#allocation3 + $0x58] sm:$0xff]
      %v2916 = vld [vmem:[#allocation3 + $0x60] sm:$0xff]
      %v2917 = vld [vmem:[#allocation3 + $0x68] sm:$0xff]
      %v2918 = vld [vmem:[#allocation3 + $0x70] sm:$0xff]
      %v2919 = vld [vmem:[#allocation3 + $0x78] sm:$0xff]
      %v2920 = vld [vmem:[#allocation3 + $0x80] sm:$0xff]
      %v2921 = vld [vmem:[#allocation3 + $0x88] sm:$0xff]
      %v2922 = vld [vmem:[#allocation3 + $0x90] sm:$0xff]
      %v2923 = vld [vmem:[#allocation3 + $0x98] sm:$0xff]
      %v2924 = vld [vmem:[#allocation3 + $0xa0] sm:$0xff]
      %v2925 = vld [vmem:[#allocation3 + $0xa8] sm:$0xff]
      %v2926 = vld [vmem:[#allocation3 + $0xb0] sm:$0xff]
      %v2927 = vld [vmem:[#allocation3 + $0xb8] sm:$0xff]
      %v2928 = vld [vmem:[#allocation3 + $0xc0] sm:$0xff]
      %v2929 = vld [vmem:[#allocation3 + $0xc8] sm:$0xff]
      %v2930 = vld [vmem:[#allocation3 + $0xd0] sm:$0xff]
      %v2931 = vld [vmem:[#allocation3 + $0xd8] sm:$0xff]
      %v2932 = vld [vmem:[#allocation3 + $0xe0] sm:$0xff]
      %v2933 = vld [vmem:[#allocation3 + $0xe8] sm:$0xff]
      %v2934 = vld [vmem:[#allocation3 + $0xf0] sm:$0xff]
      %v2935 = vld [vmem:[#allocation3 + $0xf8] sm:$0xff]
      %s2936 = scalar_lea.vmem %s5, 4
      %v2937 = vld [vmem:[%s2936] sm:$0xf]
      %v2938 = vld [vmem:[#allocation3 + $0x100] sm:$0xff]
      %v2939 = vld [vmem:[#allocation3 + $0x108] sm:$0xff]
      %2941 = vst [vmem:[#allocation1] ss:$4 sm:$0xff] %v2937
      %v2942 = vld.sshfl [vmem:[#allocation1] sm:$0xff pattern:$0x73625140]
      %v2943 = vld.sshfl [vmem:[#allocation1 + $0x8] sm:$0xff pattern:$0x73625140]
      %v2978 = vunpack.c.l.b16 %v2906
      %v2979 = vunpack.c.h.b16 %v2906
      %v2980 = vunpack.c.l.b16 %v2907
      %v2981 = vunpack.c.h.b16 %v2907
      %v2982 = vunpack.c.l.b16 %v2908
      %v2983 = vunpack.c.h.b16 %v2908
      %v2984 = vunpack.c.l.b16 %v2909
      %v2985 = vunpack.c.h.b16 %v2909
      %v2986 = vunpack.c.l.b16 %v2910
      %v2987 = vunpack.c.h.b16 %v2910
      %v2988 = vunpack.c.l.b16 %v2911
      %v2989 = vunpack.c.h.b16 %v2911
      %v2990 = vunpack.c.l.b16 %v2912
      %v2991 = vunpack.c.h.b16 %v2912
      %v2992 = vunpack.c.l.b16 %v2913
      %v2993 = vunpack.c.h.b16 %v2913
      %v2994 = vunpack.c.l.b16 %v2914
      %v2995 = vunpack.c.h.b16 %v2914
      %v2996 = vunpack.c.l.b16 %v2915
      %v2997 = vunpack.c.h.b16 %v2915
      %v2998 = vunpack.c.l.b16 %v2916
      %v2999 = vunpack.c.h.b16 %v2916
      %v3000 = vunpack.c.l.b16 %v2917
      %v3001 = vunpack.c.h.b16 %v2917
      %v3002 = vunpack.c.l.b16 %v2918
      %v3003 = vunpack.c.h.b16 %v2918
      %v3004 = vunpack.c.l.b16 %v2919
      %v3005 = vunpack.c.h.b16 %v2919
      %v3006 = vunpack.c.l.b16 %v2920
      %v3007 = vunpack.c.h.b16 %v2920
      %v3008 = vunpack.c.l.b16 %v2921
      %v3009 = vunpack.c.h.b16 %v2921
      %v3010 = vunpack.c.l.b16 %v2922
      %v3011 = vunpack.c.h.b16 %v2922
      %v3012 = vunpack.c.l.b16 %v2923
      %v3013 = vunpack.c.h.b16 %v2923
      %v3014 = vunpack.c.l.b16 %v2924
      %v3015 = vunpack.c.h.b16 %v2924
      %v3016 = vunpack.c.l.b16 %v2925
      %v3017 = vunpack.c.h.b16 %v2925
      %v3018 = vunpack.c.l.b16 %v2926
      %v3019 = vunpack.c.h.b16 %v2926
      %v3020 = vunpack.c.l.b16 %v2927
      %v3021 = vunpack.c.h.b16 %v2927
      %v3022 = vunpack.c.l.b16 %v2928
      %v3023 = vunpack.c.h.b16 %v2928
      %v3024 = vunpack.c.l.b16 %v2929
      %v3025 = vunpack.c.h.b16 %v2929
      %v3026 = vunpack.c.l.b16 %v2930
      %v3027 = vunpack.c.h.b16 %v2930
      %v3028 = vunpack.c.l.b16 %v2931
      %v3029 = vunpack.c.h.b16 %v2931
      %v3030 = vunpack.c.l.b16 %v2932
      %v3031 = vunpack.c.h.b16 %v2932
      %v3032 = vunpack.c.l.b16 %v2933
      %v3033 = vunpack.c.h.b16 %v2933
      %v3034 = vunpack.c.l.b16 %v2934
      %v3035 = vunpack.c.h.b16 %v2934
      %v3036 = vunpack.c.l.b16 %v2935
      %v3037 = vunpack.c.h.b16 %v2935
      %v3038 = vunpack.c.l.b16 %v2938
      %v3039 = vunpack.c.h.b16 %v2938
      %v3040 = vunpack.c.l.b16 %v2939
      %v3041 = vunpack.c.h.b16 %v2939
      %v3042 = vpack.c.b16 %v2980, %v2978
      %v3043 = vpack.c.b16 %v2981, %v2979
      %v3044 = vpack.c.b16 %v2984, %v2982
      %v3045 = vpack.c.b16 %v2985, %v2983
      %v3046 = vpack.c.b16 %v2988, %v2986
      %v3047 = vpack.c.b16 %v2989, %v2987
      %v3048 = vpack.c.b16 %v2992, %v2990
      %v3049 = vpack.c.b16 %v2993, %v2991
      %v3050 = vpack.c.b16 %v2996, %v2994
      %v3051 = vpack.c.b16 %v2997, %v2995
      %v3052 = vpack.c.b16 %v3000, %v2998
      %v3053 = vpack.c.b16 %v3001, %v2999
      %v3054 = vpack.c.b16 %v3004, %v3002
      %v3055 = vpack.c.b16 %v3005, %v3003
      %v3056 = vpack.c.b16 %v3008, %v3006
      %v3057 = vpack.c.b16 %v3009, %v3007
      %v3058 = vpack.c.b16 %v3012, %v3010
      %v3059 = vpack.c.b16 %v3013, %v3011
      %v3060 = vpack.c.b16 %v3016, %v3014
      %v3061 = vpack.c.b16 %v3017, %v3015
      %v3062 = vpack.c.b16 %v3020, %v3018
      %v3063 = vpack.c.b16 %v3021, %v3019
      %v3064 = vpack.c.b16 %v3024, %v3022
      %v3065 = vpack.c.b16 %v3025, %v3023
      %v3066 = vpack.c.b16 %v3028, %v3026
      %v3067 = vpack.c.b16 %v3029, %v3027
      %v3068 = vpack.c.b16 %v3032, %v3030
      %v3069 = vpack.c.b16 %v3033, %v3031
      %v3070 = vpack.c.b16 %v3036, %v3034
      %v3071 = vpack.c.b16 %v3037, %v3035
      %v3072 = vpack.c.b16 %v3040, %v3038
      %v3073 = vpack.c.b16 %v3041, %v3039
      %3106 = vmatpush.bf16.xpose.msra.mxu0 %v3056
      %3107 = vmatpush.bf16.xpose.msra.mxu0 %v3054
      %3108 = vmatpush.bf16.xpose.msra.mxu0 %v3052
      %3109 = vmatpush.bf16.xpose.msra.mxu0 %v3050
      %3110 = vmatpush.bf16.xpose.msra.mxu0 %v3048
      %3111 = vmatpush.bf16.xpose.msra.mxu0 %v3046
      %3112 = vmatpush.bf16.xpose.msra.mxu0 %v3044
      %3113 = vmatpush.bf16.xpose.msra.mxu0 %v3042
      %3114 = vmatmul.bf16.gmra.mxu0 %v2942
      %v3115 = vpop.f32.mrf.mxu0
      %v3116 = vadd.f32 0.0, %v3115
      %v3117 = vpop.f32.mrf.mxu0
      %3118 = vdwg.mxu0
      %3119 = vmatpush.bf16.xpose.msra.mxu0 %v3057
      %3120 = vmatpush.bf16.xpose.msra.mxu0 %v3055
      %3121 = vmatpush.bf16.xpose.msra.mxu0 %v3053
      %3122 = vmatpush.bf16.xpose.msra.mxu0 %v3051
      %3123 = vmatpush.bf16.xpose.msra.mxu0 %v3049
      %3124 = vmatpush.bf16.xpose.msra.mxu0 %v3047
      %3125 = vmatpush.bf16.xpose.msra.mxu0 %v3045
      %3126 = vmatpush.bf16.xpose.msra.mxu0 %v3043
      %3127 = vmatmul.bf16.gmra.mxu0 %v2943
      %v3128 = vpop.f32.mrf.mxu0
      %v3129 = vadd.f32 %v3116, %v3128
      %v3130 = vpop.f32.mrf.mxu0
      %3131 = vdwg.mxu0
      %3132 = vmatpush.bf16.xpose.msra.mxu0 %v3072
      %3133 = vmatpush.bf16.xpose.msra.mxu0 %v3070
      %3134 = vmatpush.bf16.xpose.msra.mxu0 %v3068
      %3135 = vmatpush.bf16.xpose.msra.mxu0 %v3066
      %3136 = vmatpush.bf16.xpose.msra.mxu0 %v3064
      %3137 = vmatpush.bf16.xpose.msra.mxu0 %v3062
      %3138 = vmatpush.bf16.xpose.msra.mxu0 %v3060
      %3139 = vmatpush.bf16.xpose.msra.mxu0 %v3058
      %3140 = vmatmul.bf16.gmra.mxu0 %v2942
      %v3141 = vpop.f32.mrf.mxu0
      %v3142 = vadd.f32 0.0, %v3141
      %v3143 = vpop.f32.mrf.mxu0
      %3144 = vdwg.mxu0
      %3145 = vmatpush.bf16.xpose.msra.mxu0 %v3073
      %3146 = vmatpush.bf16.xpose.msra.mxu0 %v3071
      %3147 = vmatpush.bf16.xpose.msra.mxu0 %v3069
      %3148 = vmatpush.bf16.xpose.msra.mxu0 %v3067
      %3149 = vmatpush.bf16.xpose.msra.mxu0 %v3065
      %3150 = vmatpush.bf16.xpose.msra.mxu0 %v3063
      %3151 = vmatpush.bf16.xpose.msra.mxu0 %v3061
      %3152 = vmatpush.bf16.xpose.msra.mxu0 %v3059
      %3153 = vmatmul.bf16.gmra.mxu0 %v2943
      %v3154 = vpop.f32.mrf.mxu0
      %v3155 = vadd.f32 %v3142, %v3154
      %v3156 = vpop.f32.mrf.mxu0
      %3157 = vdwg.mxu0
      %3159 = vst [vmem:[#allocation1] ss:$4 sm:$0xff] %v2903
      %v3160 = vld.sshfl [vmem:[#allocation1] sm:$0xff pattern:$0x73625140]
      %v3161 = vld.sshfl [vmem:[#allocation1 + $0x8] sm:$0xff pattern:$0x73625140]
      %v3166 = vunpack.c.l.b16 %v2904
      %v3167 = vunpack.c.h.b16 %v2904
      %v3168 = vunpack.c.l.b16 %v2905
      %v3169 = vunpack.c.h.b16 %v2905
      %v3170 = vpack.c.b16 %v3168, %v3166
      %v3171 = vpack.c.b16 %v3169, %v3167
      %3174 = vmatpush.bf16.xpose.msra.mxu0 %v3054
      %3175 = vmatpush.bf16.xpose.msra.mxu0 %v3052
      %3176 = vmatpush.bf16.xpose.msra.mxu0 %v3050
      %3177 = vmatpush.bf16.xpose.msra.mxu0 %v3048
      %3178 = vmatpush.bf16.xpose.msra.mxu0 %v3046
      %3179 = vmatpush.bf16.xpose.msra.mxu0 %v3044
      %3180 = vmatpush.bf16.xpose.msra.mxu0 %v3042
      %3181 = vmatpush.bf16.xpose.msra.mxu0 %v3170
      %3182 = vmatmul.bf16.gmra.mxu0 %v3160
      %v3183 = vpop.f32.mrf.mxu0
      %v3184 = vadd.f32 %v3129, %v3183
      %v3185 = vpop.f32.mrf.mxu0
      %3186 = vdwg.mxu0
      %3187 = vmatpush.bf16.xpose.msra.mxu0 %v3055
      %3188 = vmatpush.bf16.xpose.msra.mxu0 %v3053
      %3189 = vmatpush.bf16.xpose.msra.mxu0 %v3051
      %3190 = vmatpush.bf16.xpose.msra.mxu0 %v3049
      %3191 = vmatpush.bf16.xpose.msra.mxu0 %v3047
      %3192 = vmatpush.bf16.xpose.msra.mxu0 %v3045
      %3193 = vmatpush.bf16.xpose.msra.mxu0 %v3043
      %3194 = vmatpush.bf16.xpose.msra.mxu0 %v3171
      %3195 = vmatmul.bf16.gmra.mxu0 %v3161
      %v3196 = vpop.f32.mrf.mxu0
      %v3197 = vadd.f32 %v3184, %v3196
      %v3198 = vpop.f32.mrf.mxu0
      %3199 = vdwg.mxu0
      %3200 = vmatpush.bf16.xpose.msra.mxu0 %v3070
      %3201 = vmatpush.bf16.xpose.msra.mxu0 %v3068
      %3202 = vmatpush.bf16.xpose.msra.mxu0 %v3066
      %3203 = vmatpush.bf16.xpose.msra.mxu0 %v3064
      %3204 = vmatpush.bf16.xpose.msra.mxu0 %v3062
      %3205 = vmatpush.bf16.xpose.msra.mxu0 %v3060
      %3206 = vmatpush.bf16.xpose.msra.mxu0 %v3058
      %3207 = vmatpush.bf16.xpose.msra.mxu0 %v3056
      %3208 = vmatmul.bf16.gmra.mxu0 %v3160
      %v3209 = vpop.f32.mrf.mxu0
      %v3210 = vadd.f32 %v3155, %v3209
      %v3211 = vpop.f32.mrf.mxu0
      %3212 = vdwg.mxu0
      %3213 = vmatpush.bf16.xpose.msra.mxu0 %v3071
      %3214 = vmatpush.bf16.xpose.msra.mxu0 %v3069
      %3215 = vmatpush.bf16.xpose.msra.mxu0 %v3067
      %3216 = vmatpush.bf16.xpose.msra.mxu0 %v3065
      %3217 = vmatpush.bf16.xpose.msra.mxu0 %v3063
      %3218 = vmatpush.bf16.xpose.msra.mxu0 %v3061
      %3219 = vmatpush.bf16.xpose.msra.mxu0 %v3059
      %3220 = vmatpush.bf16.xpose.msra.mxu0 %v3057
      %3221 = vmatmul.bf16.gmra.mxu0 %v3161
      %v3222 = vpop.f32.mrf.mxu0
      %v3223 = vadd.f32 %v3210, %v3222
      %v3224 = vpop.f32.mrf.mxu0
      %3225 = vdwg.mxu0
      %s3226 = scalar_lea.vmem %s5, 8
      %v3227 = vld [vmem:[%s3226] sm:$0xf]
      %v3228 = vld [vmem:[#allocation3 + $0x20] sm:$0xff]
      %v3229 = vld [vmem:[#allocation3 + $0x28] sm:$0xff]
      %v3230 = vld [vmem:[#allocation3 + $0x30] sm:$0xff]
      %v3231 = vld [vmem:[#allocation3 + $0x38] sm:$0xff]
      %v3232 = vld [vmem:[#allocation3 + $0x40] sm:$0xff]
      %v3233 = vld [vmem:[#allocation3 + $0x48] sm:$0xff]
      %v3234 = vld [vmem:[#allocation3 + $0x50] sm:$0xff]
      %v3235 = vld [vmem:[#allocation3 + $0x58] sm:$0xff]
      %v3236 = vld [vmem:[#allocation3 + $0x60] sm:$0xff]
      %v3237 = vld [vmem:[#allocation3 + $0x68] sm:$0xff]
      %v3238 = vld [vmem:[#allocation3 + $0x70] sm:$0xff]
      %v3239 = vld [vmem:[#allocation3 + $0x78] sm:$0xff]
      %v3240 = vld [vmem:[#allocation3 + $0x80] sm:$0xff]
      %v3241 = vld [vmem:[#allocation3 + $0x88] sm:$0xff]
      %v3242 = vld [vmem:[#allocation3 + $0x90] sm:$0xff]
      %v3243 = vld [vmem:[#allocation3 + $0x98] sm:$0xff]
      %v3244 = vld [vmem:[#allocation3 + $0xa0] sm:$0xff]
      %v3245 = vld [vmem:[#allocation3 + $0xa8] sm:$0xff]
      %v3246 = vld [vmem:[#allocation3 + $0xb0] sm:$0xff]
      %v3247 = vld [vmem:[#allocation3 + $0xb8] sm:$0xff]
      %v3248 = vld [vmem:[#allocation3 + $0xc0] sm:$0xff]
      %v3249 = vld [vmem:[#allocation3 + $0xc8] sm:$0xff]
      %v3250 = vld [vmem:[#allocation3 + $0xd0] sm:$0xff]
      %v3251 = vld [vmem:[#allocation3 + $0xd8] sm:$0xff]
      %v3252 = vld [vmem:[#allocation3 + $0xe0] sm:$0xff]
      %v3253 = vld [vmem:[#allocation3 + $0xe8] sm:$0xff]
      %v3254 = vld [vmem:[#allocation3 + $0xf0] sm:$0xff]
      %v3255 = vld [vmem:[#allocation3 + $0xf8] sm:$0xff]
      %v3256 = vld [vmem:[#allocation3 + $0x100] sm:$0xff]
      %v3257 = vld [vmem:[#allocation3 + $0x108] sm:$0xff]
      %v3258 = vld [vmem:[#allocation3 + $0x110] sm:$0xff]
      %v3259 = vld [vmem:[#allocation3 + $0x118] sm:$0xff]
      %3261 = vst [vmem:[#allocation1] ss:$4 sm:$0xff] %v3227
      %v3262 = vld.sshfl [vmem:[#allocation1] sm:$0xff pattern:$0x73625140]
      %v3263 = vld.sshfl [vmem:[#allocation1 + $0x8] sm:$0xff pattern:$0x73625140]
      %v3298 = vunpack.c.l.b16 %v3228
      %v3299 = vunpack.c.h.b16 %v3228
      %v3300 = vunpack.c.l.b16 %v3229
      %v3301 = vunpack.c.h.b16 %v3229
      %v3302 = vunpack.c.l.b16 %v3230
      %v3303 = vunpack.c.h.b16 %v3230
      %v3304 = vunpack.c.l.b16 %v3231
      %v3305 = vunpack.c.h.b16 %v3231
      %v3306 = vunpack.c.l.b16 %v3232
      %v3307 = vunpack.c.h.b16 %v3232
      %v3308 = vunpack.c.l.b16 %v3233
      %v3309 = vunpack.c.h.b16 %v3233
      %v3310 = vunpack.c.l.b16 %v3234
      %v3311 = vunpack.c.h.b16 %v3234
      %v3312 = vunpack.c.l.b16 %v3235
      %v3313 = vunpack.c.h.b16 %v3235
      %v3314 = vunpack.c.l.b16 %v3236
      %v3315 = vunpack.c.h.b16 %v3236
      %v3316 = vunpack.c.l.b16 %v3237
      %v3317 = vunpack.c.h.b16 %v3237
      %v3318 = vunpack.c.l.b16 %v3238
      %v3319 = vunpack.c.h.b16 %v3238
      %v3320 = vunpack.c.l.b16 %v3239
      %v3321 = vunpack.c.h.b16 %v3239
      %v3322 = vunpack.c.l.b16 %v3240
      %v3323 = vunpack.c.h.b16 %v3240
      %v3324 = vunpack.c.l.b16 %v3241
      %v3325 = vunpack.c.h.b16 %v3241
      %v3326 = vunpack.c.l.b16 %v3242
      %v3327 = vunpack.c.h.b16 %v3242
      %v3328 = vunpack.c.l.b16 %v3243
      %v3329 = vunpack.c.h.b16 %v3243
      %v3330 = vunpack.c.l.b16 %v3244
      %v3331 = vunpack.c.h.b16 %v3244
      %v3332 = vunpack.c.l.b16 %v3245
      %v3333 = vunpack.c.h.b16 %v3245
      %v3334 = vunpack.c.l.b16 %v3246
      %v3335 = vunpack.c.h.b16 %v3246
      %v3336 = vunpack.c.l.b16 %v3247
      %v3337 = vunpack.c.h.b16 %v3247
      %v3338 = vunpack.c.l.b16 %v3248
      %v3339 = vunpack.c.h.b16 %v3248
      %v3340 = vunpack.c.l.b16 %v3249
      %v3341 = vunpack.c.h.b16 %v3249
      %v3342 = vunpack.c.l.b16 %v3250
      %v3343 = vunpack.c.h.b16 %v3250
      %v3344 = vunpack.c.l.b16 %v3251
      %v3345 = vunpack.c.h.b16 %v3251
      %v3346 = vunpack.c.l.b16 %v3252
      %v3347 = vunpack.c.h.b16 %v3252
      %v3348 = vunpack.c.l.b16 %v3253
      %v3349 = vunpack.c.h.b16 %v3253
      %v3350 = vunpack.c.l.b16 %v3254
      %v3351 = vunpack.c.h.b16 %v3254
      %v3352 = vunpack.c.l.b16 %v3255
      %v3353 = vunpack.c.h.b16 %v3255
      %v3354 = vunpack.c.l.b16 %v3256
      %v3355 = vunpack.c.h.b16 %v3256
      %v3356 = vunpack.c.l.b16 %v3257
      %v3357 = vunpack.c.h.b16 %v3257
      %v3358 = vunpack.c.l.b16 %v3258
      %v3359 = vunpack.c.h.b16 %v3258
      %v3360 = vunpack.c.l.b16 %v3259
      %v3361 = vunpack.c.h.b16 %v3259
      %v3362 = vpack.c.b16 %v3300, %v3298
      %v3363 = vpack.c.b16 %v3301, %v3299
      %v3364 = vpack.c.b16 %v3304, %v3302
      %v3365 = vpack.c.b16 %v3305, %v3303
      %v3366 = vpack.c.b16 %v3308, %v3306
      %v3367 = vpack.c.b16 %v3309, %v3307
      %v3368 = vpack.c.b16 %v3312, %v3310
      %v3369 = vpack.c.b16 %v3313, %v3311
      %v3370 = vpack.c.b16 %v3316, %v3314
      %v3371 = vpack.c.b16 %v3317, %v3315
      %v3372 = vpack.c.b16 %v3320, %v3318
      %v3373 = vpack.c.b16 %v3321, %v3319
      %v3374 = vpack.c.b16 %v3324, %v3322
      %v3375 = vpack.c.b16 %v3325, %v3323
      %v3376 = vpack.c.b16 %v3328, %v3326
      %v3377 = vpack.c.b16 %v3329, %v3327
      %v3378 = vpack.c.b16 %v3332, %v3330
      %v3379 = vpack.c.b16 %v3333, %v3331
      %v3380 = vpack.c.b16 %v3336, %v3334
      %v3381 = vpack.c.b16 %v3337, %v3335
      %v3382 = vpack.c.b16 %v3340, %v3338
      %v3383 = vpack.c.b16 %v3341, %v3339
      %v3384 = vpack.c.b16 %v3344, %v3342
      %v3385 = vpack.c.b16 %v3345, %v3343
      %v3386 = vpack.c.b16 %v3348, %v3346
      %v3387 = vpack.c.b16 %v3349, %v3347
      %v3388 = vpack.c.b16 %v3352, %v3350
      %v3389 = vpack.c.b16 %v3353, %v3351
      %v3390 = vpack.c.b16 %v3356, %v3354
      %v3391 = vpack.c.b16 %v3357, %v3355
      %v3392 = vpack.c.b16 %v3360, %v3358
      %v3393 = vpack.c.b16 %v3361, %v3359
      %3426 = vmatpush.bf16.xpose.msra.mxu0 %v3376
      %3427 = vmatpush.bf16.xpose.msra.mxu0 %v3374
      %3428 = vmatpush.bf16.xpose.msra.mxu0 %v3372
      %3429 = vmatpush.bf16.xpose.msra.mxu0 %v3370
      %3430 = vmatpush.bf16.xpose.msra.mxu0 %v3368
      %3431 = vmatpush.bf16.xpose.msra.mxu0 %v3366
      %3432 = vmatpush.bf16.xpose.msra.mxu0 %v3364
      %3433 = vmatpush.bf16.xpose.msra.mxu0 %v3362
      %3434 = vmatmul.bf16.gmra.mxu0 %v3262
      %v3435 = vpop.f32.mrf.mxu0
      %v3436 = vadd.f32 0.0, %v3435
      %v3437 = vpop.f32.mrf.mxu0
      %3438 = vdwg.mxu0
      %3439 = vmatpush.bf16.xpose.msra.mxu0 %v3377
      %3440 = vmatpush.bf16.xpose.msra.mxu0 %v3375
      %3441 = vmatpush.bf16.xpose.msra.mxu0 %v3373
      %3442 = vmatpush.bf16.xpose.msra.mxu0 %v3371
      %3443 = vmatpush.bf16.xpose.msra.mxu0 %v3369
      %3444 = vmatpush.bf16.xpose.msra.mxu0 %v3367
      %3445 = vmatpush.bf16.xpose.msra.mxu0 %v3365
      %3446 = vmatpush.bf16.xpose.msra.mxu0 %v3363
      %3447 = vmatmul.bf16.gmra.mxu0 %v3263
      %v3448 = vpop.f32.mrf.mxu0
      %v3449 = vadd.f32 %v3436, %v3448
      %v3450 = vpop.f32.mrf.mxu0
      %3451 = vdwg.mxu0
      %3452 = vmatpush.bf16.xpose.msra.mxu0 %v3392
      %3453 = vmatpush.bf16.xpose.msra.mxu0 %v3390
      %3454 = vmatpush.bf16.xpose.msra.mxu0 %v3388
      %3455 = vmatpush.bf16.xpose.msra.mxu0 %v3386
      %3456 = vmatpush.bf16.xpose.msra.mxu0 %v3384
      %3457 = vmatpush.bf16.xpose.msra.mxu0 %v3382
      %3458 = vmatpush.bf16.xpose.msra.mxu0 %v3380
      %3459 = vmatpush.bf16.xpose.msra.mxu0 %v3378
      %3460 = vmatmul.bf16.gmra.mxu0 %v3262
      %v3461 = vpop.f32.mrf.mxu0
      %v3462 = vadd.f32 0.0, %v3461
      %v3463 = vpop.f32.mrf.mxu0
      %3464 = vdwg.mxu0
      %3465 = vmatpush.bf16.xpose.msra.mxu0 %v3393
      %3466 = vmatpush.bf16.xpose.msra.mxu0 %v3391
      %3467 = vmatpush.bf16.xpose.msra.mxu0 %v3389
      %3468 = vmatpush.bf16.xpose.msra.mxu0 %v3387
      %3469 = vmatpush.bf16.xpose.msra.mxu0 %v3385
      %3470 = vmatpush.bf16.xpose.msra.mxu0 %v3383
      %3471 = vmatpush.bf16.xpose.msra.mxu0 %v3381
      %3472 = vmatpush.bf16.xpose.msra.mxu0 %v3379
      %3473 = vmatmul.bf16.gmra.mxu0 %v3263
      %v3474 = vpop.f32.mrf.mxu0
      %v3475 = vadd.f32 %v3462, %v3474
      %v3476 = vpop.f32.mrf.mxu0
      %3477 = vdwg.mxu0
      %v3478 = vadd.f32 %v3197, %v3449
      %v3479 = vadd.f32 %v3223, %v3475
      %s3480 = scalar_lea.vmem %s5, 12
      %v3481 = vld [vmem:[%s3480] sm:$0xf]
      %v3482 = vld [vmem:[#allocation3 + $0x30] sm:$0xff]
      %v3483 = vld [vmem:[#allocation3 + $0x38] sm:$0xff]
      %v3484 = vld [vmem:[#allocation3 + $0x40] sm:$0xff]
      %v3485 = vld [vmem:[#allocation3 + $0x48] sm:$0xff]
      %v3486 = vld [vmem:[#allocation3 + $0x50] sm:$0xff]
      %v3487 = vld [vmem:[#allocation3 + $0x58] sm:$0xff]
      %v3488 = vld [vmem:[#allocation3 + $0x60] sm:$0xff]
      %v3489 = vld [vmem:[#allocation3 + $0x68] sm:$0xff]
      %v3490 = vld [vmem:[#allocation3 + $0x70] sm:$0xff]
      %v3491 = vld [vmem:[#allocation3 + $0x78] sm:$0xff]
      %v3492 = vld [vmem:[#allocation3 + $0x80] sm:$0xff]
      %v3493 = vld [vmem:[#allocation3 + $0x88] sm:$0xff]
      %v3494 = vld [vmem:[#allocation3 + $0x90] sm:$0xff]
      %v3495 = vld [vmem:[#allocation3 + $0x98] sm:$0xff]
      %v3496 = vld [vmem:[#allocation3 + $0xa0] sm:$0xff]
      %v3497 = vld [vmem:[#allocation3 + $0xa8] sm:$0xff]
      %v3498 = vld [vmem:[#allocation3 + $0xb0] sm:$0xff]
      %v3499 = vld [vmem:[#allocation3 + $0xb8] sm:$0xff]
      %v3500 = vld [vmem:[#allocation3 + $0xc0] sm:$0xff]
      %v3501 = vld [vmem:[#allocation3 + $0xc8] sm:$0xff]
      %v3502 = vld [vmem:[#allocation3 + $0xd0] sm:$0xff]
      %v3503 = vld [vmem:[#allocation3 + $0xd8] sm:$0xff]
      %v3504 = vld [vmem:[#allocation3 + $0xe0] sm:$0xff]
      %v3505 = vld [vmem:[#allocation3 + $0xe8] sm:$0xff]
      %v3506 = vld [vmem:[#allocation3 + $0xf0] sm:$0xff]
      %v3507 = vld [vmem:[#allocation3 + $0xf8] sm:$0xff]
      %v3508 = vld [vmem:[#allocation3 + $0x100] sm:$0xff]
      %v3509 = vld [vmem:[#allocation3 + $0x108] sm:$0xff]
      %v3510 = vld [vmem:[#allocation3 + $0x110] sm:$0xff]
      %v3511 = vld [vmem:[#allocation3 + $0x118] sm:$0xff]
      %v3512 = vld [vmem:[#allocation3 + $0x120] sm:$0xff]
      %v3513 = vld [vmem:[#allocation3 + $0x128] sm:$0xff]
      %3515 = vst [vmem:[#allocation1] ss:$4 sm:$0xff] %v3481
      %v3516 = vld.sshfl [vmem:[#allocation1] sm:$0xff pattern:$0x73625140]
      %v3517 = vld.sshfl [vmem:[#allocation1 + $0x8] sm:$0xff pattern:$0x73625140]
      %v3552 = vunpack.c.l.b16 %v3482
      %v3553 = vunpack.c.h.b16 %v3482
      %v3554 = vunpack.c.l.b16 %v3483
      %v3555 = vunpack.c.h.b16 %v3483
      %v3556 = vunpack.c.l.b16 %v3484
      %v3557 = vunpack.c.h.b16 %v3484
      %v3558 = vunpack.c.l.b16 %v3485
      %v3559 = vunpack.c.h.b16 %v3485
      %v3560 = vunpack.c.l.b16 %v3486
      %v3561 = vunpack.c.h.b16 %v3486
      %v3562 = vunpack.c.l.b16 %v3487
      %v3563 = vunpack.c.h.b16 %v3487
      %v3564 = vunpack.c.l.b16 %v3488
      %v3565 = vunpack.c.h.b16 %v3488
      %v3566 = vunpack.c.l.b16 %v3489
      %v3567 = vunpack.c.h.b16 %v3489
      %v3568 = vunpack.c.l.b16 %v3490
      %v3569 = vunpack.c.h.b16 %v3490
      %v3570 = vunpack.c.l.b16 %v3491
      %v3571 = vunpack.c.h.b16 %v3491
      %v3572 = vunpack.c.l.b16 %v3492
      %v3573 = vunpack.c.h.b16 %v3492
      %v3574 = vunpack.c.l.b16 %v3493
      %v3575 = vunpack.c.h.b16 %v3493
      %v3576 = vunpack.c.l.b16 %v3494
      %v3577 = vunpack.c.h.b16 %v3494
      %v3578 = vunpack.c.l.b16 %v3495
      %v3579 = vunpack.c.h.b16 %v3495
      %v3580 = vunpack.c.l.b16 %v3496
      %v3581 = vunpack.c.h.b16 %v3496
      %v3582 = vunpack.c.l.b16 %v3497
      %v3583 = vunpack.c.h.b16 %v3497
      %v3584 = vunpack.c.l.b16 %v3498
      %v3585 = vunpack.c.h.b16 %v3498
      %v3586 = vunpack.c.l.b16 %v3499
      %v3587 = vunpack.c.h.b16 %v3499
      %v3588 = vunpack.c.l.b16 %v3500
      %v3589 = vunpack.c.h.b16 %v3500
      %v3590 = vunpack.c.l.b16 %v3501
      %v3591 = vunpack.c.h.b16 %v3501
      %v3592 = vunpack.c.l.b16 %v3502
      %v3593 = vunpack.c.h.b16 %v3502
      %v3594 = vunpack.c.l.b16 %v3503
      %v3595 = vunpack.c.h.b16 %v3503
      %v3596 = vunpack.c.l.b16 %v3504
      %v3597 = vunpack.c.h.b16 %v3504
      %v3598 = vunpack.c.l.b16 %v3505
      %v3599 = vunpack.c.h.b16 %v3505
      %v3600 = vunpack.c.l.b16 %v3506
      %v3601 = vunpack.c.h.b16 %v3506
      %v3602 = vunpack.c.l.b16 %v3507
      %v3603 = vunpack.c.h.b16 %v3507
      %v3604 = vunpack.c.l.b16 %v3508
      %v3605 = vunpack.c.h.b16 %v3508
      %v3606 = vunpack.c.l.b16 %v3509
      %v3607 = vunpack.c.h.b16 %v3509
      %v3608 = vunpack.c.l.b16 %v3510
      %v3609 = vunpack.c.h.b16 %v3510
      %v3610 = vunpack.c.l.b16 %v3511
      %v3611 = vunpack.c.h.b16 %v3511
      %v3612 = vunpack.c.l.b16 %v3512
      %v3613 = vunpack.c.h.b16 %v3512
      %v3614 = vunpack.c.l.b16 %v3513
      %v3615 = vunpack.c.h.b16 %v3513
      %v3616 = vpack.c.b16 %v3554, %v3552
      %v3617 = vpack.c.b16 %v3555, %v3553
      %v3618 = vpack.c.b16 %v3558, %v3556
      %v3619 = vpack.c.b16 %v3559, %v3557
      %v3620 = vpack.c.b16 %v3562, %v3560
      %v3621 = vpack.c.b16 %v3563, %v3561
      %v3622 = vpack.c.b16 %v3566, %v3564
      %v3623 = vpack.c.b16 %v3567, %v3565
      %v3624 = vpack.c.b16 %v3570, %v3568
      %v3625 = vpack.c.b16 %v3571, %v3569
      %v3626 = vpack.c.b16 %v3574, %v3572
      %v3627 = vpack.c.b16 %v3575, %v3573
      %v3628 = vpack.c.b16 %v3578, %v3576
      %v3629 = vpack.c.b16 %v3579, %v3577
      %v3630 = vpack.c.b16 %v3582, %v3580
      %v3631 = vpack.c.b16 %v3583, %v3581
      %v3632 = vpack.c.b16 %v3586, %v3584
      %v3633 = vpack.c.b16 %v3587, %v3585
      %v3634 = vpack.c.b16 %v3590, %v3588
      %v3635 = vpack.c.b16 %v3591, %v3589
      %v3636 = vpack.c.b16 %v3594, %v3592
      %v3637 = vpack.c.b16 %v3595, %v3593
      %v3638 = vpack.c.b16 %v3598, %v3596
      %v3639 = vpack.c.b16 %v3599, %v3597
      %v3640 = vpack.c.b16 %v3602, %v3600
      %v3641 = vpack.c.b16 %v3603, %v3601
      %v3642 = vpack.c.b16 %v3606, %v3604
      %v3643 = vpack.c.b16 %v3607, %v3605
      %v3644 = vpack.c.b16 %v3610, %v3608
      %v3645 = vpack.c.b16 %v3611, %v3609
      %v3646 = vpack.c.b16 %v3614, %v3612
      %v3647 = vpack.c.b16 %v3615, %v3613
      %3680 = vmatpush.bf16.xpose.msra.mxu0 %v3630
      %3681 = vmatpush.bf16.xpose.msra.mxu0 %v3628
      %3682 = vmatpush.bf16.xpose.msra.mxu0 %v3626
      %3683 = vmatpush.bf16.xpose.msra.mxu0 %v3624
      %3684 = vmatpush.bf16.xpose.msra.mxu0 %v3622
      %3685 = vmatpush.bf16.xpose.msra.mxu0 %v3620
      %3686 = vmatpush.bf16.xpose.msra.mxu0 %v3618
      %3687 = vmatpush.bf16.xpose.msra.mxu0 %v3616
      %3688 = vmatmul.bf16.gmra.mxu0 %v3516
      %v3689 = vpop.f32.mrf.mxu0
      %v3690 = vadd.f32 0.0, %v3689
      %v3691 = vpop.f32.mrf.mxu0
      %3692 = vdwg.mxu0
      %3693 = vmatpush.bf16.xpose.msra.mxu0 %v3631
      %3694 = vmatpush.bf16.xpose.msra.mxu0 %v3629
      %3695 = vmatpush.bf16.xpose.msra.mxu0 %v3627
      %3696 = vmatpush.bf16.xpose.msra.mxu0 %v3625
      %3697 = vmatpush.bf16.xpose.msra.mxu0 %v3623
      %3698 = vmatpush.bf16.xpose.msra.mxu0 %v3621
      %3699 = vmatpush.bf16.xpose.msra.mxu0 %v3619
      %3700 = vmatpush.bf16.xpose.msra.mxu0 %v3617
      %3701 = vmatmul.bf16.gmra.mxu0 %v3517
      %v3702 = vpop.f32.mrf.mxu0
      %v3703 = vadd.f32 %v3690, %v3702
      %v3704 = vpop.f32.mrf.mxu0
      %3705 = vdwg.mxu0
      %3706 = vmatpush.bf16.xpose.msra.mxu0 %v3646
      %3707 = vmatpush.bf16.xpose.msra.mxu0 %v3644
      %3708 = vmatpush.bf16.xpose.msra.mxu0 %v3642
      %3709 = vmatpush.bf16.xpose.msra.mxu0 %v3640
      %3710 = vmatpush.bf16.xpose.msra.mxu0 %v3638
      %3711 = vmatpush.bf16.xpose.msra.mxu0 %v3636
      %3712 = vmatpush.bf16.xpose.msra.mxu0 %v3634
      %3713 = vmatpush.bf16.xpose.msra.mxu0 %v3632
      %3714 = vmatmul.bf16.gmra.mxu0 %v3516
      %v3715 = vpop.f32.mrf.mxu0
      %v3716 = vadd.f32 0.0, %v3715
      %v3717 = vpop.f32.mrf.mxu0
      %3718 = vdwg.mxu0
      %3719 = vmatpush.bf16.xpose.msra.mxu0 %v3647
      %3720 = vmatpush.bf16.xpose.msra.mxu0 %v3645
      %3721 = vmatpush.bf16.xpose.msra.mxu0 %v3643
      %3722 = vmatpush.bf16.xpose.msra.mxu0 %v3641
      %3723 = vmatpush.bf16.xpose.msra.mxu0 %v3639
      %3724 = vmatpush.bf16.xpose.msra.mxu0 %v3637
      %3725 = vmatpush.bf16.xpose.msra.mxu0 %v3635
      %3726 = vmatpush.bf16.xpose.msra.mxu0 %v3633
      %3727 = vmatmul.bf16.gmra.mxu0 %v3517
      %v3728 = vpop.f32.mrf.mxu0
      %v3729 = vadd.f32 %v3716, %v3728
      %v3730 = vpop.f32.mrf.mxu0
      %3731 = vdwg.mxu0
      %v3732 = vadd.f32 %v3478, %v3703
      %v3733 = vadd.f32 %v3479, %v3729
      %s3734 = scalar_lea.vmem %s5, 16
      %v3735 = vld [vmem:[%s3734] sm:$0xf]
      %v3736 = vld [vmem:[#allocation3 + $0x40] sm:$0xff]
      %v3737 = vld [vmem:[#allocation3 + $0x48] sm:$0xff]
      %v3738 = vld [vmem:[#allocation3 + $0x50] sm:$0xff]
      %v3739 = vld [vmem:[#allocation3 + $0x58] sm:$0xff]
      %v3740 = vld [vmem:[#allocation3 + $0x60] sm:$0xff]
      %v3741 = vld [vmem:[#allocation3 + $0x68] sm:$0xff]
      %v3742 = vld [vmem:[#allocation3 + $0x70] sm:$0xff]
      %v3743 = vld [vmem:[#allocation3 + $0x78] sm:$0xff]
      %v3744 = vld [vmem:[#allocation3 + $0x80] sm:$0xff]
      %v3745 = vld [vmem:[#allocation3 + $0x88] sm:$0xff]
      %v3746 = vld [vmem:[#allocation3 + $0x90] sm:$0xff]
      %v3747 = vld [vmem:[#allocation3 + $0x98] sm:$0xff]
      %v3748 = vld [vmem:[#allocation3 + $0xa0] sm:$0xff]
      %v3749 = vld [vmem:[#allocation3 + $0xa8] sm:$0xff]
      %v3750 = vld [vmem:[#allocation3 + $0xb0] sm:$0xff]
      %v3751 = vld [vmem:[#allocation3 + $0xb8] sm:$0xff]
      %v3752 = vld [vmem:[#allocation3 + $0xc0] sm:$0xff]
      %v3753 = vld [vmem:[#allocation3 + $0xc8] sm:$0xff]
      %v3754 = vld [vmem:[#allocation3 + $0xd0] sm:$0xff]
      %v3755 = vld [vmem:[#allocation3 + $0xd8] sm:$0xff]
      %v3756 = vld [vmem:[#allocation3 + $0xe0] sm:$0xff]
      %v3757 = vld [vmem:[#allocation3 + $0xe8] sm:$0xff]
      %v3758 = vld [vmem:[#allocation3 + $0xf0] sm:$0xff]
      %v3759 = vld [vmem:[#allocation3 + $0xf8] sm:$0xff]
      %v3760 = vld [vmem:[#allocation3 + $0x100] sm:$0xff]
      %v3761 = vld [vmem:[#allocation3 + $0x108] sm:$0xff]
      %v3762 = vld [vmem:[#allocation3 + $0x110] sm:$0xff]
      %v3763 = vld [vmem:[#allocation3 + $0x118] sm:$0xff]
      %v3764 = vld [vmem:[#allocation3 + $0x120] sm:$0xff]
      %v3765 = vld [vmem:[#allocation3 + $0x128] sm:$0xff]
      %v3766 = vld [vmem:[#allocation3 + $0x130] sm:$0xff]
      %v3767 = vld [vmem:[#allocation3 + $0x138] sm:$0xff]
      %3769 = vst [vmem:[#allocation1] ss:$4 sm:$0xff] %v3735
      %v3770 = vld.sshfl [vmem:[#allocation1] sm:$0xff pattern:$0x73625140]
      %v3771 = vld.sshfl [vmem:[#allocation1 + $0x8] sm:$0xff pattern:$0x73625140]
      %v3806 = vunpack.c.l.b16 %v3736
      %v3807 = vunpack.c.h.b16 %v3736
      %v3808 = vunpack.c.l.b16 %v3737
      %v3809 = vunpack.c.h.b16 %v3737
      %v3810 = vunpack.c.l.b16 %v3738
      %v3811 = vunpack.c.h.b16 %v3738
      %v3812 = vunpack.c.l.b16 %v3739
      %v3813 = vunpack.c.h.b16 %v3739
      %v3814 = vunpack.c.l.b16 %v3740
      %v3815 = vunpack.c.h.b16 %v3740
      %v3816 = vunpack.c.l.b16 %v3741
      %v3817 = vunpack.c.h.b16 %v3741
      %v3818 = vunpack.c.l.b16 %v3742
      %v3819 = vunpack.c.h.b16 %v3742
      %v3820 = vunpack.c.l.b16 %v3743
      %v3821 = vunpack.c.h.b16 %v3743
      %v3822 = vunpack.c.l.b16 %v3744
      %v3823 = vunpack.c.h.b16 %v3744
      %v3824 = vunpack.c.l.b16 %v3745
      %v3825 = vunpack.c.h.b16 %v3745
      %v3826 = vunpack.c.l.b16 %v3746
      %v3827 = vunpack.c.h.b16 %v3746
      %v3828 = vunpack.c.l.b16 %v3747
      %v3829 = vunpack.c.h.b16 %v3747
      %v3830 = vunpack.c.l.b16 %v3748
      %v3831 = vunpack.c.h.b16 %v3748
      %v3832 = vunpack.c.l.b16 %v3749
      %v3833 = vunpack.c.h.b16 %v3749
      %v3834 = vunpack.c.l.b16 %v3750
      %v3835 = vunpack.c.h.b16 %v3750
      %v3836 = vunpack.c.l.b16 %v3751
      %v3837 = vunpack.c.h.b16 %v3751
      %v3838 = vunpack.c.l.b16 %v3752
      %v3839 = vunpack.c.h.b16 %v3752
      %v3840 = vunpack.c.l.b16 %v3753
      %v3841 = vunpack.c.h.b16 %v3753
      %v3842 = vunpack.c.l.b16 %v3754
      %v3843 = vunpack.c.h.b16 %v3754
      %v3844 = vunpack.c.l.b16 %v3755
      %v3845 = vunpack.c.h.b16 %v3755
      %v3846 = vunpack.c.l.b16 %v3756
      %v3847 = vunpack.c.h.b16 %v3756
      %v3848 = vunpack.c.l.b16 %v3757
      %v3849 = vunpack.c.h.b16 %v3757
      %v3850 = vunpack.c.l.b16 %v3758
      %v3851 = vunpack.c.h.b16 %v3758
      %v3852 = vunpack.c.l.b16 %v3759
      %v3853 = vunpack.c.h.b16 %v3759
      %v3854 = vunpack.c.l.b16 %v3760
      %v3855 = vunpack.c.h.b16 %v3760
      %v3856 = vunpack.c.l.b16 %v3761
      %v3857 = vunpack.c.h.b16 %v3761
      %v3858 = vunpack.c.l.b16 %v3762
      %v3859 = vunpack.c.h.b16 %v3762
      %v3860 = vunpack.c.l.b16 %v3763
      %v3861 = vunpack.c.h.b16 %v3763
      %v3862 = vunpack.c.l.b16 %v3764
      %v3863 = vunpack.c.h.b16 %v3764
      %v3864 = vunpack.c.l.b16 %v3765
      %v3865 = vunpack.c.h.b16 %v3765
      %v3866 = vunpack.c.l.b16 %v3766
      %v3867 = vunpack.c.h.b16 %v3766
      %v3868 = vunpack.c.l.b16 %v3767
      %v3869 = vunpack.c.h.b16 %v3767
      %v3870 = vpack.c.b16 %v3808, %v3806
      %v3871 = vpack.c.b16 %v3809, %v3807
      %v3872 = vpack.c.b16 %v3812, %v3810
      %v3873 = vpack.c.b16 %v3813, %v3811
      %v3874 = vpack.c.b16 %v3816, %v3814
      %v3875 = vpack.c.b16 %v3817, %v3815
      %v3876 = vpack.c.b16 %v3820, %v3818
      %v3877 = vpack.c.b16 %v3821, %v3819
      %v3878 = vpack.c.b16 %v3824, %v3822
      %v3879 = vpack.c.b16 %v3825, %v3823
      %v3880 = vpack.c.b16 %v3828, %v3826
      %v3881 = vpack.c.b16 %v3829, %v3827
      %v3882 = vpack.c.b16 %v3832, %v3830
      %v3883 = vpack.c.b16 %v3833, %v3831
      %v3884 = vpack.c.b16 %v3836, %v3834
      %v3885 = vpack.c.b16 %v3837, %v3835
      %v3886 = vpack.c.b16 %v3840, %v3838
      %v3887 = vpack.c.b16 %v3841, %v3839
      %v3888 = vpack.c.b16 %v3844, %v3842
      %v3889 = vpack.c.b16 %v3845, %v3843
      %v3890 = vpack.c.b16 %v3848, %v3846
      %v3891 = vpack.c.b16 %v3849, %v3847
      %v3892 = vpack.c.b16 %v3852, %v3850
      %v3893 = vpack.c.b16 %v3853, %v3851
      %v3894 = vpack.c.b16 %v3856, %v3854
      %v3895 = vpack.c.b16 %v3857, %v3855
      %v3896 = vpack.c.b16 %v3860, %v3858
      %v3897 = vpack.c.b16 %v3861, %v3859
      %v3898 = vpack.c.b16 %v3864, %v3862
      %v3899 = vpack.c.b16 %v3865, %v3863
      %v3900 = vpack.c.b16 %v3868, %v3866
      %v3901 = vpack.c.b16 %v3869, %v3867
      %3934 = vmatpush.bf16.xpose.msra.mxu0 %v3884
      %3935 = vmatpush.bf16.xpose.msra.mxu0 %v3882
      %3936 = vmatpush.bf16.xpose.msra.mxu0 %v3880
      %3937 = vmatpush.bf16.xpose.msra.mxu0 %v3878
      %3938 = vmatpush.bf16.xpose.msra.mxu0 %v3876
      %3939 = vmatpush.bf16.xpose.msra.mxu0 %v3874
      %3940 = vmatpush.bf16.xpose.msra.mxu0 %v3872
      %3941 = vmatpush.bf16.xpose.msra.mxu0 %v3870
      %3942 = vmatmul.bf16.gmra.mxu0 %v3770
      %v3943 = vpop.f32.mrf.mxu0
      %v3944 = vadd.f32 0.0, %v3943
      %v3945 = vpop.f32.mrf.mxu0
      %3946 = vdwg.mxu0
      %3947 = vmatpush.bf16.xpose.msra.mxu0 %v3885
      %3948 = vmatpush.bf16.xpose.msra.mxu0 %v3883
      %3949 = vmatpush.bf16.xpose.msra.mxu0 %v3881
      %3950 = vmatpush.bf16.xpose.msra.mxu0 %v3879
      %3951 = vmatpush.bf16.xpose.msra.mxu0 %v3877
      %3952 = vmatpush.bf16.xpose.msra.mxu0 %v3875
      %3953 = vmatpush.bf16.xpose.msra.mxu0 %v3873
      %3954 = vmatpush.bf16.xpose.msra.mxu0 %v3871
      %3955 = vmatmul.bf16.gmra.mxu0 %v3771
      %v3956 = vpop.f32.mrf.mxu0
      %v3957 = vadd.f32 %v3944, %v3956
      %v3958 = vpop.f32.mrf.mxu0
      %3959 = vdwg.mxu0
      %3960 = vmatpush.bf16.xpose.msra.mxu0 %v3900
      %3961 = vmatpush.bf16.xpose.msra.mxu0 %v3898
      %3962 = vmatpush.bf16.xpose.msra.mxu0 %v3896
      %3963 = vmatpush.bf16.xpose.msra.mxu0 %v3894
      %3964 = vmatpush.bf16.xpose.msra.mxu0 %v3892
      %3965 = vmatpush.bf16.xpose.msra.mxu0 %v3890
      %3966 = vmatpush.bf16.xpose.msra.mxu0 %v3888
      %3967 = vmatpush.bf16.xpose.msra.mxu0 %v3886
      %3968 = vmatmul.bf16.gmra.mxu0 %v3770
      %v3969 = vpop.f32.mrf.mxu0
      %v3970 = vadd.f32 0.0, %v3969
      %v3971 = vpop.f32.mrf.mxu0
      %3972 = vdwg.mxu0
      %3973 = vmatpush.bf16.xpose.msra.mxu0 %v3901
      %3974 = vmatpush.bf16.xpose.msra.mxu0 %v3899
      %3975 = vmatpush.bf16.xpose.msra.mxu0 %v3897
      %3976 = vmatpush.bf16.xpose.msra.mxu0 %v3895
      %3977 = vmatpush.bf16.xpose.msra.mxu0 %v3893
      %3978 = vmatpush.bf16.xpose.msra.mxu0 %v3891
      %3979 = vmatpush.bf16.xpose.msra.mxu0 %v3889
      %3980 = vmatpush.bf16.xpose.msra.mxu0 %v3887
      %3981 = vmatmul.bf16.gmra.mxu0 %v3771
      %v3982 = vpop.f32.mrf.mxu0
      %v3983 = vadd.f32 %v3970, %v3982
      %v3984 = vpop.f32.mrf.mxu0
      %3985 = vdwg.mxu0
      %v3986 = vadd.f32 %v3732, %v3957
      %v3987 = vadd.f32 %v3733, %v3983
      %s3988 = scalar_lea.vmem %s5, 20
      %v3989 = vld [vmem:[%s3988] sm:$0xf]
      %v3990 = vld [vmem:[#allocation3 + $0x50] sm:$0xff]
      %v3991 = vld [vmem:[#allocation3 + $0x58] sm:$0xff]
      %v3992 = vld [vmem:[#allocation3 + $0x60] sm:$0xff]
      %v3993 = vld [vmem:[#allocation3 + $0x68] sm:$0xff]
      %v3994 = vld [vmem:[#allocation3 + $0x70] sm:$0xff]
      %v3995 = vld [vmem:[#allocation3 + $0x78] sm:$0xff]
      %v3996 = vld [vmem:[#allocation3 + $0x80] sm:$0xff]
      %v3997 = vld [vmem:[#allocation3 + $0x88] sm:$0xff]
      %v3998 = vld [vmem:[#allocation3 + $0x90] sm:$0xff]
      %v3999 = vld [vmem:[#allocation3 + $0x98] sm:$0xff]
      %v4000 = vld [vmem:[#allocation3 + $0xa0] sm:$0xff]
      %v4001 = vld [vmem:[#allocation3 + $0xa8] sm:$0xff]
      %v4002 = vld [vmem:[#allocation3 + $0xb0] sm:$0xff]
      %v4003 = vld [vmem:[#allocation3 + $0xb8] sm:$0xff]
      %v4004 = vld [vmem:[#allocation3 + $0xc0] sm:$0xff]
      %v4005 = vld [vmem:[#allocation3 + $0xc8] sm:$0xff]
      %v4006 = vld [vmem:[#allocation3 + $0xd0] sm:$0xff]
      %v4007 = vld [vmem:[#allocation3 + $0xd8] sm:$0xff]
      %v4008 = vld [vmem:[#allocation3 + $0xe0] sm:$0xff]
      %v4009 = vld [vmem:[#allocation3 + $0xe8] sm:$0xff]
      %v4010 = vld [vmem:[#allocation3 + $0xf0] sm:$0xff]
      %v4011 = vld [vmem:[#allocation3 + $0xf8] sm:$0xff]
      %v4012 = vld [vmem:[#allocation3 + $0x100] sm:$0xff]
      %v4013 = vld [vmem:[#allocation3 + $0x108] sm:$0xff]
      %v4014 = vld [vmem:[#allocation3 + $0x110] sm:$0xff]
      %v4015 = vld [vmem:[#allocation3 + $0x118] sm:$0xff]
      %v4016 = vld [vmem:[#allocation3 + $0x120] sm:$0xff]
      %v4017 = vld [vmem:[#allocation3 + $0x128] sm:$0xff]
      %v4018 = vld [vmem:[#allocation3 + $0x130] sm:$0xff]
      %v4019 = vld [vmem:[#allocation3 + $0x138] sm:$0xff]
      %v4020 = vld [vmem:[#allocation3 + $0x140] sm:$0xff]
      %v4021 = vld [vmem:[#allocation3 + $0x148] sm:$0xff]
      %4023 = vst [vmem:[#allocation1] ss:$4 sm:$0xff] %v3989
      %v4024 = vld.sshfl [vmem:[#allocation1] sm:$0xff pattern:$0x73625140]
      %v4025 = vld.sshfl [vmem:[#allocation1 + $0x8] sm:$0xff pattern:$0x73625140]
      %v4060 = vunpack.c.l.b16 %v3990
      %v4061 = vunpack.c.h.b16 %v3990
      %v4062 = vunpack.c.l.b16 %v3991
      %v4063 = vunpack.c.h.b16 %v3991
      %v4064 = vunpack.c.l.b16 %v3992
      %v4065 = vunpack.c.h.b16 %v3992
      %v4066 = vunpack.c.l.b16 %v3993
      %v4067 = vunpack.c.h.b16 %v3993
      %v4068 = vunpack.c.l.b16 %v3994
      %v4069 = vunpack.c.h.b16 %v3994
      %v4070 = vunpack.c.l.b16 %v3995
      %v4071 = vunpack.c.h.b16 %v3995
      %v4072 = vunpack.c.l.b16 %v3996
      %v4073 = vunpack.c.h.b16 %v3996
      %v4074 = vunpack.c.l.b16 %v3997
      %v4075 = vunpack.c.h.b16 %v3997
      %v4076 = vunpack.c.l.b16 %v3998
      %v4077 = vunpack.c.h.b16 %v3998
      %v4078 = vunpack.c.l.b16 %v3999
      %v4079 = vunpack.c.h.b16 %v3999
      %v4080 = vunpack.c.l.b16 %v4000
      %v4081 = vunpack.c.h.b16 %v4000
      %v4082 = vunpack.c.l.b16 %v4001
      %v4083 = vunpack.c.h.b16 %v4001
      %v4084 = vunpack.c.l.b16 %v4002
      %v4085 = vunpack.c.h.b16 %v4002
      %v4086 = vunpack.c.l.b16 %v4003
      %v4087 = vunpack.c.h.b16 %v4003
      %v4088 = vunpack.c.l.b16 %v4004
      %v4089 = vunpack.c.h.b16 %v4004
      %v4090 = vunpack.c.l.b16 %v4005
      %v4091 = vunpack.c.h.b16 %v4005
      %v4092 = vunpack.c.l.b16 %v4006
      %v4093 = vunpack.c.h.b16 %v4006
      %v4094 = vunpack.c.l.b16 %v4007
      %v4095 = vunpack.c.h.b16 %v4007
      %v4096 = vunpack.c.l.b16 %v4008
      %v4097 = vunpack.c.h.b16 %v4008
      %v4098 = vunpack.c.l.b16 %v4009
      %v4099 = vunpack.c.h.b16 %v4009
      %v4100 = vunpack.c.l.b16 %v4010
      %v4101 = vunpack.c.h.b16 %v4010
      %v4102 = vunpack.c.l.b16 %v4011
      %v4103 = vunpack.c.h.b16 %v4011
      %v4104 = vunpack.c.l.b16 %v4012
      %v4105 = vunpack.c.h.b16 %v4012
      %v4106 = vunpack.c.l.b16 %v4013
      %v4107 = vunpack.c.h.b16 %v4013
      %v4108 = vunpack.c.l.b16 %v4014
      %v4109 = vunpack.c.h.b16 %v4014
      %v4110 = vunpack.c.l.b16 %v4015
      %v4111 = vunpack.c.h.b16 %v4015
      %v4112 = vunpack.c.l.b16 %v4016
      %v4113 = vunpack.c.h.b16 %v4016
      %v4114 = vunpack.c.l.b16 %v4017
      %v4115 = vunpack.c.h.b16 %v4017
      %v4116 = vunpack.c.l.b16 %v4018
      %v4117 = vunpack.c.h.b16 %v4018
      %v4118 = vunpack.c.l.b16 %v4019
      %v4119 = vunpack.c.h.b16 %v4019
      %v4120 = vunpack.c.l.b16 %v4020
      %v4121 = vunpack.c.h.b16 %v4020
      %v4122 = vunpack.c.l.b16 %v4021
      %v4123 = vunpack.c.h.b16 %v4021
      %v4124 = vpack.c.b16 %v4062, %v4060
      %v4125 = vpack.c.b16 %v4063, %v4061
      %v4126 = vpack.c.b16 %v4066, %v4064
      %v4127 = vpack.c.b16 %v4067, %v4065
      %v4128 = vpack.c.b16 %v4070, %v4068
      %v4129 = vpack.c.b16 %v4071, %v4069
      %v4130 = vpack.c.b16 %v4074, %v4072
      %v4131 = vpack.c.b16 %v4075, %v4073
      %v4132 = vpack.c.b16 %v4078, %v4076
      %v4133 = vpack.c.b16 %v4079, %v4077
      %v4134 = vpack.c.b16 %v4082, %v4080
      %v4135 = vpack.c.b16 %v4083, %v4081
      %v4136 = vpack.c.b16 %v4086, %v4084
      %v4137 = vpack.c.b16 %v4087, %v4085
      %v4138 = vpack.c.b16 %v4090, %v4088
      %v4139 = vpack.c.b16 %v4091, %v4089
      %v4140 = vpack.c.b16 %v4094, %v4092
      %v4141 = vpack.c.b16 %v4095, %v4093
      %v4142 = vpack.c.b16 %v4098, %v4096
      %v4143 = vpack.c.b16 %v4099, %v4097
      %v4144 = vpack.c.b16 %v4102, %v4100
      %v4145 = vpack.c.b16 %v4103, %v4101
      %v4146 = vpack.c.b16 %v4106, %v4104
      %v4147 = vpack.c.b16 %v4107, %v4105
      %v4148 = vpack.c.b16 %v4110, %v4108
      %v4149 = vpack.c.b16 %v4111, %v4109
      %v4150 = vpack.c.b16 %v4114, %v4112
      %v4151 = vpack.c.b16 %v4115, %v4113
      %v4152 = vpack.c.b16 %v4118, %v4116
      %v4153 = vpack.c.b16 %v4119, %v4117
      %v4154 = vpack.c.b16 %v4122, %v4120
      %v4155 = vpack.c.b16 %v4123, %v4121
      %4188 = vmatpush.bf16.xpose.msra.mxu0 %v4138
      %4189 = vmatpush.bf16.xpose.msra.mxu0 %v4136
      %4190 = vmatpush.bf16.xpose.msra.mxu0 %v4134
      %4191 = vmatpush.bf16.xpose.msra.mxu0 %v4132
      %4192 = vmatpush.bf16.xpose.msra.mxu0 %v4130
      %4193 = vmatpush.bf16.xpose.msra.mxu0 %v4128
      %4194 = vmatpush.bf16.xpose.msra.mxu0 %v4126
      %4195 = vmatpush.bf16.xpose.msra.mxu0 %v4124
      %4196 = vmatmul.bf16.gmra.mxu0 %v4024
      %v4197 = vpop.f32.mrf.mxu0
      %v4198 = vadd.f32 0.0, %v4197
      %v4199 = vpop.f32.mrf.mxu0
      %4200 = vdwg.mxu0
      %4201 = vmatpush.bf16.xpose.msra.mxu0 %v4139
      %4202 = vmatpush.bf16.xpose.msra.mxu0 %v4137
      %4203 = vmatpush.bf16.xpose.msra.mxu0 %v4135
      %4204 = vmatpush.bf16.xpose.msra.mxu0 %v4133
      %4205 = vmatpush.bf16.xpose.msra.mxu0 %v4131
      %4206 = vmatpush.bf16.xpose.msra.mxu0 %v4129
      %4207 = vmatpush.bf16.xpose.msra.mxu0 %v4127
      %4208 = vmatpush.bf16.xpose.msra.mxu0 %v4125
      %4209 = vmatmul.bf16.gmra.mxu0 %v4025
      %v4210 = vpop.f32.mrf.mxu0
      %v4211 = vadd.f32 %v4198, %v4210
      %v4212 = vpop.f32.mrf.mxu0
      %4213 = vdwg.mxu0
      %4214 = vmatpush.bf16.xpose.msra.mxu0 %v4154
      %4215 = vmatpush.bf16.xpose.msra.mxu0 %v4152
      %4216 = vmatpush.bf16.xpose.msra.mxu0 %v4150
      %4217 = vmatpush.bf16.xpose.msra.mxu0 %v4148
      %4218 = vmatpush.bf16.xpose.msra.mxu0 %v4146
      %4219 = vmatpush.bf16.xpose.msra.mxu0 %v4144
      %4220 = vmatpush.bf16.xpose.msra.mxu0 %v4142
      %4221 = vmatpush.bf16.xpose.msra.mxu0 %v4140
      %4222 = vmatmul.bf16.gmra.mxu0 %v4024
      %v4223 = vpop.f32.mrf.mxu0
      %v4224 = vadd.f32 0.0, %v4223
      %v4225 = vpop.f32.mrf.mxu0
      %4226 = vdwg.mxu0
      %4227 = vmatpush.bf16.xpose.msra.mxu0 %v4155
      %4228 = vmatpush.bf16.xpose.msra.mxu0 %v4153
      %4229 = vmatpush.bf16.xpose.msra.mxu0 %v4151
      %4230 = vmatpush.bf16.xpose.msra.mxu0 %v4149
      %4231 = vmatpush.bf16.xpose.msra.mxu0 %v4147
      %4232 = vmatpush.bf16.xpose.msra.mxu0 %v4145
      %4233 = vmatpush.bf16.xpose.msra.mxu0 %v4143
      %4234 = vmatpush.bf16.xpose.msra.mxu0 %v4141
      %4235 = vmatmul.bf16.gmra.mxu0 %v4025
      %v4236 = vpop.f32.mrf.mxu0
      %v4237 = vadd.f32 %v4224, %v4236
      %v4238 = vpop.f32.mrf.mxu0
      %4239 = vdwg.mxu0
      %v4240 = vadd.f32 %v3986, %v4211
      %v4241 = vadd.f32 %v3987, %v4237
      %s4242 = scalar_lea.vmem %s5, 24
      %v4243 = vld [vmem:[%s4242] sm:$0xf]
      %v4244 = vld [vmem:[#allocation3 + $0x60] sm:$0xff]
      %v4245 = vld [vmem:[#allocation3 + $0x68] sm:$0xff]
      %v4246 = vld [vmem:[#allocation3 + $0x70] sm:$0xff]
      %v4247 = vld [vmem:[#allocation3 + $0x78] sm:$0xff]
      %v4248 = vld [vmem:[#allocation3 + $0x80] sm:$0xff]
      %v4249 = vld [vmem:[#allocation3 + $0x88] sm:$0xff]
      %v4250 = vld [vmem:[#allocation3 + $0x90] sm:$0xff]
      %v4251 = vld [vmem:[#allocation3 + $0x98] sm:$0xff]
      %v4252 = vld [vmem:[#allocation3 + $0xa0] sm:$0xff]
      %v4253 = vld [vmem:[#allocation3 + $0xa8] sm:$0xff]
      %v4254 = vld [vmem:[#allocation3 + $0xb0] sm:$0xff]
      %v4255 = vld [vmem:[#allocation3 + $0xb8] sm:$0xff]
      %v4256 = vld [vmem:[#allocation3 + $0xc0] sm:$0xff]
      %v4257 = vld [vmem:[#allocation3 + $0xc8] sm:$0xff]
      %v4258 = vld [vmem:[#allocation3 + $0xd0] sm:$0xff]
      %v4259 = vld [vmem:[#allocation3 + $0xd8] sm:$0xff]
      %v4260 = vld [vmem:[#allocation3 + $0xe0] sm:$0xff]
      %v4261 = vld [vmem:[#allocation3 + $0xe8] sm:$0xff]
      %v4262 = vld [vmem:[#allocation3 + $0xf0] sm:$0xff]
      %v4263 = vld [vmem:[#allocation3 + $0xf8] sm:$0xff]
      %v4264 = vld [vmem:[#allocation3 + $0x100] sm:$0xff]
      %v4265 = vld [vmem:[#allocation3 + $0x108] sm:$0xff]
      %v4266 = vld [vmem:[#allocation3 + $0x110] sm:$0xff]
      %v4267 = vld [vmem:[#allocation3 + $0x118] sm:$0xff]
      %v4268 = vld [vmem:[#allocation3 + $0x120] sm:$0xff]
      %v4269 = vld [vmem:[#allocation3 + $0x128] sm:$0xff]
      %v4270 = vld [vmem:[#allocation3 + $0x130] sm:$0xff]
      %v4271 = vld [vmem:[#allocation3 + $0x138] sm:$0xff]
      %v4272 = vld [vmem:[#allocation3 + $0x140] sm:$0xff]
      %v4273 = vld [vmem:[#allocation3 + $0x148] sm:$0xff]
      %v4274 = vld [vmem:[#allocation3 + $0x150] sm:$0xff]
      %v4275 = vld [vmem:[#allocation3 + $0x158] sm:$0xff]
      %4277 = vst [vmem:[#allocation1] ss:$4 sm:$0xff] %v4243
      %v4278 = vld.sshfl [vmem:[#allocation1] sm:$0xff pattern:$0x73625140]
      %v4279 = vld.sshfl [vmem:[#allocation1 + $0x8] sm:$0xff pattern:$0x73625140]
      %v4314 = vunpack.c.l.b16 %v4244
      %v4315 = vunpack.c.h.b16 %v4244
      %v4316 = vunpack.c.l.b16 %v4245
      %v4317 = vunpack.c.h.b16 %v4245
      %v4318 = vunpack.c.l.b16 %v4246
      %v4319 = vunpack.c.h.b16 %v4246
      %v4320 = vunpack.c.l.b16 %v4247
      %v4321 = vunpack.c.h.b16 %v4247
      %v4322 = vunpack.c.l.b16 %v4248
      %v4323 = vunpack.c.h.b16 %v4248
      %v4324 = vunpack.c.l.b16 %v4249
      %v4325 = vunpack.c.h.b16 %v4249
      %v4326 = vunpack.c.l.b16 %v4250
      %v4327 = vunpack.c.h.b16 %v4250
      %v4328 = vunpack.c.l.b16 %v4251
      %v4329 = vunpack.c.h.b16 %v4251
      %v4330 = vunpack.c.l.b16 %v4252
      %v4331 = vunpack.c.h.b16 %v4252
      %v4332 = vunpack.c.l.b16 %v4253
      %v4333 = vunpack.c.h.b16 %v4253
      %v4334 = vunpack.c.l.b16 %v4254
      %v4335 = vunpack.c.h.b16 %v4254
      %v4336 = vunpack.c.l.b16 %v4255
      %v4337 = vunpack.c.h.b16 %v4255
      %v4338 = vunpack.c.l.b16 %v4256
      %v4339 = vunpack.c.h.b16 %v4256
      %v4340 = vunpack.c.l.b16 %v4257
      %v4341 = vunpack.c.h.b16 %v4257
      %v4342 = vunpack.c.l.b16 %v4258
      %v4343 = vunpack.c.h.b16 %v4258
      %v4344 = vunpack.c.l.b16 %v4259
      %v4345 = vunpack.c.h.b16 %v4259
      %v4346 = vunpack.c.l.b16 %v4260
      %v4347 = vunpack.c.h.b16 %v4260
      %v4348 = vunpack.c.l.b16 %v4261
      %v4349 = vunpack.c.h.b16 %v4261
      %v4350 = vunpack.c.l.b16 %v4262
      %v4351 = vunpack.c.h.b16 %v4262
      %v4352 = vunpack.c.l.b16 %v4263
      %v4353 = vunpack.c.h.b16 %v4263
      %v4354 = vunpack.c.l.b16 %v4264
      %v4355 = vunpack.c.h.b16 %v4264
      %v4356 = vunpack.c.l.b16 %v4265
      %v4357 = vunpack.c.h.b16 %v4265
      %v4358 = vunpack.c.l.b16 %v4266
      %v4359 = vunpack.c.h.b16 %v4266
      %v4360 = vunpack.c.l.b16 %v4267
      %v4361 = vunpack.c.h.b16 %v4267
      %v4362 = vunpack.c.l.b16 %v4268
      %v4363 = vunpack.c.h.b16 %v4268
      %v4364 = vunpack.c.l.b16 %v4269
      %v4365 = vunpack.c.h.b16 %v4269
      %v4366 = vunpack.c.l.b16 %v4270
      %v4367 = vunpack.c.h.b16 %v4270
      %v4368 = vunpack.c.l.b16 %v4271
      %v4369 = vunpack.c.h.b16 %v4271
      %v4370 = vunpack.c.l.b16 %v4272
      %v4371 = vunpack.c.h.b16 %v4272
      %v4372 = vunpack.c.l.b16 %v4273
      %v4373 = vunpack.c.h.b16 %v4273
      %v4374 = vunpack.c.l.b16 %v4274
      %v4375 = vunpack.c.h.b16 %v4274
      %v4376 = vunpack.c.l.b16 %v4275
      %v4377 = vunpack.c.h.b16 %v4275
      %v4378 = vpack.c.b16 %v4316, %v4314
      %v4379 = vpack.c.b16 %v4317, %v4315
      %v4380 = vpack.c.b16 %v4320, %v4318
      %v4381 = vpack.c.b16 %v4321, %v4319
      %v4382 = vpack.c.b16 %v4324, %v4322
      %v4383 = vpack.c.b16 %v4325, %v4323
      %v4384 = vpack.c.b16 %v4328, %v4326
      %v4385 = vpack.c.b16 %v4329, %v4327
      %v4386 = vpack.c.b16 %v4332, %v4330
      %v4387 = vpack.c.b16 %v4333, %v4331
      %v4388 = vpack.c.b16 %v4336, %v4334
      %v4389 = vpack.c.b16 %v4337, %v4335
      %v4390 = vpack.c.b16 %v4340, %v4338
      %v4391 = vpack.c.b16 %v4341, %v4339
      %v4392 = vpack.c.b16 %v4344, %v4342
      %v4393 = vpack.c.b16 %v4345, %v4343
      %v4394 = vpack.c.b16 %v4348, %v4346
      %v4395 = vpack.c.b16 %v4349, %v4347
      %v4396 = vpack.c.b16 %v4352, %v4350
      %v4397 = vpack.c.b16 %v4353, %v4351
      %v4398 = vpack.c.b16 %v4356, %v4354
      %v4399 = vpack.c.b16 %v4357, %v4355
      %v4400 = vpack.c.b16 %v4360, %v4358
      %v4401 = vpack.c.b16 %v4361, %v4359
      %v4402 = vpack.c.b16 %v4364, %v4362
      %v4403 = vpack.c.b16 %v4365, %v4363
      %v4404 = vpack.c.b16 %v4368, %v4366
      %v4405 = vpack.c.b16 %v4369, %v4367
      %v4406 = vpack.c.b16 %v4372, %v4370
      %v4407 = vpack.c.b16 %v4373, %v4371
      %v4408 = vpack.c.b16 %v4376, %v4374
      %v4409 = vpack.c.b16 %v4377, %v4375
      %4442 = vmatpush.bf16.xpose.msra.mxu0 %v4392
      %4443 = vmatpush.bf16.xpose.msra.mxu0 %v4390
      %4444 = vmatpush.bf16.xpose.msra.mxu0 %v4388
      %4445 = vmatpush.bf16.xpose.msra.mxu0 %v4386
      %4446 = vmatpush.bf16.xpose.msra.mxu0 %v4384
      %4447 = vmatpush.bf16.xpose.msra.mxu0 %v4382
      %4448 = vmatpush.bf16.xpose.msra.mxu0 %v4380
      %4449 = vmatpush.bf16.xpose.msra.mxu0 %v4378
      %4450 = vmatmul.bf16.gmra.mxu0 %v4278
      %v4451 = vpop.f32.mrf.mxu0
      %v4452 = vadd.f32 0.0, %v4451
      %v4453 = vpop.f32.mrf.mxu0
      %4454 = vdwg.mxu0
      %4455 = vmatpush.bf16.xpose.msra.mxu0 %v4393
      %4456 = vmatpush.bf16.xpose.msra.mxu0 %v4391
      %4457 = vmatpush.bf16.xpose.msra.mxu0 %v4389
      %4458 = vmatpush.bf16.xpose.msra.mxu0 %v4387
      %4459 = vmatpush.bf16.xpose.msra.mxu0 %v4385
      %4460 = vmatpush.bf16.xpose.msra.mxu0 %v4383
      %4461 = vmatpush.bf16.xpose.msra.mxu0 %v4381
      %4462 = vmatpush.bf16.xpose.msra.mxu0 %v4379
      %4463 = vmatmul.bf16.gmra.mxu0 %v4279
      %v4464 = vpop.f32.mrf.mxu0
      %v4465 = vadd.f32 %v4452, %v4464
      %v4466 = vpop.f32.mrf.mxu0
      %4467 = vdwg.mxu0
      %4468 = vmatpush.bf16.xpose.msra.mxu0 %v4408
      %4469 = vmatpush.bf16.xpose.msra.mxu0 %v4406
      %4470 = vmatpush.bf16.xpose.msra.mxu0 %v4404
      %4471 = vmatpush.bf16.xpose.msra.mxu0 %v4402
      %4472 = vmatpush.bf16.xpose.msra.mxu0 %v4400
      %4473 = vmatpush.bf16.xpose.msra.mxu0 %v4398
      %4474 = vmatpush.bf16.xpose.msra.mxu0 %v4396
      %4475 = vmatpush.bf16.xpose.msra.mxu0 %v4394
      %4476 = vmatmul.bf16.gmra.mxu0 %v4278
      %v4477 = vpop.f32.mrf.mxu0
      %v4478 = vadd.f32 0.0, %v4477
      %v4479 = vpop.f32.mrf.mxu0
      %4480 = vdwg.mxu0
      %4481 = vmatpush.bf16.xpose.msra.mxu0 %v4409
      %4482 = vmatpush.bf16.xpose.msra.mxu0 %v4407
      %4483 = vmatpush.bf16.xpose.msra.mxu0 %v4405
      %4484 = vmatpush.bf16.xpose.msra.mxu0 %v4403
      %4485 = vmatpush.bf16.xpose.msra.mxu0 %v4401
      %4486 = vmatpush.bf16.xpose.msra.mxu0 %v4399
      %4487 = vmatpush.bf16.xpose.msra.mxu0 %v4397
      %4488 = vmatpush.bf16.xpose.msra.mxu0 %v4395
      %4489 = vmatmul.bf16.gmra.mxu0 %v4279
      %v4490 = vpop.f32.mrf.mxu0
      %v4491 = vadd.f32 %v4478, %v4490
      %v4492 = vpop.f32.mrf.mxu0
      %4493 = vdwg.mxu0
      %v4494 = vadd.f32 %v4240, %v4465
      %v4495 = vadd.f32 %v4241, %v4491
      %v4496 = vld [vmem:[%s10] sm:$0xff]
      %v4497 = vld [vmem:[%s10 + $0x8] sm:$0xff]
      %v4498 = vld [vmem:[%s10 + $0x10] sm:$0xff]
      %v4499 = vld [vmem:[%s10 + $0x18] sm:$0xff]
      %v4500 = vld [vmem:[%s10 + $0x20] sm:$0xff]
      %v4501 = vld [vmem:[%s10 + $0x28] sm:$0xff]
      %v4502 = vld [vmem:[%s10 + $0x30] sm:$0xff]
      %v4503 = vld [vmem:[%s10 + $0x38] sm:$0xff]
      %v4504 = vld [vmem:[%s10 + $0x40] sm:$0xff]
      %v4505 = vld [vmem:[%s10 + $0x48] sm:$0xff]
      %v4506 = vld [vmem:[%s10 + $0x50] sm:$0xff]
      %v4507 = vld [vmem:[%s10 + $0x58] sm:$0xff]
      %v4508 = vld [vmem:[%s10 + $0x60] sm:$0xff]
      %v4509 = vld [vmem:[%s10 + $0x68] sm:$0xff]
      %v4510 = vld [vmem:[%s10 + $0x70] sm:$0xff]
      %v4511 = vld [vmem:[%s10 + $0x78] sm:$0xff]
      %v4512 = vld [vmem:[%s10 + $0x80] sm:$0xff]
      %v4513 = vld [vmem:[%s10 + $0x88] sm:$0xff]
      %v4514 = vld [vmem:[%s10 + $0x90] sm:$0xff]
      %v4515 = vld [vmem:[%s10 + $0x98] sm:$0xff]
      %v4516 = vld [vmem:[%s10 + $0xa0] sm:$0xff]
      %v4517 = vld [vmem:[%s10 + $0xa8] sm:$0xff]
      %v4518 = vld [vmem:[%s10 + $0xb0] sm:$0xff]
      %v4519 = vld [vmem:[%s10 + $0xb8] sm:$0xff]
      %v4520 = vld [vmem:[%s10 + $0xc0] sm:$0xff]
      %v4521 = vld [vmem:[%s10 + $0xc8] sm:$0xff]
      %v4522 = vld [vmem:[%s10 + $0xd0] sm:$0xff]
      %v4523 = vld [vmem:[%s10 + $0xd8] sm:$0xff]
      %v4524 = vld [vmem:[%s10 + $0xe0] sm:$0xff]
      %v4525 = vld [vmem:[%s10 + $0xe8] sm:$0xff]
      %v4526 = vld [vmem:[%s10 + $0xf0] sm:$0xff]
      %v4527 = vld [vmem:[%s10 + $0xf8] sm:$0xff]
      %v4528 = vld [vmem:[%s10 + $0x100] sm:$0xff]
      %v4529 = vld [vmem:[%s10 + $0x108] sm:$0xff]
      %v4530 = vld [vmem:[%s10 + $0x110] sm:$0xff]
      %v4531 = vld [vmem:[%s10 + $0x118] sm:$0xff]
      %v4532 = vld [vmem:[%s10 + $0x120] sm:$0xff]
      %v4533 = vld [vmem:[%s10 + $0x128] sm:$0xff]
      %v4534 = vld [vmem:[%s10 + $0x130] sm:$0xff]
      %v4535 = vld [vmem:[%s10 + $0x138] sm:$0xff]
      %v4536 = vld [vmem:[%s10 + $0x140] sm:$0xff]
      %v4537 = vld [vmem:[%s10 + $0x148] sm:$0xff]
      %v4538 = vld [vmem:[%s10 + $0x150] sm:$0xff]
      %v4539 = vld [vmem:[%s10 + $0x158] sm:$0xff]
      %v4540 = vld [vmem:[%s10 + $0x160] sm:$0xff]
      %v4541 = vld [vmem:[%s10 + $0x168] sm:$0xff]
      %v4542 = vld [vmem:[%s10 + $0x170] sm:$0xff]
      %v4543 = vld [vmem:[%s10 + $0x178] sm:$0xff]
      %v4544 = vld [vmem:[%s10 + $0x180] sm:$0xff]
      %v4545 = vld [vmem:[%s10 + $0x188] sm:$0xff]
      %v4546 = vld [vmem:[%s10 + $0x190] sm:$0xff]
      %v4547 = vld [vmem:[%s10 + $0x198] sm:$0xff]
      %v4548 = vld [vmem:[%s10 + $0x1a0] sm:$0xff]
      %v4549 = vld [vmem:[%s10 + $0x1a8] sm:$0xff]
      %v4550 = vld [vmem:[%s10 + $0x1b0] sm:$0xff]
      %v4551 = vld [vmem:[%s10 + $0x1b8] sm:$0xff]
      %v4552 = vld [vmem:[%s10 + $0x1c0] sm:$0xff]
      %v4553 = vld [vmem:[%s10 + $0x1c8] sm:$0xff]
      %v4554 = vld [vmem:[%s10 + $0x1d0] sm:$0xff]
      %v4555 = vld [vmem:[%s10 + $0x1d8] sm:$0xff]
      %v4556 = vld [vmem:[%s10 + $0x1e0] sm:$0xff]
      %v4557 = vld [vmem:[%s10 + $0x1e8] sm:$0xff]
      %v4558 = vld [vmem:[%s10 + $0x1f0] sm:$0xff]
      %v4559 = vld [vmem:[%s10 + $0x1f8] sm:$0xff]
      %4560 = vmatpush.msra.mxu0 %v4526
      %4561 = vmatpush.msra.mxu0 %v4524
      %4562 = vmatpush.msra.mxu0 %v4522
      %4563 = vmatpush.msra.mxu0 %v4520
      %4564 = vmatpush.msra.mxu0 %v4518
      %4565 = vmatpush.msra.mxu0 %v4516
      %4566 = vmatpush.msra.mxu0 %v4514
      %4567 = vmatpush.msra.mxu0 %v4512
      %4568 = vmatpush.msra.mxu0 %v4510
      %4569 = vmatpush.msra.mxu0 %v4508
      %4570 = vmatpush.msra.mxu0 %v4506
      %4571 = vmatpush.msra.mxu0 %v4504
      %4572 = vmatpush.msra.mxu0 %v4502
      %4573 = vmatpush.msra.mxu0 %v4500
      %4574 = vmatpush.msra.mxu0 %v4498
      %4575 = vmatpush.msra.mxu0 %v4496
      %4576 = vmatmul.f32.gmra.mxu0 %v2901
      %v4577 = vpop.f32.mrf.mxu0
      %v4578 = vadd.f32 %v4494, %v4577
      %4579 = vdwg.mxu0
      %4580 = vmatpush.msra.mxu0 %v4558
      %4581 = vmatpush.msra.mxu0 %v4556
      %4582 = vmatpush.msra.mxu0 %v4554
      %4583 = vmatpush.msra.mxu0 %v4552
      %4584 = vmatpush.msra.mxu0 %v4550
      %4585 = vmatpush.msra.mxu0 %v4548
      %4586 = vmatpush.msra.mxu0 %v4546
      %4587 = vmatpush.msra.mxu0 %v4544
      %4588 = vmatpush.msra.mxu0 %v4542
      %4589 = vmatpush.msra.mxu0 %v4540
      %4590 = vmatpush.msra.mxu0 %v4538
      %4591 = vmatpush.msra.mxu0 %v4536
      %4592 = vmatpush.msra.mxu0 %v4534
      %4593 = vmatpush.msra.mxu0 %v4532
      %4594 = vmatpush.msra.mxu0 %v4530
      %4595 = vmatpush.msra.mxu0 %v4528
      %4596 = vmatmul.f32.gmra.mxu0 %v2902
      %v4597 = vpop.f32.mrf.mxu0
      %v4598 = vadd.f32 %v4578, %v4597
      %4599 = vdwg.mxu0
      %4600 = vmatpush.msra.mxu0 %v4527
      %4601 = vmatpush.msra.mxu0 %v4525
      %4602 = vmatpush.msra.mxu0 %v4523
      %4603 = vmatpush.msra.mxu0 %v4521
      %4604 = vmatpush.msra.mxu0 %v4519
      %4605 = vmatpush.msra.mxu0 %v4517
      %4606 = vmatpush.msra.mxu0 %v4515
      %4607 = vmatpush.msra.mxu0 %v4513
      %4608 = vmatpush.msra.mxu0 %v4511
      %4609 = vmatpush.msra.mxu0 %v4509
      %4610 = vmatpush.msra.mxu0 %v4507
      %4611 = vmatpush.msra.mxu0 %v4505
      %4612 = vmatpush.msra.mxu0 %v4503
      %4613 = vmatpush.msra.mxu0 %v4501
      %4614 = vmatpush.msra.mxu0 %v4499
      %4615 = vmatpush.msra.mxu0 %v4497
      %4616 = vmatmul.f32.gmra.mxu0 %v2901
      %v4617 = vpop.f32.mrf.mxu0
      %v4618 = vadd.f32 %v4495, %v4617
      %4619 = vdwg.mxu0
      %4620 = vmatpush.msra.mxu0 %v4559
      %4621 = vmatpush.msra.mxu0 %v4557
      %4622 = vmatpush.msra.mxu0 %v4555
      %4623 = vmatpush.msra.mxu0 %v4553
      %4624 = vmatpush.msra.mxu0 %v4551
      %4625 = vmatpush.msra.mxu0 %v4549
      %4626 = vmatpush.msra.mxu0 %v4547
      %4627 = vmatpush.msra.mxu0 %v4545
      %4628 = vmatpush.msra.mxu0 %v4543
      %4629 = vmatpush.msra.mxu0 %v4541
      %4630 = vmatpush.msra.mxu0 %v4539
      %4631 = vmatpush.msra.mxu0 %v4537
      %4632 = vmatpush.msra.mxu0 %v4535
      %4633 = vmatpush.msra.mxu0 %v4533
      %4634 = vmatpush.msra.mxu0 %v4531
      %4635 = vmatpush.msra.mxu0 %v4529
      %4636 = vmatmul.f32.gmra.mxu0 %v2902
      %v4637 = vpop.f32.mrf.mxu0
      %v4638 = vadd.f32 %v4618, %v4637
      %4639 = vdwg.mxu0
      %v4640 = vld [vmem:[%s8] sm:$0xf]
      %4642 = vset.pattern.permute.xlu0 0
      %4643 = vperm.xlu0 %4642, %v4640
      %v4644 = vpop.permute.xlu0 %4643
      %v4646 = vadd.f32 %v4598, %v4644
      %v4647 = vadd.f32 %v4638, %v4644
      %v4648 = vld [vmem:[%s9] sm:$0xf]
      %4650 = vset.pattern.permute.xlu0 0
      %4651 = vperm.xlu0 %4650, %v4648
      %v4652 = vpop.permute.xlu0 %4651
      %v4654 = vadd.f32 %v4646, %v4652
      %v4655 = vadd.f32 %v4647, %v4652
      %v4658 = vrot.slane %v4655, 4
      %v4659 = vsel %vm551, %v4654, %v4658
      %4661 = vst [vmem:[%s406] sm:$0xff] %v4659
      %p4662 = scmp.lt.s32.totalorder %s22, 1
      %s4663 = scalar_select %p4662, %s22, 1
      %s4664 = smul.addr %s4663, 2
      %s4665 = smul.addr %s4664, 4
      %s4666 = scalar_lea.vmem %s11, %s4665
      // Predicated region
      $region65: #{gc_forward.1} parent=63 // pred_check
        %p4667 = pneg %p281
      $region66: #{gc_forward.1} parent=63 // pred_check_branch
        %4669 = sbr.rel (%p4667) target = $region68
      $region67: #{gc_forward.1} parent=63 // pred_region
        _
      $region68: #{gc_forward.1} parent=63 // pred_fallthru
        _
    $region64: #{gc_forward.1} parent=5 // pred_fallthru
      _
    %p4670 = scmp.le.s32.totalorder 2, %s17
    // Predicated region
    $region69: #{gc_forward.1} parent=5 // pred_check
      %p4671 = pneg %p4670
    $region70: #{gc_forward.1} parent=5 // pred_check_branch
      %4673 = sbr.rel (%p4671) target = $region72
    $region71: #{gc_forward.1} parent=5 // pred_region
      %s4674 = ssub.s32 %s17, 2
      // Predicated region
      $region73: #{gc_forward.1} parent=71 // pred_check
        %p4675 = pneg %p287
      $region74: #{gc_forward.1} parent=71 // pred_check_branch
        %4677 = sbr.rel (%p4675) target = $region76
      $region75: #{gc_forward.1} parent=71 // pred_region
        %p4678 = scmp.lt.s32.totalorder %s23, 1
        %s4679 = scalar_select %p4678, %s23, 1
        %s4680 = smul.addr %s4679, 2
        %s4681 = smul.addr %s4680, 4
        %s4682 = scalar_lea.vmem %s11, %s4681
      $region76: #{gc_forward.1} parent=71 // pred_fallthru
        _
    $region72: #{gc_forward.1} parent=5 // pred_fallthru
      _
  $region6: #{gc_forward.1} parent=0 // loop_footer
    %s21 = sadd.s32 1, %s17
  $region7: #{gc_forward.1} parent=0 // loop_footer_branch
    %16 = sbr.rel target = $region3
  $region8: #{gc_forward.1} parent=0 // loop_exit
    _

</llo_original>
